<compile_context>
chip_gen: v6e
topology: v6e:2x2x1
jax: 0.10.0
libtpu: 0.0.40
codegen_flags: <defaults>
</compile_context>

<pallas_src>
import jax
import jax.numpy as jnp
import numpy as np
from jax.experimental import pallas as pl
from jax.experimental.pallas import tpu as pltpu

BN_EPS = 1e-5
LANE = 128


# --------------------------------------------------------------------------- #
# Kernels
# --------------------------------------------------------------------------- #
def _make_conv3x3_pass(pre_bn: bool):
    """Build a conv pass kernel.

    pre_bn=False: refs = (x, w, z_out, stats_out, pad_scratch)
                  z = conv3x3(x);                 stats = per-channel sum/sumsq of z
    pre_bn=True : refs = (z_in, a, c, w, z_out, stats_out, pad_scratch)
                  h = relu(z_in*a + c); z = conv3x3(h); stats of z
    """

    def kernel(*refs):
        if pre_bn:
            x_ref, a_ref, c_ref, w_ref, z_ref, st_ref, pad_ref = refs
        else:
            x_ref, w_ref, z_ref, st_ref, pad_ref = refs

        bb, H, W, Cp = x_ref.shape
        Cpo = w_ref.shape[1]
        M = bb * H * W

        # ---- interior (written once) + 1-pixel zero halo in VMEM scratch ----
        if pre_bn:
            a = a_ref[...].reshape(1, 1, 1, -1)
            c = c_ref[...].reshape(1, 1, 1, -1)
            interior = jnp.maximum(x_ref[...].astype(jnp.float32) * a + c, 0.0)
        else:
            interior = x_ref[...].astype(jnp.float32)
        pad_ref[:, 1:H + 1, 1:W + 1, :] = interior.astype(pad_ref.dtype)

        zrow = jnp.zeros((bb, 1, W + 2, Cp), pad_ref.dtype)
        zcol = jnp.zeros((bb, H, 1, Cp), pad_ref.dtype)
        pad_ref[:, 0:1, :, :] = zrow
        pad_ref[:, H + 1:H + 2, :, :] = zrow
        pad_ref[:, 1:H + 1, 0:1, :] = zcol
        pad_ref[:, 1:H + 1, W + 1:W + 2, :] = zcol

        # ---- 3x3 conv = 9 accumulated K=Cp MXU matmuls (no im2col patch) ----
        acc = jnp.zeros((M, Cpo), jnp.float32)
        for dy in range(3):
            for dx in range(3):
                t = dy * 3 + dx
                tap = pad_ref[:, dy:dy + H, dx:dx + W, :].reshape(M, Cp)
                w_t = w_ref[t * Cp:(t + 1) * Cp, :]
                acc = acc + jnp.dot(tap, w_t, preferred_element_type=jnp.float32)

        # conv output (pre-BN) + per-band BN partial statistics (f32).
        z_ref[...] = acc.reshape(bb, H, W, Cpo).astype(z_ref.dtype)
        st_ref[:, 0:1, :] = jnp.sum(acc, axis=0, keepdims=True)[None]
        st_ref[:, 1:2, :] = jnp.sum(acc * acc, axis=0, keepdims=True)[None]

    return kernel


def _finalize_kernel(z_ref, x_ref, a_ref, c_ref, o_ref):
    """out = relu(z*a + c + identity)  (BN2 FMA + residual add + ReLU)."""
    a = a_ref[...].reshape(1, 1, 1, -1)
    c = c_ref[...].reshape(1, 1, 1, -1)
    z = z_ref[...].astype(jnp.float32)
    ident = x_ref[...].astype(jnp.float32)
    o_ref[...] = jnp.maximum(z * a + c + ident, 0.0).astype(o_ref.dtype)


# --------------------------------------------------------------------------- #
# Wrapper
# --------------------------------------------------------------------------- #
def _bn_affine(stats, gamma, beta, n):
    """Combine per-band partial sums into the BN FMA: h = z*a + c (training-mode BN).

    One-pass variance (E[z^2]-E[z]^2) in f32; fine for conv activations.
    """
    s = jnp.sum(stats[:, 0, :], axis=0)
    ss = jnp.sum(stats[:, 1, :], axis=0)
    mu = s / n
    var = jnp.maximum(ss / n - mu * mu, 0.0)
    a = gamma * jax.lax.rsqrt(var + BN_EPS)
    c = beta - mu * a
    return a.reshape(1, -1), c.reshape(1, -1)


def resnet_basic_block(x_nchw, params, *, use_bf16_mxu=True, bb=1):
    """PyTorch NCHW in / NCHW out.  Default module config (stride=1, no downsample).

    use_bf16_mxu=True: bf16 MXU operands + bf16 intermediates with f32
    accumulation — the fast path on v5e, v6e and v7x alike.
    use_bf16_mxu=False: exact f32 everywhere (numerical verification only).
    bb: images per grid step (band size along batch).
    """
    B, Cin, H, W = x_nchw.shape
    Cout = params["w1"].shape[0]
    assert Cin == Cout, "default config (no downsample) requires Cin == Cout"
    assert B % bb == 0
    nb = B // bb
    n = B * H * W

    # Lane-pad channels to a multiple of 128 so vregs / MXU columns / stores are dense.
    Cp = ((max(Cin, 1) + LANE - 1) // LANE) * LANE
    mxu_dtype = jnp.bfloat16 if use_bf16_mxu else jnp.float32
    store_dtype = jnp.bfloat16 if use_bf16_mxu else jnp.float32

    # NCHW -> NHWC (+ zero channel padding). Padded channels stay zero end-to-end.
    x = jnp.transpose(x_nchw, (0, 2, 3, 1))
    if Cp != Cin:
        x = jnp.pad(x, ((0, 0), (0, 0), (0, 0), (0, Cp - Cin)))

    def prep_w(w):  # (Cout,Cin,3,3) -> (9*Cp, Cp), zero-padded, MXU dtype
        w = jnp.transpose(w, (2, 3, 1, 0))
        w = jnp.pad(w, ((0, 0), (0, 0), (0, Cp - Cin), (0, Cp - Cout)))
        return w.reshape(9 * Cp, Cp).astype(mxu_dtype)

    def prep_v(v):  # (Cout,) -> (Cp,) zero-padded f32
        return jnp.pad(v.astype(jnp.float32), (0, Cp - Cout))

    w1, w2 = prep_w(params["w1"]), prep_w(params["w2"])
    g1, be1 = prep_v(params["g1"]), prep_v(params["be1"])
    g2, be2 = prep_v(params["g2"]), prep_v(params["be2"])
    # params["b1"] / params["b2"] (conv biases) are deliberately not used:
    # they are cancelled exactly by the training-mode BN mean subtraction.

    band_spec = pl.BlockSpec((bb, H, W, Cp), lambda i: (i, 0, 0, 0))
    w_spec = pl.BlockSpec((9 * Cp, Cp), lambda i: (0, 0))     # resident weights
    vec_spec = pl.BlockSpec((1, Cp), lambda i: (0, 0))
    st_spec = pl.BlockSpec((1, 2, Cp), lambda i: (i, 0, 0))   # per-band partials
    cparams = pltpu.CompilerParams(
        dimension_semantics=("parallel",),                    # megacore over bands
        vmem_limit_bytes=48 * 1024 * 1024)                    # fits v7x's 64 MiB
    pad_scratch = pltpu.VMEM((bb, H + 2, W + 2, Cp), mxu_dtype)

    # ---- pass 1: conv1 + BN1 partial stats ---------------------------------
    z1, st1 = pl.pallas_call(
        _make_conv3x3_pass(pre_bn=False),
        grid=(nb,),
        in_specs=[band_spec, w_spec],
        out_specs=(band_spec, st_spec),
        out_shape=(jax.ShapeDtypeStruct((B, H, W, Cp), store_dtype),
                   jax.ShapeDtypeStruct((nb, 2, Cp), jnp.float32)),
        scratch_shapes=[pad_scratch],
        compiler_params=cparams,
    )(x, w1)
    a1, c1 = _bn_affine(st1, g1, be1, n)

    # ---- pass 2: BN1 + ReLU -> conv2 + BN2 partial stats --------------------
    z2, st2 = pl.pallas_call(
        _make_conv3x3_pass(pre_bn=True),
        grid=(nb,),
        in_specs=[band_spec, vec_spec, vec_spec, w_spec],
        out_specs=(band_spec, st_spec),
        out_shape=(jax.ShapeDtypeStruct((B, H, W, Cp), store_dtype),
                   jax.ShapeDtypeStruct((nb, 2, Cp), jnp.float32)),
        scratch_shapes=[pad_scratch],
        compiler_params=cparams,
    )(z1, a1, c1, w2)
    a2, c2 = _bn_affine(st2, g2, be2, n)

    # ---- pass 3: BN2 + residual add + ReLU (elementwise) --------------------
    out = pl.pallas_call(
        _finalize_kernel,
        grid=(nb,),
        in_specs=[band_spec, band_spec, vec_spec, vec_spec],
        out_specs=band_spec,
        out_shape=jax.ShapeDtypeStruct((B, H, W, Cp), x_nchw.dtype),
        compiler_params=cparams,
    )(z2, x, a2, c2)

    out = out[..., :Cout]                           # drop lane padding
    return jnp.transpose(out, (0, 3, 1, 2))         # back to NCHW


# --------------------------------------------------------------------------- #
# Pure-JAX reference (matches PyTorch training-mode forward, with conv bias)
# --------------------------------------------------------------------------- #
def resnet_basic_block_ref(x_nchw, params):
    dn = ("NCHW", "OIHW", "NCHW")

    def conv_bn(x, w, b, g, be):
        y = jax.lax.conv_general_dilated(x, w, (1, 1), ((1, 1), (1, 1)),
                                         dimension_numbers=dn)
        y = y + b[None, :, None, None]
        mu = jnp.mean(y, axis=(0, 2, 3), keepdims=True)
        var = jnp.var(y, axis=(0, 2, 3), keepdims=True)
        return ((y - mu) / jnp.sqrt(var + BN_EPS)) * g[None, :, None, None] \
            + be[None, :, None, None]

    h = jnp.maximum(conv_bn(x_nchw, params["w1"], params["b1"],
                            params["g1"], params["be1"]), 0.0)
    h2 = conv_bn(h, params["w2"], params["b2"], params["g2"], params["be2"])
    return jnp.maximum(h2 + x_nchw, 0.0)


def make_params(key, cin, cout):
    ks = jax.random.split(key, 8)
    return {
        "w1": 0.1 * jax.random.normal(ks[0], (cout, cin, 3, 3), jnp.float32),
        "b1": 0.1 * jax.random.normal(ks[1], (cout,), jnp.float32),
        "g1": 1.0 + 0.1 * jax.random.normal(ks[2], (cout,), jnp.float32),
        "be1": 0.1 * jax.random.normal(ks[3], (cout,), jnp.float32),
        "w2": 0.1 * jax.random.normal(ks[4], (cout, cout, 3, 3), jnp.float32),
        "b2": 0.1 * jax.random.normal(ks[5], (cout,), jnp.float32),
        "g2": 1.0 + 0.1 * jax.random.normal(ks[6], (cout,), jnp.float32),
        "be2": 0.1 * jax.random.normal(ks[7], (cout,), jnp.float32),
    }


if __name__ == "__main__":
    B, C, H, W = 2, 8, 16, 16   # in_channels == out_channels (no downsample path)
    key = jax.random.PRNGKey(0)
    kx, kp = jax.random.split(key)
    x = jax.random.normal(kx, (B, C, H, W), jnp.float32)   # PyTorch NCHW input
    params = make_params(kp, C, C)

    ref = resnet_basic_block_ref(x, params)

    # exact path: f32 MXU operands + f32 intermediates (verification)
    out_f32 = jax.block_until_ready(resnet_basic_block(x, params, use_bf16_mxu=False))
    np.testing.assert_allclose(np.asarray(out_f32), np.asarray(ref),
                               rtol=2e-3, atol=2e-3)

    # fast path: bf16 MXU operands + bf16 intermediates, f32 accumulation/stats
    out_bf16 = jax.block_until_ready(resnet_basic_block(x, params, use_bf16_mxu=True))
    np.testing.assert_allclose(np.asarray(out_bf16), np.asarray(ref),
                               rtol=5e-2, atol=5e-2)

    assert out_f32.shape == (B, C, H, W)
    print("KERNEL_OK")
</pallas_src>

<mosaic_0001>
module attributes {stable_mosaic.version = 11 : i64} {
  func.func @kernel(%arg0: i32, %arg1: memref<1x16x16x128xf32, #tpu.memory_space<vmem>>, %arg2: memref<1152x128xf32, #tpu.memory_space<vmem>>, %arg3: memref<1x16x16x128xf32, #tpu.memory_space<vmem>>, %arg4: memref<1x2x128xf32, #tpu.memory_space<vmem>>, %arg5: memref<1x18x18x128xf32, #tpu.memory_space<vmem>>) attributes {dimension_semantics = [#tpu.dimension_semantics<parallel>], iteration_bounds = array<i64: 2>, scalar_prefetch = 0 : i64, scratch_operands = 1 : i64, tpu.core_type = #tpu.core_type<tc>, window_params = [{transform_indices = @transform_0, window_bounds = array<i64: 1, 16, 16, 128>}, {pipeline_mode = #tpu.pipeline_mode<synchronous>, transform_indices = @transform_1, window_bounds = array<i64: 1152, 128>}, {transform_indices = @transform_2, window_bounds = array<i64: 1, 16, 16, 128>}, {transform_indices = @transform_3, window_bounds = array<i64: 1, 2, 128>}]} {
    %c0 = arith.constant 0 : index
    %c0_0 = arith.constant 0 : index
    %c0_1 = arith.constant 0 : index
    %c0_2 = arith.constant 0 : index
    %0 = vector.load %arg1[%c0, %c0_0, %c0_1, %c0_2] : memref<1x16x16x128xf32, #tpu.memory_space<vmem>>, vector<1x16x16x128xf32>
    %c0_3 = arith.constant 0 : index
    %c1 = arith.constant 1 : index
    %c1_4 = arith.constant 1 : index
    %c0_5 = arith.constant 0 : index
    %1 = vector.load %arg5[%c0_3, %c1, %c1_4, %c0_5] : memref<1x18x18x128xf32, #tpu.memory_space<vmem>>, vector<1x16x16x128xf32>
    tpu.vector_store %arg5[%c0_3, %c1, %c1_4, %c0_5], %0 {strides = array<i32>} : memref<1x18x18x128xf32, #tpu.memory_space<vmem>>, vector<1x16x16x128xf32>,
    %cst = arith.constant 0.000000e+00 : f32
    %2 = vector.broadcast %cst : f32 to vector<1x1x18x128xf32>
    %cst_6 = arith.constant 0.000000e+00 : f32
    %3 = vector.broadcast %cst_6 : f32 to vector<1x16x1x128xf32>
    %c0_7 = arith.constant 0 : index
    %c0_8 = arith.constant 0 : index
    %c0_9 = arith.constant 0 : index
    %c0_10 = arith.constant 0 : index
    %4 = vector.load %arg5[%c0_7, %c0_8, %c0_9, %c0_10] : memref<1x18x18x128xf32, #tpu.memory_space<vmem>>, vector<1x1x18x128xf32>
    tpu.vector_store %arg5[%c0_7, %c0_8, %c0_9, %c0_10], %2 {strides = array<i32>} : memref<1x18x18x128xf32, #tpu.memory_space<vmem>>, vector<1x1x18x128xf32>,
    %c0_11 = arith.constant 0 : index
    %c17 = arith.constant 17 : index
    %c0_12 = arith.constant 0 : index
    %c0_13 = arith.constant 0 : index
    %5 = vector.load %arg5[%c0_11, %c17, %c0_12, %c0_13] : memref<1x18x18x128xf32, #tpu.memory_space<vmem>>, vector<1x1x18x128xf32>
    tpu.vector_store %arg5[%c0_11, %c17, %c0_12, %c0_13], %2 {strides = array<i32>} : memref<1x18x18x128xf32, #tpu.memory_space<vmem>>, vector<1x1x18x128xf32>,
    %c0_14 = arith.constant 0 : index
    %c1_15 = arith.constant 1 : index
    %c0_16 = arith.constant 0 : index
    %c0_17 = arith.constant 0 : index
    %6 = vector.load %arg5[%c0_14, %c1_15, %c0_16, %c0_17] : memref<1x18x18x128xf32, #tpu.memory_space<vmem>>, vector<1x16x1x128xf32>
    tpu.vector_store %arg5[%c0_14, %c1_15, %c0_16, %c0_17], %3 {strides = array<i32>} : memref<1x18x18x128xf32, #tpu.memory_space<vmem>>, vector<1x16x1x128xf32>,
    %c0_18 = arith.constant 0 : index
    %c1_19 = arith.constant 1 : index
    %c17_20 = arith.constant 17 : index
    %c0_21 = arith.constant 0 : index
    %7 = vector.load %arg5[%c0_18, %c1_19, %c17_20, %c0_21] : memref<1x18x18x128xf32, #tpu.memory_space<vmem>>, vector<1x16x1x128xf32>
    tpu.vector_store %arg5[%c0_18, %c1_19, %c17_20, %c0_21], %3 {strides = array<i32>} : memref<1x18x18x128xf32, #tpu.memory_space<vmem>>, vector<1x16x1x128xf32>,
    %cst_22 = arith.constant 0.000000e+00 : f32
    %8 = vector.broadcast %cst_22 : f32 to vector<256x128xf32>
    %c0_23 = arith.constant 0 : index
    %c0_24 = arith.constant 0 : index
    %c0_25 = arith.constant 0 : index
    %c0_26 = arith.constant 0 : index
    %9 = vector.load %arg5[%c0_23, %c0_24, %c0_25, %c0_26] : memref<1x18x18x128xf32, #tpu.memory_space<vmem>>, vector<1x16x16x128xf32>
    %10 = vector.shape_cast %9 : vector<1x16x16x128xf32> to vector<256x128xf32>
    %c0_27 = arith.constant 0 : index
    %c0_28 = arith.constant 0 : index
    %11 = vector.load %arg2[%c0_27, %c0_28] : memref<1152x128xf32, #tpu.memory_space<vmem>>, vector<128x128xf32>
    %cst_29 = arith.constant dense<0.000000e+00> : vector<256x128xf32>
    %12 = tpu.matmul %10, %11, %cst_29 {dimension_numbers = #tpu.dot_dimension_numbers<[1], [0], [0], [1], [0, 0, 1, 1], [], []>} : vector<256x128xf32>, vector<128x128xf32>, vector<256x128xf32> -> vector<256x128xf32>
    %13 = arith.addf %8, %12 : vector<256x128xf32>
    %c0_30 = arith.constant 0 : index
    %c0_31 = arith.constant 0 : index
    %c1_32 = arith.constant 1 : index
    %c0_33 = arith.constant 0 : index
    %14 = vector.load %arg5[%c0_30, %c0_31, %c1_32, %c0_33] : memref<1x18x18x128xf32, #tpu.memory_space<vmem>>, vector<1x16x16x128xf32>
    %15 = vector.shape_cast %14 : vector<1x16x16x128xf32> to vector<256x128xf32>
    %c128 = arith.constant 128 : index
    %c0_34 = arith.constant 0 : index
    %16 = vector.load %arg2[%c128, %c0_34] : memref<1152x128xf32, #tpu.memory_space<vmem>>, vector<128x128xf32>
    %cst_35 = arith.constant dense<0.000000e+00> : vector<256x128xf32>
    %17 = tpu.matmul %15, %16, %cst_35 {dimension_numbers = #tpu.dot_dimension_numbers<[1], [0], [0], [1], [0, 0, 1, 1], [], []>} : vector<256x128xf32>, vector<128x128xf32>, vector<256x128xf32> -> vector<256x128xf32>
    %18 = arith.addf %13, %17 : vector<256x128xf32>
    %c0_36 = arith.constant 0 : index
    %c0_37 = arith.constant 0 : index
    %c2 = arith.constant 2 : index
    %c0_38 = arith.constant 0 : index
    %19 = vector.load %arg5[%c0_36, %c0_37, %c2, %c0_38] : memref<1x18x18x128xf32, #tpu.memory_space<vmem>>, vector<1x16x16x128xf32>
    %20 = vector.shape_cast %19 : vector<1x16x16x128xf32> to vector<256x128xf32>
    %c256 = arith.constant 256 : index
    %c0_39 = arith.constant 0 : index
    %21 = vector.load %arg2[%c256, %c0_39] : memref<1152x128xf32, #tpu.memory_space<vmem>>, vector<128x128xf32>
    %cst_40 = arith.constant dense<0.000000e+00> : vector<256x128xf32>
    %22 = tpu.matmul %20, %21, %cst_40 {dimension_numbers = #tpu.dot_dimension_numbers<[1], [0], [0], [1], [0, 0, 1, 1], [], []>} : vector<256x128xf32>, vector<128x128xf32>, vector<256x128xf32> -> vector<256x128xf32>
    %23 = arith.addf %18, %22 : vector<256x128xf32>
    %c0_41 = arith.constant 0 : index
    %c1_42 = arith.constant 1 : index
    %c0_43 = arith.constant 0 : index
    %c0_44 = arith.constant 0 : index
    %24 = vector.load %arg5[%c0_41, %c1_42, %c0_43, %c0_44] : memref<1x18x18x128xf32, #tpu.memory_space<vmem>>, vector<1x16x16x128xf32>
    %25 = vector.shape_cast %24 : vector<1x16x16x128xf32> to vector<256x128xf32>
    %c384 = arith.constant 384 : index
    %c0_45 = arith.constant 0 : index
    %26 = vector.load %arg2[%c384, %c0_45] : memref<1152x128xf32, #tpu.memory_space<vmem>>, vector<128x128xf32>
    %cst_46 = arith.constant dense<0.000000e+00> : vector<256x128xf32>
    %27 = tpu.matmul %25, %26, %cst_46 {dimension_numbers = #tpu.dot_dimension_numbers<[1], [0], [0], [1], [0, 0, 1, 1], [], []>} : vector<256x128xf32>, vector<128x128xf32>, vector<256x128xf32> -> vector<256x128xf32>
    %28 = arith.addf %23, %27 : vector<256x128xf32>
    %c0_47 = arith.constant 0 : index
    %c1_48 = arith.constant 1 : index
    %c1_49 = arith.constant 1 : index
    %c0_50 = arith.constant 0 : index
    %29 = vector.load %arg5[%c0_47, %c1_48, %c1_49, %c0_50] : memref<1x18x18x128xf32, #tpu.memory_space<vmem>>, vector<1x16x16x128xf32>
    %30 = vector.shape_cast %29 : vector<1x16x16x128xf32> to vector<256x128xf32>
    %c512 = arith.constant 512 : index
    %c0_51 = arith.constant 0 : index
    %31 = vector.load %arg2[%c512, %c0_51] : memref<1152x128xf32, #tpu.memory_space<vmem>>, vector<128x128xf32>
    %cst_52 = arith.constant dense<0.000000e+00> : vector<256x128xf32>
    %32 = tpu.matmul %30, %31, %cst_52 {dimension_numbers = #tpu.dot_dimension_numbers<[1], [0], [0], [1], [0, 0, 1, 1], [], []>} : vector<256x128xf32>, vector<128x128xf32>, vector<256x128xf32> -> vector<256x128xf32>
    %33 = arith.addf %28, %32 : vector<256x128xf32>
    %c0_53 = arith.constant 0 : index
    %c1_54 = arith.constant 1 : index
    %c2_55 = arith.constant 2 : index
    %c0_56 = arith.constant 0 : index
    %34 = vector.load %arg5[%c0_53, %c1_54, %c2_55, %c0_56] : memref<1x18x18x128xf32, #tpu.memory_space<vmem>>, vector<1x16x16x128xf32>
    %35 = vector.shape_cast %34 : vector<1x16x16x128xf32> to vector<256x128xf32>
    %c640 = arith.constant 640 : index
    %c0_57 = arith.constant 0 : index
    %36 = vector.load %arg2[%c640, %c0_57] : memref<1152x128xf32, #tpu.memory_space<vmem>>, vector<128x128xf32>
    %cst_58 = arith.constant dense<0.000000e+00> : vector<256x128xf32>
    %37 = tpu.matmul %35, %36, %cst_58 {dimension_numbers = #tpu.dot_dimension_numbers<[1], [0], [0], [1], [0, 0, 1, 1], [], []>} : vector<256x128xf32>, vector<128x128xf32>, vector<256x128xf32> -> vector<256x128xf32>
    %38 = arith.addf %33, %37 : vector<256x128xf32>
    %c0_59 = arith.constant 0 : index
    %c2_60 = arith.constant 2 : index
    %c0_61 = arith.constant 0 : index
    %c0_62 = arith.constant 0 : index
    %39 = vector.load %arg5[%c0_59, %c2_60, %c0_61, %c0_62] : memref<1x18x18x128xf32, #tpu.memory_space<vmem>>, vector<1x16x16x128xf32>
    %40 = vector.shape_cast %39 : vector<1x16x16x128xf32> to vector<256x128xf32>
    %c768 = arith.constant 768 : index
    %c0_63 = arith.constant 0 : index
    %41 = vector.load %arg2[%c768, %c0_63] : memref<1152x128xf32, #tpu.memory_space<vmem>>, vector<128x128xf32>
    %cst_64 = arith.constant dense<0.000000e+00> : vector<256x128xf32>
    %42 = tpu.matmul %40, %41, %cst_64 {dimension_numbers = #tpu.dot_dimension_numbers<[1], [0], [0], [1], [0, 0, 1, 1], [], []>} : vector<256x128xf32>, vector<128x128xf32>, vector<256x128xf32> -> vector<256x128xf32>
    %43 = arith.addf %38, %42 : vector<256x128xf32>
    %c0_65 = arith.constant 0 : index
    %c2_66 = arith.constant 2 : index
    %c1_67 = arith.constant 1 : index
    %c0_68 = arith.constant 0 : index
    %44 = vector.load %arg5[%c0_65, %c2_66, %c1_67, %c0_68] : memref<1x18x18x128xf32, #tpu.memory_space<vmem>>, vector<1x16x16x128xf32>
    %45 = vector.shape_cast %44 : vector<1x16x16x128xf32> to vector<256x128xf32>
    %c896 = arith.constant 896 : index
    %c0_69 = arith.constant 0 : index
    %46 = vector.load %arg2[%c896, %c0_69] : memref<1152x128xf32, #tpu.memory_space<vmem>>, vector<128x128xf32>
    %cst_70 = arith.constant dense<0.000000e+00> : vector<256x128xf32>
    %47 = tpu.matmul %45, %46, %cst_70 {dimension_numbers = #tpu.dot_dimension_numbers<[1], [0], [0], [1], [0, 0, 1, 1], [], []>} : vector<256x128xf32>, vector<128x128xf32>, vector<256x128xf32> -> vector<256x128xf32>
    %48 = arith.addf %43, %47 : vector<256x128xf32>
    %c0_71 = arith.constant 0 : index
    %c2_72 = arith.constant 2 : index
    %c2_73 = arith.constant 2 : index
    %c0_74 = arith.constant 0 : index
    %49 = vector.load %arg5[%c0_71, %c2_72, %c2_73, %c0_74] : memref<1x18x18x128xf32, #tpu.memory_space<vmem>>, vector<1x16x16x128xf32>
    %50 = vector.shape_cast %49 : vector<1x16x16x128xf32> to vector<256x128xf32>
    %c1024 = arith.constant 1024 : index
    %c0_75 = arith.constant 0 : index
    %51 = vector.load %arg2[%c1024, %c0_75] : memref<1152x128xf32, #tpu.memory_space<vmem>>, vector<128x128xf32>
    %cst_76 = arith.constant dense<0.000000e+00> : vector<256x128xf32>
    %52 = tpu.matmul %50, %51, %cst_76 {dimension_numbers = #tpu.dot_dimension_numbers<[1], [0], [0], [1], [0, 0, 1, 1], [], []>} : vector<256x128xf32>, vector<128x128xf32>, vector<256x128xf32> -> vector<256x128xf32>
    %53 = arith.addf %48, %52 : vector<256x128xf32>
    %54 = vector.shape_cast %53 : vector<256x128xf32> to vector<1x16x16x128xf32>
    %c0_77 = arith.constant 0 : index
    %c0_78 = arith.constant 0 : index
    %c0_79 = arith.constant 0 : index
    %c0_80 = arith.constant 0 : index
    %55 = vector.load %arg3[%c0_77, %c0_78, %c0_79, %c0_80] : memref<1x16x16x128xf32, #tpu.memory_space<vmem>>, vector<1x16x16x128xf32>
    tpu.vector_store %arg3[%c0_77, %c0_78, %c0_79, %c0_80], %54 {strides = array<i32>} : memref<1x16x16x128xf32, #tpu.memory_space<vmem>>, vector<1x16x16x128xf32>,
    %cst_81 = arith.constant dense<0.000000e+00> : vector<128xf32>
    %56 = vector.multi_reduction <add>, %53, %cst_81 [0] : vector<256x128xf32> to vector<128xf32>
    %57 = vector.shape_cast %56 : vector<128xf32> to vector<1x128xf32>
    %58 = vector.shape_cast %57 : vector<1x128xf32> to vector<1x1x128xf32>
    %c0_82 = arith.constant 0 : index
    %c0_83 = arith.constant 0 : index
    %c0_84 = arith.constant 0 : index
    %59 = vector.load %arg4[%c0_82, %c0_83, %c0_84] : memref<1x2x128xf32, #tpu.memory_space<vmem>>, vector<1x1x128xf32>
    tpu.vector_store %arg4[%c0_82, %c0_83, %c0_84], %58 {strides = array<i32>} : memref<1x2x128xf32, #tpu.memory_space<vmem>>, vector<1x1x128xf32>,
    %60 = arith.mulf %53, %53 : vector<256x128xf32>
    %cst_85 = arith.constant dense<0.000000e+00> : vector<128xf32>
    %61 = vector.multi_reduction <add>, %60, %cst_85 [0] : vector<256x128xf32> to vector<128xf32>
    %62 = vector.shape_cast %61 : vector<128xf32> to vector<1x128xf32>
    %63 = vector.shape_cast %62 : vector<1x128xf32> to vector<1x1x128xf32>
    %c0_86 = arith.constant 0 : index
    %c1_87 = arith.constant 1 : index
    %c0_88 = arith.constant 0 : index
    %64 = vector.load %arg4[%c0_86, %c1_87, %c0_88] : memref<1x2x128xf32, #tpu.memory_space<vmem>>, vector<1x1x128xf32>
    tpu.vector_store %arg4[%c0_86, %c1_87, %c0_88], %63 {strides = array<i32>} : memref<1x2x128xf32, #tpu.memory_space<vmem>>, vector<1x1x128xf32>,
    return
  }
  func.func @transform_0(%arg0: i32) -> (i32, i32, i32, i32) {
    %c0_i32 = arith.constant 0 : i32
    %c0_i32_0 = arith.constant 0 : i32
    %c0_i32_1 = arith.constant 0 : i32
    %c0_i32_2 = arith.constant 0 : i32
    return %arg0, %c0_i32, %c0_i32_0, %c0_i32_1 : i32, i32, i32, i32
  }
  func.func @transform_1(%arg0: i32) -> (i32, i32) {
    %c0_i32 = arith.constant 0 : i32
    %c0_i32_0 = arith.constant 0 : i32
    %c0_i32_1 = arith.constant 0 : i32
    return %c0_i32, %c0_i32_0 : i32, i32
  }
  func.func @transform_2(%arg0: i32) -> (i32, i32, i32, i32) {
    %c0_i32 = arith.constant 0 : i32
    %c0_i32_0 = arith.constant 0 : i32
    %c0_i32_1 = arith.constant 0 : i32
    %c0_i32_2 = arith.constant 0 : i32
    return %arg0, %c0_i32, %c0_i32_0, %c0_i32_1 : i32, i32, i32, i32
  }
  func.func @transform_3(%arg0: i32) -> (i32, i32, i32) {
    %c0_i32 = arith.constant 0 : i32
    %c0_i32_0 = arith.constant 0 : i32
    %c0_i32_1 = arith.constant 0 : i32
    return %arg0, %c0_i32, %c0_i32_0 : i32, i32, i32
  }
}

</mosaic_0001>

<llo_original>
// kernel: tpu_custom_call.1
$region0: #{tpu_custom_call.1}
  #allocation0 [shape = 'u32[]', space=smem, size = 0x4, offset = 0x4, fixed_abs, tag = 'smem constant byte address 0x4 - core index']
  #allocation1 [shape = 'u32[144,128]{1,0:T(1,128)}', space=vmem, size = 0x12000, scoped, tag = 'internal scratch']
  #allocation2 [shape = 'f32[1,18,18,128]{3,2,1,0:T(8,128)}', space=vmem, size = 0x36000, scoped, tag = 'scratch operand']
  %s0 = inlined_call_operand.hbm [shape: f32[2,16,16,128], index: 0, kind: input, shape index: {}]
  %s1 = inlined_call_operand.hbm [shape: f32[1152,128], index: 1, kind: input, shape index: {}]
  %s2 = inlined_call_operand.hbm [shape: f32[2,16,16,128], index: 2, kind: output, shape index: {0}]
  %s3 = inlined_call_operand.hbm [shape: f32[2,2,128], index: 3, kind: output, shape index: {1}]
  %4 = xla_tuple %s2, %s3
  %s5 = sld [smem:[#allocation0]]
  $region57: #{tpu_custom_call.1} parent=0
    _
  %s7 = ssub.s32 1, %s5
  %s8 = scalar_select 0, %s7, %s5
  $region1: #{tpu_custom_call.1} parent=0
    #allocation3 [shape = 'u8[262144]{0}', space=vmem, size = 0x40000, scoped, tag = 'input window, operand 0']
    #allocation4 [shape = 's32[2]{0}', space=sflag, size = 0x8, scoped, tag = 'scoped memory for tpu_custom_call.1']
    #allocation5 [shape = 's32[2]{0}', space=sflag, size = 0x8, scoped, tag = 'scoped memory for tpu_custom_call.1']
    #allocation6 [shape = 'u8[589824]{0}', space=vmem, size = 0x90000, scoped, tag = 'input window, operand 1, single buffered']
    #allocation7 [shape = 's32[1]{0}', space=sflag, size = 0x4, scoped, tag = 'scoped memory for tpu_custom_call.1']
    #allocation8 [shape = 'u8[262144]{0}', space=vmem, size = 0x40000, scoped, tag = 'output window, operand 0']
    #allocation9 [shape = 'u8[2048]{0}', space=vmem, size = 0x800, scoped, tag = 'output window, operand 1']
    #allocation10 [shape = 's32[2]{0}', space=sflag, size = 0x8, scoped, tag = 'scoped memory for tpu_custom_call.1']
    %9 = vsyncpa [#allocation4], 0
    %s10 = scalar_lea.sflag [#allocation4], 1
    %11 = vsyncpa %s10, 0
    %12 = vsyncpa [#allocation7], 0
    %13 = vsyncpa [#allocation5], 0
    %s14 = scalar_lea.sflag [#allocation5], 1
    %15 = vsyncpa %s14, 0
    %16 = vsyncpa [#allocation10], 0
    %s17 = scalar_lea.sflag [#allocation10], 1
    %18 = vsyncpa %s17, 0
    loop: start=0, step=1, limit=4
    $region2: #{tpu_custom_call.1} parent=1 // loop_pre_header
      _
    $region3: #{tpu_custom_call.1} parent=1 // loop_header
      %s20 = sphi 0, %s24
      %p21 = scmp.ge.s32.totalorder %s20, 4
      %s30 = sphi 0, %s32
      %s33 = sphi 0, %s30
      %s34 = sphi 0, %s33
      %s50 = sphi 0, %s34
      %s54 = sphi 0, %s54
      %s56 = sphi 0, %s54
      %s57 = sphi 0, %s56
      %s71 = sphi 0, %s57
      %s77 = sphi 0, %s79
      %s80 = sphi 0, %s77
      %s81 = sphi 0, %s80
      %s97 = sphi 0, %s81
      %s103 = sphi 0, %s105
      %s106 = sphi 0, %s103
      %s107 = sphi 0, %s106
      %s123 = sphi 0, %s107
    $region4: #{tpu_custom_call.1} parent=1 // loop_header_branch
      %23 = sbr.rel (%p21) target = $region8
    $region5: #{tpu_custom_call.1} parent=1 // loop_body
      %s25 = ssub.s32 %s20, 1
      %s26 = ssub.s32 %s20, 2
      %s27 = sadd.s32 %s20, 1
      %s28 = ssub.s32 %s20, %s27
      %p29 = scmp.eq.s32.totalorder %s28, 0
      %s31 = sadd.s32 %s30, 1
      %s32 = scalar_select %p29, %s30, %s31
      %p35 = pneg %p29
      %p36 = scmp.eq.s32.totalorder %s20, 1
      %p37 = por %p35, %p36
      %p38 = scmp.ne.s32.totalorder %s30, %s33
      %p39 = scmp.eq.s32.totalorder %s20, 0
      %p40 = por %p38, %p39
      %p41 = scmp.ne.s32.totalorder %s30, %s33
      %p42 = scmp.eq.s32.totalorder %s25, 1
      %p43 = por %p41, %p42
      %p44 = scmp.ne.s32.totalorder %s33, %s34
      %p45 = scmp.eq.s32.totalorder %s25, 0
      %p46 = por %p44, %p45
      %p47 = scmp.ne.s32.totalorder %s33, %s34
      %p48 = scmp.eq.s32.totalorder %s26, 1
      %p49 = por %p47, %p48
      %p51 = scmp.ne.s32.totalorder %s34, %s50
      %p52 = scmp.eq.s32.totalorder %s26, 0
      %p53 = por %p51, %p52
      %s55 = sadd.s32 %s54, 1
      %p58 = scmp.eq.s32.totalorder %s20, 1
      %p59 = scmp.ne.s32.totalorder %s54, %s56
      %p60 = scmp.eq.s32.totalorder %s20, 0
      %p61 = por %p59, %p60
      %p62 = scmp.ne.s32.totalorder %s54, %s56
      %p63 = scmp.eq.s32.totalorder %s25, 1
      %p64 = por %p62, %p63
      %p65 = scmp.ne.s32.totalorder %s56, %s57
      %p66 = scmp.eq.s32.totalorder %s25, 0
      %p67 = por %p65, %p66
      %p68 = scmp.ne.s32.totalorder %s56, %s57
      %p69 = scmp.eq.s32.totalorder %s26, 1
      %p70 = por %p68, %p69
      %p72 = scmp.ne.s32.totalorder %s57, %s71
      %p73 = scmp.eq.s32.totalorder %s26, 0
      %p74 = por %p72, %p73
      %s75 = ssub.s32 %s20, %s27
      %p76 = scmp.eq.s32.totalorder %s75, 0
      %s78 = sadd.s32 %s77, 1
      %s79 = scalar_select %p76, %s77, %s78
      %p82 = pneg %p76
      %p83 = scmp.eq.s32.totalorder %s20, 1
      %p84 = por %p82, %p83
      %p85 = scmp.ne.s32.totalorder %s77, %s80
      %p86 = scmp.eq.s32.totalorder %s20, 0
      %p87 = por %p85, %p86
      %p88 = scmp.ne.s32.totalorder %s77, %s80
      %p89 = scmp.eq.s32.totalorder %s25, 1
      %p90 = por %p88, %p89
      %p91 = scmp.ne.s32.totalorder %s80, %s81
      %p92 = scmp.eq.s32.totalorder %s25, 0
      %p93 = por %p91, %p92
      %p94 = scmp.ne.s32.totalorder %s80, %s81
      %p95 = scmp.eq.s32.totalorder %s26, 1
      %p96 = por %p94, %p95
      %p98 = scmp.ne.s32.totalorder %s81, %s97
      %p99 = scmp.eq.s32.totalorder %s26, 0
      %p100 = por %p98, %p99
      %s101 = ssub.s32 %s20, %s27
      %p102 = scmp.eq.s32.totalorder %s101, 0
      %s104 = sadd.s32 %s103, 1
      %s105 = scalar_select %p102, %s103, %s104
      %p108 = pneg %p102
      %p109 = scmp.eq.s32.totalorder %s20, 1
      %p110 = por %p108, %p109
      %p111 = scmp.ne.s32.totalorder %s103, %s106
      %p112 = scmp.eq.s32.totalorder %s20, 0
      %p113 = por %p111, %p112
      %p114 = scmp.ne.s32.totalorder %s103, %s106
      %p115 = scmp.eq.s32.totalorder %s25, 1
      %p116 = por %p114, %p115
      %p117 = scmp.ne.s32.totalorder %s106, %s107
      %p118 = scmp.eq.s32.totalorder %s25, 0
      %p119 = por %p117, %p118
      %p120 = scmp.ne.s32.totalorder %s106, %s107
      %p121 = scmp.eq.s32.totalorder %s26, 1
      %p122 = por %p120, %p121
      %p124 = scmp.ne.s32.totalorder %s107, %s123
      %p125 = scmp.eq.s32.totalorder %s26, 0
      %p126 = por %p124, %p125
      %p127 = scmp.le.s32.totalorder 1, %s20
      %p128 = scmp.lt.s32.totalorder %s20, 3
      %p129 = pnand %p127, %p128
      %p130 = pneg %p129
      // Predicated region
      $region9: #{tpu_custom_call.1} parent=5 // pred_check
        _
      $region10: #{tpu_custom_call.1} parent=5 // pred_check_branch
        %132 = sbr.rel (%p129) target = $region12
      $region11: #{tpu_custom_call.1} parent=5 // pred_region
        %s133 = ssub.s32 %s20, 1
        // Predicated region
        $region13: #{tpu_custom_call.1} parent=11 // pred_check
          %p134 = pneg %p67
        $region14: #{tpu_custom_call.1} parent=11 // pred_check_branch
          %136 = sbr.rel (%p134) target = $region16
        $region15: #{tpu_custom_call.1} parent=11 // pred_region
          %s138 = ssub.s32 18432, 18432
          %139 = vsyncadd [#allocation7], %s138
          %s140 = sshll.u32 [#allocation6], 4
          %s141 = int_to_ptr.vmem [resolvable:$true] %s140
          %146 = dma.hbm_to_vmem [thread:$0]  %s1, 18432, %s141, [#allocation7], 128, 128, 8
        $region16: #{tpu_custom_call.1} parent=11 // pred_fallthru
          _
      $region12: #{tpu_custom_call.1} parent=5 // pred_fallthru
        _
      %p147 = scmp.lt.s32.totalorder %s20, 2
      // Predicated region
      $region17: #{tpu_custom_call.1} parent=5 // pred_check
        %p148 = pneg %p147
      $region18: #{tpu_custom_call.1} parent=5 // pred_check_branch
        %150 = sbr.rel (%p148) target = $region20
      $region19: #{tpu_custom_call.1} parent=5 // pred_region
        // Predicated region
        $region21: #{tpu_custom_call.1} parent=19 // pred_check
          %p151 = pneg %p40
        $region22: #{tpu_custom_call.1} parent=19 // pred_check_branch
          %153 = sbr.rel (%p151) target = $region24
        $region23: #{tpu_custom_call.1} parent=19 // pred_region
          %s154 = sand.u32 %s30, 1
          %s155 = scalar_lea.sflag [#allocation4], %s154
          %s156 = sand.u32 %s30, 1
          %s157 = smul.addr %s156, 256
          %s158 = scalar_lea.vmem [#allocation3], %s157
          %s160 = ssub.s32 4096, 4096
          %161 = vsyncadd %s155, %s160
          %s162 = smul.addr %s20, 32
          %s163 = smul.addr %s162, 128
          %s164 = scalar_lea.hbm %s0, %s163
          %s165 = sshll.u32 %s158, 4
          %s166 = int_to_ptr.vmem [resolvable:$true] %s165
          %171 = dma.hbm_to_vmem [thread:$0]  %s164, 4096, %s166, %s155, 128, 128, 8
        $region24: #{tpu_custom_call.1} parent=19 // pred_fallthru
          _
      $region20: #{tpu_custom_call.1} parent=5 // pred_fallthru
        _
      %p172 = scmp.le.s32.totalorder 1, %s20
      %p173 = scmp.lt.s32.totalorder %s20, 3
      %p174 = pnand %p172, %p173
      %p175 = pneg %p174
      // Predicated region
      $region25: #{tpu_custom_call.1} parent=5 // pred_check
        _
      $region26: #{tpu_custom_call.1} parent=5 // pred_check_branch
        %177 = sbr.rel (%p174) target = $region28
      $region27: #{tpu_custom_call.1} parent=5 // pred_region
        %s178 = ssub.s32 %s20, 1
        %s179 = sand.u32 %s33, 1
        %s180 = scalar_lea.sflag [#allocation4], %s179
        %s181 = sand.u32 %s33, 1
        %s182 = smul.addr %s181, 256
        %s183 = scalar_lea.vmem [#allocation3], %s182
        // Predicated region
        $region29: #{tpu_custom_call.1} parent=27 // pred_check
          %p184 = pneg %p46
        $region30: #{tpu_custom_call.1} parent=27 // pred_check_branch
          %186 = sbr.rel (%p184) target = $region32
        $region31: #{tpu_custom_call.1} parent=27 // pred_region
          %187 = dma.done %s180, 4096
        $region32: #{tpu_custom_call.1} parent=27 // pred_fallthru
          _
        // Predicated region
        $region33: #{tpu_custom_call.1} parent=27 // pred_check
          %p188 = pneg %p67
        $region34: #{tpu_custom_call.1} parent=27 // pred_check_branch
          %190 = sbr.rel (%p188) target = $region36
        $region35: #{tpu_custom_call.1} parent=27 // pred_region
          %191 = dma.done [#allocation7], 18432
        $region36: #{tpu_custom_call.1} parent=27 // pred_fallthru
          _
        %s192 = sand.u32 %s33, 1
        %s193 = scalar_lea.sflag [#allocation4], %s192
        %s194 = sand.u32 %s33, 1
        %s195 = smul.addr %s194, 256
        %s196 = scalar_lea.vmem [#allocation3], %s195
        %p197 = pneg %p46
        %p198 = pneg %p43
        %p199 = pneg %p67
        %p200 = pneg %p64
        %p201 = pneg %p93
        %p202 = pneg %p90
        %s203 = sand.u32 %s80, 1
        %s204 = scalar_lea.sflag [#allocation5], %s203
        %s205 = sand.u32 %s80, 1
        %s206 = smul.addr %s205, 256
        %s207 = scalar_lea.vmem [#allocation8], %s206
        %p208 = pneg %p119
        %p209 = pneg %p116
        %s210 = sand.u32 %s106, 1
        %s211 = scalar_lea.sflag [#allocation10], %s210
        %s212 = sand.u32 %s106, 1
        %s213 = smul.addr %s212, 2
        %s214 = scalar_lea.vmem [#allocation9], %s213
        %v215 = vld [vmem:[%s183] sm:$0xff]
        %v216 = vld [vmem:[%s183 + $0x8] sm:$0xff]
        %v217 = vld [vmem:[%s183 + $0x10] sm:$0xff]
        %v218 = vld [vmem:[%s183 + $0x18] sm:$0xff]
        %v219 = vld [vmem:[%s183 + $0x20] sm:$0xff]
        %v220 = vld [vmem:[%s183 + $0x28] sm:$0xff]
        %v221 = vld [vmem:[%s183 + $0x30] sm:$0xff]
        %v222 = vld [vmem:[%s183 + $0x38] sm:$0xff]
        %v223 = vld [vmem:[%s183 + $0x40] sm:$0xff]
        %v224 = vld [vmem:[%s183 + $0x48] sm:$0xff]
        %v225 = vld [vmem:[%s183 + $0x50] sm:$0xff]
        %v226 = vld [vmem:[%s183 + $0x58] sm:$0xff]
        %v227 = vld [vmem:[%s183 + $0x60] sm:$0xff]
        %v228 = vld [vmem:[%s183 + $0x68] sm:$0xff]
        %v229 = vld [vmem:[%s183 + $0x70] sm:$0xff]
        %v230 = vld [vmem:[%s183 + $0x78] sm:$0xff]
        %v231 = vld [vmem:[%s183 + $0x80] sm:$0xff]
        %v232 = vld [vmem:[%s183 + $0x88] sm:$0xff]
        %v233 = vld [vmem:[%s183 + $0x90] sm:$0xff]
        %v234 = vld [vmem:[%s183 + $0x98] sm:$0xff]
        %v235 = vld [vmem:[%s183 + $0xa0] sm:$0xff]
        %v236 = vld [vmem:[%s183 + $0xa8] sm:$0xff]
        %v237 = vld [vmem:[%s183 + $0xb0] sm:$0xff]
        %v238 = vld [vmem:[%s183 + $0xb8] sm:$0xff]
        %v239 = vld [vmem:[%s183 + $0xc0] sm:$0xff]
        %v240 = vld [vmem:[%s183 + $0xc8] sm:$0xff]
        %v241 = vld [vmem:[%s183 + $0xd0] sm:$0xff]
        %v242 = vld [vmem:[%s183 + $0xd8] sm:$0xff]
        %v243 = vld [vmem:[%s183 + $0xe0] sm:$0xff]
        %v244 = vld [vmem:[%s183 + $0xe8] sm:$0xff]
        %v245 = vld [vmem:[%s183 + $0xf0] sm:$0xff]
        %v246 = vld [vmem:[%s183 + $0xf8] sm:$0xff]
        %s247 = scalar_lea.vmem [#allocation2], 24
        %248 = vst [vmem:[%s247 + $0x1] sm:$0xff] %v215
        %249 = vst [vmem:[%s247 + $0x9] sm:$0xff] %v216
        %250 = vst [vmem:[%s247 + $0x19] sm:$0xff] %v217
        %251 = vst [vmem:[%s247 + $0x21] sm:$0xff] %v218
        %252 = vst [vmem:[%s247 + $0x31] sm:$0xff] %v219
        %253 = vst [vmem:[%s247 + $0x39] sm:$0xff] %v220
        %254 = vst [vmem:[%s247 + $0x49] sm:$0xff] %v221
        %255 = vst [vmem:[%s247 + $0x51] sm:$0xff] %v222
        %256 = vst [vmem:[%s247 + $0x61] sm:$0xff] %v223
        %257 = vst [vmem:[%s247 + $0x69] sm:$0xff] %v224
        %258 = vst [vmem:[%s247 + $0x79] sm:$0xff] %v225
        %259 = vst [vmem:[%s247 + $0x81] sm:$0xff] %v226
        %260 = vst [vmem:[%s247 + $0x91] sm:$0xff] %v227
        %261 = vst [vmem:[%s247 + $0x99] sm:$0xff] %v228
        %262 = vst [vmem:[%s247 + $0xa9] sm:$0xff] %v229
        %263 = vst [vmem:[%s247 + $0xb1] sm:$0xff] %v230
        %264 = vst [vmem:[%s247 + $0xc1] sm:$0xff] %v231
        %265 = vst [vmem:[%s247 + $0xc9] sm:$0xff] %v232
        %266 = vst [vmem:[%s247 + $0xd9] sm:$0xff] %v233
        %267 = vst [vmem:[%s247 + $0xe1] sm:$0xff] %v234
        %268 = vst [vmem:[%s247 + $0xf1] sm:$0xff] %v235
        %269 = vst [vmem:[%s247 + $0xf9] sm:$0xff] %v236
        %270 = vst [vmem:[%s247 + $0x109] sm:$0xff] %v237
        %271 = vst [vmem:[%s247 + $0x111] sm:$0xff] %v238
        %272 = vst [vmem:[%s247 + $0x121] sm:$0xff] %v239
        %273 = vst [vmem:[%s247 + $0x129] sm:$0xff] %v240
        %274 = vst [vmem:[%s247 + $0x139] sm:$0xff] %v241
        %275 = vst [vmem:[%s247 + $0x141] sm:$0xff] %v242
        %276 = vst [vmem:[%s247 + $0x151] sm:$0xff] %v243
        %277 = vst [vmem:[%s247 + $0x159] sm:$0xff] %v244
        %278 = vst [vmem:[%s247 + $0x169] sm:$0xff] %v245
        %279 = vst [vmem:[%s247 + $0x171] sm:$0xff] %v246
        %280 = vst [vmem:[#allocation2] sm:$0xff] 0.0
        %281 = vst [vmem:[#allocation2 + $0x8] sm:$0xff] 0.0
        %282 = vst [vmem:[#allocation2 + $0x10] sm:$0x3] 0.0
        %s283 = scalar_lea.vmem [#allocation2], 408
        %284 = vst [vmem:[%s283] sm:$0xff] 0.0
        %285 = vst [vmem:[%s283 + $0x8] sm:$0xff] 0.0
        %286 = vst [vmem:[%s283 + $0x10] sm:$0x3] 0.0
        %287 = vst [vmem:[%s247] sm:$0x1] 0.0
        %288 = vst [vmem:[%s247 + $0x18] sm:$0x1] 0.0
        %289 = vst [vmem:[%s247 + $0x30] sm:$0x1] 0.0
        %290 = vst [vmem:[%s247 + $0x48] sm:$0x1] 0.0
        %291 = vst [vmem:[%s247 + $0x60] sm:$0x1] 0.0
        %292 = vst [vmem:[%s247 + $0x78] sm:$0x1] 0.0
        %293 = vst [vmem:[%s247 + $0x90] sm:$0x1] 0.0
        %294 = vst [vmem:[%s247 + $0xa8] sm:$0x1] 0.0
        %295 = vst [vmem:[%s247 + $0xc0] sm:$0x1] 0.0
        %296 = vst [vmem:[%s247 + $0xd8] sm:$0x1] 0.0
        %297 = vst [vmem:[%s247 + $0xf0] sm:$0x1] 0.0
        %298 = vst [vmem:[%s247 + $0x108] sm:$0x1] 0.0
        %299 = vst [vmem:[%s247 + $0x120] sm:$0x1] 0.0
        %300 = vst [vmem:[%s247 + $0x138] sm:$0x1] 0.0
        %301 = vst [vmem:[%s247 + $0x150] sm:$0x1] 0.0
        %302 = vst [vmem:[%s247 + $0x168] sm:$0x1] 0.0
        %303 = vst [vmem:[%s247 + $0x11] sm:$0x1] 0.0
        %304 = vst [vmem:[%s247 + $0x29] sm:$0x1] 0.0
        %305 = vst [vmem:[%s247 + $0x41] sm:$0x1] 0.0
        %306 = vst [vmem:[%s247 + $0x59] sm:$0x1] 0.0
        %307 = vst [vmem:[%s247 + $0x71] sm:$0x1] 0.0
        %308 = vst [vmem:[%s247 + $0x89] sm:$0x1] 0.0
        %309 = vst [vmem:[%s247 + $0xa1] sm:$0x1] 0.0
        %310 = vst [vmem:[%s247 + $0xb9] sm:$0x1] 0.0
        %311 = vst [vmem:[%s247 + $0xd1] sm:$0x1] 0.0
        %312 = vst [vmem:[%s247 + $0xe9] sm:$0x1] 0.0
        %313 = vst [vmem:[%s247 + $0x101] sm:$0x1] 0.0
        %314 = vst [vmem:[%s247 + $0x119] sm:$0x1] 0.0
        %315 = vst [vmem:[%s247 + $0x131] sm:$0x1] 0.0
        %316 = vst [vmem:[%s247 + $0x149] sm:$0x1] 0.0
        %317 = vst [vmem:[%s247 + $0x161] sm:$0x1] 0.0
        %318 = vst [vmem:[%s247 + $0x179] sm:$0x1] 0.0
        %v319 = vld [vmem:[#allocation2] sm:$0xff]
        %v320 = vld [vmem:[#allocation2 + $0x8] sm:$0xff]
        %v321 = vld [vmem:[#allocation2 + $0x18] sm:$0xff]
        %v322 = vld [vmem:[#allocation2 + $0x20] sm:$0xff]
        %v323 = vld [vmem:[#allocation2 + $0x30] sm:$0xff]
        %v324 = vld [vmem:[#allocation2 + $0x38] sm:$0xff]
        %v325 = vld [vmem:[#allocation2 + $0x48] sm:$0xff]
        %v326 = vld [vmem:[#allocation2 + $0x50] sm:$0xff]
        %v327 = vld [vmem:[#allocation2 + $0x60] sm:$0xff]
        %v328 = vld [vmem:[#allocation2 + $0x68] sm:$0xff]
        %v329 = vld [vmem:[#allocation2 + $0x78] sm:$0xff]
        %v330 = vld [vmem:[#allocation2 + $0x80] sm:$0xff]
        %v331 = vld [vmem:[#allocation2 + $0x90] sm:$0xff]
        %v332 = vld [vmem:[#allocation2 + $0x98] sm:$0xff]
        %v333 = vld [vmem:[#allocation2 + $0xa8] sm:$0xff]
        %v334 = vld [vmem:[#allocation2 + $0xb0] sm:$0xff]
        %v335 = vld [vmem:[#allocation2 + $0xc0] sm:$0xff]
        %v336 = vld [vmem:[#allocation2 + $0xc8] sm:$0xff]
        %v337 = vld [vmem:[#allocation2 + $0xd8] sm:$0xff]
        %v338 = vld [vmem:[#allocation2 + $0xe0] sm:$0xff]
        %v339 = vld [vmem:[#allocation2 + $0xf0] sm:$0xff]
        %v340 = vld [vmem:[#allocation2 + $0xf8] sm:$0xff]
        %v341 = vld [vmem:[#allocation2 + $0x108] sm:$0xff]
        %v342 = vld [vmem:[#allocation2 + $0x110] sm:$0xff]
        %v343 = vld [vmem:[#allocation2 + $0x120] sm:$0xff]
        %v344 = vld [vmem:[#allocation2 + $0x128] sm:$0xff]
        %v345 = vld [vmem:[#allocation2 + $0x138] sm:$0xff]
        %v346 = vld [vmem:[#allocation2 + $0x140] sm:$0xff]
        %v347 = vld [vmem:[#allocation2 + $0x150] sm:$0xff]
        %v348 = vld [vmem:[#allocation2 + $0x158] sm:$0xff]
        %v349 = vld [vmem:[#allocation2 + $0x168] sm:$0xff]
        %v350 = vld [vmem:[#allocation2 + $0x170] sm:$0xff]
        %v351 = vld [vmem:[#allocation6] sm:$0xff]
        %v352 = vld [vmem:[#allocation6 + $0x8] sm:$0xff]
        %v353 = vld [vmem:[#allocation6 + $0x10] sm:$0xff]
        %v354 = vld [vmem:[#allocation6 + $0x18] sm:$0xff]
        %v355 = vld [vmem:[#allocation6 + $0x20] sm:$0xff]
        %v356 = vld [vmem:[#allocation6 + $0x28] sm:$0xff]
        %v357 = vld [vmem:[#allocation6 + $0x30] sm:$0xff]
        %v358 = vld [vmem:[#allocation6 + $0x38] sm:$0xff]
        %v359 = vld [vmem:[#allocation6 + $0x40] sm:$0xff]
        %v360 = vld [vmem:[#allocation6 + $0x48] sm:$0xff]
        %v361 = vld [vmem:[#allocation6 + $0x50] sm:$0xff]
        %v362 = vld [vmem:[#allocation6 + $0x58] sm:$0xff]
        %v363 = vld [vmem:[#allocation6 + $0x60] sm:$0xff]
        %v364 = vld [vmem:[#allocation6 + $0x68] sm:$0xff]
        %v365 = vld [vmem:[#allocation6 + $0x70] sm:$0xff]
        %v366 = vld [vmem:[#allocation6 + $0x78] sm:$0xff]
        %v367 = vld [vmem:[#allocation2 + $0x1] sm:$0xff]
        %v368 = vld [vmem:[#allocation2 + $0x9] sm:$0xff]
        %v369 = vld [vmem:[#allocation2 + $0x19] sm:$0xff]
        %v370 = vld [vmem:[#allocation2 + $0x21] sm:$0xff]
        %v371 = vld [vmem:[#allocation2 + $0x31] sm:$0xff]
        %v372 = vld [vmem:[#allocation2 + $0x39] sm:$0xff]
        %v373 = vld [vmem:[#allocation2 + $0x49] sm:$0xff]
        %v374 = vld [vmem:[#allocation2 + $0x51] sm:$0xff]
        %v375 = vld [vmem:[#allocation2 + $0x61] sm:$0xff]
        %v376 = vld [vmem:[#allocation2 + $0x69] sm:$0xff]
        %v377 = vld [vmem:[#allocation2 + $0x79] sm:$0xff]
        %v378 = vld [vmem:[#allocation2 + $0x81] sm:$0xff]
        %v379 = vld [vmem:[#allocation2 + $0x91] sm:$0xff]
        %v380 = vld [vmem:[#allocation2 + $0x99] sm:$0xff]
        %v381 = vld [vmem:[#allocation2 + $0xa9] sm:$0xff]
        %v382 = vld [vmem:[#allocation2 + $0xb1] sm:$0xff]
        %v383 = vld [vmem:[#allocation2 + $0xc1] sm:$0xff]
        %v384 = vld [vmem:[#allocation2 + $0xc9] sm:$0xff]
        %v385 = vld [vmem:[#allocation2 + $0xd9] sm:$0xff]
        %v386 = vld [vmem:[#allocation2 + $0xe1] sm:$0xff]
        %v387 = vld [vmem:[#allocation2 + $0xf1] sm:$0xff]
        %v388 = vld [vmem:[#allocation2 + $0xf9] sm:$0xff]
        %v389 = vld [vmem:[#allocation2 + $0x109] sm:$0xff]
        %v390 = vld [vmem:[#allocation2 + $0x111] sm:$0xff]
        %v391 = vld [vmem:[#allocation2 + $0x121] sm:$0xff]
        %v392 = vld [vmem:[#allocation2 + $0x129] sm:$0xff]
        %v393 = vld [vmem:[#allocation2 + $0x139] sm:$0xff]
        %v394 = vld [vmem:[#allocation2 + $0x141] sm:$0xff]
        %v395 = vld [vmem:[#allocation2 + $0x151] sm:$0xff]
        %v396 = vld [vmem:[#allocation2 + $0x159] sm:$0xff]
        %v397 = vld [vmem:[#allocation2 + $0x169] sm:$0xff]
        %v398 = vld [vmem:[#allocation2 + $0x171] sm:$0xff]
        %v399 = vld [vmem:[#allocation6 + $0x80] sm:$0xff]
        %v400 = vld [vmem:[#allocation6 + $0x88] sm:$0xff]
        %v401 = vld [vmem:[#allocation6 + $0x90] sm:$0xff]
        %v402 = vld [vmem:[#allocation6 + $0x98] sm:$0xff]
        %v403 = vld [vmem:[#allocation6 + $0xa0] sm:$0xff]
        %v404 = vld [vmem:[#allocation6 + $0xa8] sm:$0xff]
        %v405 = vld [vmem:[#allocation6 + $0xb0] sm:$0xff]
        %v406 = vld [vmem:[#allocation6 + $0xb8] sm:$0xff]
        %v407 = vld [vmem:[#allocation6 + $0xc0] sm:$0xff]
        %v408 = vld [vmem:[#allocation6 + $0xc8] sm:$0xff]
        %v409 = vld [vmem:[#allocation6 + $0xd0] sm:$0xff]
        %v410 = vld [vmem:[#allocation6 + $0xd8] sm:$0xff]
        %v411 = vld [vmem:[#allocation6 + $0xe0] sm:$0xff]
        %v412 = vld [vmem:[#allocation6 + $0xe8] sm:$0xff]
        %v413 = vld [vmem:[#allocation6 + $0xf0] sm:$0xff]
        %v414 = vld [vmem:[#allocation6 + $0xf8] sm:$0xff]
        %415 = vmatprep.subr.mxu0 0.0
        %416 = vmatpush1.msra.mxu0 %v414
        %417 = vmatprep.subr.mxu0 0.0
        %418 = vmatpush1.msra.mxu0 %v413
        %419 = vmatprep.subr.mxu0 0.0
        %420 = vmatpush1.msra.mxu0 %v412
        %421 = vmatprep.subr.mxu0 0.0
        %422 = vmatpush1.msra.mxu0 %v411
        %423 = vmatprep.subr.mxu0 0.0
        %424 = vmatpush1.msra.mxu0 %v410
        %425 = vmatprep.subr.mxu0 0.0
        %426 = vmatpush1.msra.mxu0 %v409
        %427 = vmatprep.subr.mxu0 0.0
        %428 = vmatpush1.msra.mxu0 %v408
        %429 = vmatprep.subr.mxu0 0.0
        %430 = vmatpush1.msra.mxu0 %v407
        %431 = vmatprep.subr.mxu0 0.0
        %432 = vmatpush1.msra.mxu0 %v406
        %433 = vmatprep.subr.mxu0 0.0
        %434 = vmatpush1.msra.mxu0 %v405
        %435 = vmatprep.subr.mxu0 0.0
        %436 = vmatpush1.msra.mxu0 %v404
        %437 = vmatprep.subr.mxu0 0.0
        %438 = vmatpush1.msra.mxu0 %v403
        %439 = vmatprep.subr.mxu0 0.0
        %440 = vmatpush1.msra.mxu0 %v402
        %441 = vmatprep.subr.mxu0 0.0
        %442 = vmatpush1.msra.mxu0 %v401
        %443 = vmatprep.subr.mxu0 0.0
        %444 = vmatpush1.msra.mxu0 %v400
        %445 = vmatprep.subr.mxu0 0.0
        %446 = vmatpush1.msra.mxu0 %v399
        %447 = vmatprep.subr.mxu0 0.0
        %448 = vmatpush2.msra.mxu0 0.0
        %449 = vmatprep.subr.mxu0 0.0
        %450 = vmatpush2.msra.mxu0 0.0
        %451 = vmatprep.subr.mxu0 0.0
        %452 = vmatpush2.msra.mxu0 0.0
        %453 = vmatprep.subr.mxu0 0.0
        %454 = vmatpush2.msra.mxu0 0.0
        %455 = vmatprep.subr.mxu0 0.0
        %456 = vmatpush2.msra.mxu0 0.0
        %457 = vmatprep.subr.mxu0 0.0
        %458 = vmatpush2.msra.mxu0 0.0
        %459 = vmatprep.subr.mxu0 0.0
        %460 = vmatpush2.msra.mxu0 0.0
        %461 = vmatprep.subr.mxu0 0.0
        %462 = vmatpush2.msra.mxu0 0.0
        %463 = vmatprep.subr.mxu0 0.0
        %464 = vmatpush2.msra.mxu0 0.0
        %465 = vmatprep.subr.mxu0 0.0
        %466 = vmatpush2.msra.mxu0 0.0
        %467 = vmatprep.subr.mxu0 0.0
        %468 = vmatpush2.msra.mxu0 0.0
        %469 = vmatprep.subr.mxu0 0.0
        %470 = vmatpush2.msra.mxu0 0.0
        %471 = vmatprep.subr.mxu0 0.0
        %472 = vmatpush2.msra.mxu0 0.0
        %473 = vmatprep.subr.mxu0 0.0
        %474 = vmatpush2.msra.mxu0 0.0
        %475 = vmatprep.subr.mxu0 0.0
        %476 = vmatpush2.msra.mxu0 0.0
        %477 = vmatprep.subr.mxu0 0.0
        %478 = vmatpush2.msra.mxu0 0.0
        %479 = vmatprep.mubr.f32.mxu0 0.0
        %480 = vmatmul.mubr.f32.gmra.mxu0 %v367
        %v481 = vpop.f32.mrf.mxu0
        %v482 = vadd.f32 0.0, %v481
        %v483 = vpop.f32.mrf.mxu0
        %484 = vmatprep.mubr.f32.mxu0 0.0
        %485 = vmatmul.mubr.f32.gmra.mxu0 %v368
        %v486 = vpop.f32.mrf.mxu0
        %v487 = vadd.f32 0.0, %v486
        %v488 = vpop.f32.mrf.mxu0
        %489 = vmatprep.mubr.f32.mxu0 0.0
        %490 = vmatmul.mubr.f32.gmra.mxu0 %v369
        %v491 = vpop.f32.mrf.mxu0
        %v492 = vadd.f32 0.0, %v491
        %v493 = vpop.f32.mrf.mxu0
        %494 = vmatprep.mubr.f32.mxu0 0.0
        %495 = vmatmul.mubr.f32.gmra.mxu0 %v370
        %v496 = vpop.f32.mrf.mxu0
        %v497 = vadd.f32 0.0, %v496
        %v498 = vpop.f32.mrf.mxu0
        %499 = vmatprep.mubr.f32.mxu0 0.0
        %500 = vmatmul.mubr.f32.gmra.mxu0 %v371
        %v501 = vpop.f32.mrf.mxu0
        %v502 = vadd.f32 0.0, %v501
        %v503 = vpop.f32.mrf.mxu0
        %504 = vmatprep.mubr.f32.mxu0 0.0
        %505 = vmatmul.mubr.f32.gmra.mxu0 %v372
        %v506 = vpop.f32.mrf.mxu0
        %v507 = vadd.f32 0.0, %v506
        %v508 = vpop.f32.mrf.mxu0
        %509 = vmatprep.mubr.f32.mxu0 0.0
        %510 = vmatmul.mubr.f32.gmra.mxu0 %v373
        %v511 = vpop.f32.mrf.mxu0
        %v512 = vadd.f32 0.0, %v511
        %v513 = vpop.f32.mrf.mxu0
        %514 = vmatprep.mubr.f32.mxu0 0.0
        %515 = vmatmul.mubr.f32.gmra.mxu0 %v374
        %v516 = vpop.f32.mrf.mxu0
        %v517 = vadd.f32 0.0, %v516
        %v518 = vpop.f32.mrf.mxu0
        %519 = vmatprep.mubr.f32.mxu0 0.0
        %520 = vmatmul.mubr.f32.gmra.mxu0 %v375
        %v521 = vpop.f32.mrf.mxu0
        %v522 = vadd.f32 0.0, %v521
        %v523 = vpop.f32.mrf.mxu0
        %524 = vmatprep.mubr.f32.mxu0 0.0
        %525 = vmatmul.mubr.f32.gmra.mxu0 %v376
        %v526 = vpop.f32.mrf.mxu0
        %v527 = vadd.f32 0.0, %v526
        %v528 = vpop.f32.mrf.mxu0
        %529 = vmatprep.mubr.f32.mxu0 0.0
        %530 = vmatmul.mubr.f32.gmra.mxu0 %v377
        %v531 = vpop.f32.mrf.mxu0
        %v532 = vadd.f32 0.0, %v531
        %v533 = vpop.f32.mrf.mxu0
        %534 = vmatprep.mubr.f32.mxu0 0.0
        %535 = vmatmul.mubr.f32.gmra.mxu0 %v378
        %v536 = vpop.f32.mrf.mxu0
        %v537 = vadd.f32 0.0, %v536
        %v538 = vpop.f32.mrf.mxu0
        %539 = vmatprep.mubr.f32.mxu0 0.0
        %540 = vmatmul.mubr.f32.gmra.mxu0 %v379
        %v541 = vpop.f32.mrf.mxu0
        %v542 = vadd.f32 0.0, %v541
        %v543 = vpop.f32.mrf.mxu0
        %544 = vmatprep.mubr.f32.mxu0 0.0
        %545 = vmatmul.mubr.f32.gmra.mxu0 %v380
        %v546 = vpop.f32.mrf.mxu0
        %v547 = vadd.f32 0.0, %v546
        %v548 = vpop.f32.mrf.mxu0
        %549 = vmatprep.mubr.f32.mxu0 0.0
        %550 = vmatmul.mubr.f32.gmra.mxu0 %v381
        %v551 = vpop.f32.mrf.mxu0
        %v552 = vadd.f32 0.0, %v551
        %v553 = vpop.f32.mrf.mxu0
        %554 = vmatprep.mubr.f32.mxu0 0.0
        %555 = vmatmul.mubr.f32.gmra.mxu0 %v382
        %v556 = vpop.f32.mrf.mxu0
        %v557 = vadd.f32 0.0, %v556
        %v558 = vpop.f32.mrf.mxu0
        %559 = vmatprep.mubr.f32.mxu0 0.0
        %560 = vmatmul.mubr.f32.gmra.mxu0 %v383
        %v561 = vpop.f32.mrf.mxu0
        %v562 = vadd.f32 0.0, %v561
        %v563 = vpop.f32.mrf.mxu0
        %564 = vmatprep.mubr.f32.mxu0 0.0
        %565 = vmatmul.mubr.f32.gmra.mxu0 %v384
        %v566 = vpop.f32.mrf.mxu0
        %v567 = vadd.f32 0.0, %v566
        %v568 = vpop.f32.mrf.mxu0
        %569 = vmatprep.mubr.f32.mxu0 0.0
        %570 = vmatmul.mubr.f32.gmra.mxu0 %v385
        %v571 = vpop.f32.mrf.mxu0
        %v572 = vadd.f32 0.0, %v571
        %v573 = vpop.f32.mrf.mxu0
        %574 = vmatprep.mubr.f32.mxu0 0.0
        %575 = vmatmul.mubr.f32.gmra.mxu0 %v386
        %v576 = vpop.f32.mrf.mxu0
        %v577 = vadd.f32 0.0, %v576
        %v578 = vpop.f32.mrf.mxu0
        %579 = vmatprep.mubr.f32.mxu0 0.0
        %580 = vmatmul.mubr.f32.gmra.mxu0 %v387
        %v581 = vpop.f32.mrf.mxu0
        %v582 = vadd.f32 0.0, %v581
        %v583 = vpop.f32.mrf.mxu0
        %584 = vmatprep.mubr.f32.mxu0 0.0
        %585 = vmatmul.mubr.f32.gmra.mxu0 %v388
        %v586 = vpop.f32.mrf.mxu0
        %v587 = vadd.f32 0.0, %v586
        %v588 = vpop.f32.mrf.mxu0
        %589 = vmatprep.mubr.f32.mxu0 0.0
        %590 = vmatmul.mubr.f32.gmra.mxu0 %v389
        %v591 = vpop.f32.mrf.mxu0
        %v592 = vadd.f32 0.0, %v591
        %v593 = vpop.f32.mrf.mxu0
        %594 = vmatprep.mubr.f32.mxu0 0.0
        %595 = vmatmul.mubr.f32.gmra.mxu0 %v390
        %v596 = vpop.f32.mrf.mxu0
        %v597 = vadd.f32 0.0, %v596
        %v598 = vpop.f32.mrf.mxu0
        %599 = vmatprep.mubr.f32.mxu0 0.0
        %600 = vmatmul.mubr.f32.gmra.mxu0 %v391
        %v601 = vpop.f32.mrf.mxu0
        %v602 = vadd.f32 0.0, %v601
        %v603 = vpop.f32.mrf.mxu0
        %604 = vmatprep.mubr.f32.mxu0 0.0
        %605 = vmatmul.mubr.f32.gmra.mxu0 %v392
        %v606 = vpop.f32.mrf.mxu0
        %v607 = vadd.f32 0.0, %v606
        %v608 = vpop.f32.mrf.mxu0
        %609 = vmatprep.mubr.f32.mxu0 0.0
        %610 = vmatmul.mubr.f32.gmra.mxu0 %v393
        %v611 = vpop.f32.mrf.mxu0
        %v612 = vadd.f32 0.0, %v611
        %v613 = vpop.f32.mrf.mxu0
        %614 = vmatprep.mubr.f32.mxu0 0.0
        %615 = vmatmul.mubr.f32.gmra.mxu0 %v394
        %v616 = vpop.f32.mrf.mxu0
        %v617 = vadd.f32 0.0, %v616
        %v618 = vpop.f32.mrf.mxu0
        %619 = vmatprep.mubr.f32.mxu0 0.0
        %620 = vmatmul.mubr.f32.gmra.mxu0 %v395
        %v621 = vpop.f32.mrf.mxu0
        %v622 = vadd.f32 0.0, %v621
        %v623 = vpop.f32.mrf.mxu0
        %624 = vmatprep.mubr.f32.mxu0 0.0
        %625 = vmatmul.mubr.f32.gmra.mxu0 %v396
        %v626 = vpop.f32.mrf.mxu0
        %v627 = vadd.f32 0.0, %v626
        %v628 = vpop.f32.mrf.mxu0
        %629 = vmatprep.mubr.f32.mxu0 0.0
        %630 = vmatmul.mubr.f32.gmra.mxu0 %v397
        %v631 = vpop.f32.mrf.mxu0
        %v632 = vadd.f32 0.0, %v631
        %v633 = vpop.f32.mrf.mxu0
        %634 = vmatprep.mubr.f32.mxu0 0.0
        %635 = vmatmul.mubr.f32.gmra.mxu0 %v398
        %v636 = vpop.f32.mrf.mxu0
        %v637 = vadd.f32 0.0, %v636
        %v638 = vpop.f32.mrf.mxu0
        %639 = vdwg.mxu0
        %640 = vmatprep.subr.mxu0 0.0
        %641 = vmatpush1.msra.mxu0 %v366
        %642 = vmatprep.subr.mxu0 0.0
        %643 = vmatpush1.msra.mxu0 %v365
        %644 = vmatprep.subr.mxu0 0.0
        %645 = vmatpush1.msra.mxu0 %v364
        %646 = vmatprep.subr.mxu0 0.0
        %647 = vmatpush1.msra.mxu0 %v363
        %648 = vmatprep.subr.mxu0 0.0
        %649 = vmatpush1.msra.mxu0 %v362
        %650 = vmatprep.subr.mxu0 0.0
        %651 = vmatpush1.msra.mxu0 %v361
        %652 = vmatprep.subr.mxu0 0.0
        %653 = vmatpush1.msra.mxu0 %v360
        %654 = vmatprep.subr.mxu0 0.0
        %655 = vmatpush1.msra.mxu0 %v359
        %656 = vmatprep.subr.mxu0 0.0
        %657 = vmatpush1.msra.mxu0 %v358
        %658 = vmatprep.subr.mxu0 0.0
        %659 = vmatpush1.msra.mxu0 %v357
        %660 = vmatprep.subr.mxu0 0.0
        %661 = vmatpush1.msra.mxu0 %v356
        %662 = vmatprep.subr.mxu0 0.0
        %663 = vmatpush1.msra.mxu0 %v355
        %664 = vmatprep.subr.mxu0 0.0
        %665 = vmatpush1.msra.mxu0 %v354
        %666 = vmatprep.subr.mxu0 0.0
        %667 = vmatpush1.msra.mxu0 %v353
        %668 = vmatprep.subr.mxu0 0.0
        %669 = vmatpush1.msra.mxu0 %v352
        %670 = vmatprep.subr.mxu0 0.0
        %671 = vmatpush1.msra.mxu0 %v351
        %672 = vmatprep.subr.mxu0 0.0
        %673 = vmatpush2.msra.mxu0 0.0
        %674 = vmatprep.subr.mxu0 0.0
        %675 = vmatpush2.msra.mxu0 0.0
        %676 = vmatprep.subr.mxu0 0.0
        %677 = vmatpush2.msra.mxu0 0.0
        %678 = vmatprep.subr.mxu0 0.0
        %679 = vmatpush2.msra.mxu0 0.0
        %680 = vmatprep.subr.mxu0 0.0
        %681 = vmatpush2.msra.mxu0 0.0
        %682 = vmatprep.subr.mxu0 0.0
        %683 = vmatpush2.msra.mxu0 0.0
        %684 = vmatprep.subr.mxu0 0.0
        %685 = vmatpush2.msra.mxu0 0.0
        %686 = vmatprep.subr.mxu0 0.0
        %687 = vmatpush2.msra.mxu0 0.0
        %688 = vmatprep.subr.mxu0 0.0
        %689 = vmatpush2.msra.mxu0 0.0
        %690 = vmatprep.subr.mxu0 0.0
        %691 = vmatpush2.msra.mxu0 0.0
        %692 = vmatprep.subr.mxu0 0.0
        %693 = vmatpush2.msra.mxu0 0.0
        %694 = vmatprep.subr.mxu0 0.0
        %695 = vmatpush2.msra.mxu0 0.0
        %696 = vmatprep.subr.mxu0 0.0
        %697 = vmatpush2.msra.mxu0 0.0
        %698 = vmatprep.subr.mxu0 0.0
        %699 = vmatpush2.msra.mxu0 0.0
        %700 = vmatprep.subr.mxu0 0.0
        %701 = vmatpush2.msra.mxu0 0.0
        %702 = vmatprep.subr.mxu0 0.0
        %703 = vmatpush2.msra.mxu0 0.0
        %704 = vmatprep.mubr.f32.mxu0 0.0
        %705 = vmatmul.mubr.f32.gmra.mxu0 %v319
        %v706 = vpop.f32.mrf.mxu0
        %v707 = vadd.f32 %v482, %v706
        %v708 = vpop.f32.mrf.mxu0
        %709 = vmatprep.mubr.f32.mxu0 0.0
        %710 = vmatmul.mubr.f32.gmra.mxu0 %v320
        %v711 = vpop.f32.mrf.mxu0
        %v712 = vadd.f32 %v487, %v711
        %v713 = vpop.f32.mrf.mxu0
        %714 = vmatprep.mubr.f32.mxu0 0.0
        %715 = vmatmul.mubr.f32.gmra.mxu0 %v321
        %v716 = vpop.f32.mrf.mxu0
        %v717 = vadd.f32 %v492, %v716
        %v718 = vpop.f32.mrf.mxu0
        %719 = vmatprep.mubr.f32.mxu0 0.0
        %720 = vmatmul.mubr.f32.gmra.mxu0 %v322
        %v721 = vpop.f32.mrf.mxu0
        %v722 = vadd.f32 %v497, %v721
        %v723 = vpop.f32.mrf.mxu0
        %724 = vmatprep.mubr.f32.mxu0 0.0
        %725 = vmatmul.mubr.f32.gmra.mxu0 %v323
        %v726 = vpop.f32.mrf.mxu0
        %v727 = vadd.f32 %v502, %v726
        %v728 = vpop.f32.mrf.mxu0
        %729 = vmatprep.mubr.f32.mxu0 0.0
        %730 = vmatmul.mubr.f32.gmra.mxu0 %v324
        %v731 = vpop.f32.mrf.mxu0
        %v732 = vadd.f32 %v507, %v731
        %v733 = vpop.f32.mrf.mxu0
        %734 = vmatprep.mubr.f32.mxu0 0.0
        %735 = vmatmul.mubr.f32.gmra.mxu0 %v325
        %v736 = vpop.f32.mrf.mxu0
        %v737 = vadd.f32 %v512, %v736
        %v738 = vpop.f32.mrf.mxu0
        %739 = vmatprep.mubr.f32.mxu0 0.0
        %740 = vmatmul.mubr.f32.gmra.mxu0 %v326
        %v741 = vpop.f32.mrf.mxu0
        %v742 = vadd.f32 %v517, %v741
        %v743 = vpop.f32.mrf.mxu0
        %744 = vmatprep.mubr.f32.mxu0 0.0
        %745 = vmatmul.mubr.f32.gmra.mxu0 %v327
        %v746 = vpop.f32.mrf.mxu0
        %v747 = vadd.f32 %v522, %v746
        %v748 = vpop.f32.mrf.mxu0
        %749 = vmatprep.mubr.f32.mxu0 0.0
        %750 = vmatmul.mubr.f32.gmra.mxu0 %v328
        %v751 = vpop.f32.mrf.mxu0
        %v752 = vadd.f32 %v527, %v751
        %v753 = vpop.f32.mrf.mxu0
        %754 = vmatprep.mubr.f32.mxu0 0.0
        %755 = vmatmul.mubr.f32.gmra.mxu0 %v329
        %v756 = vpop.f32.mrf.mxu0
        %v757 = vadd.f32 %v532, %v756
        %v758 = vpop.f32.mrf.mxu0
        %759 = vmatprep.mubr.f32.mxu0 0.0
        %760 = vmatmul.mubr.f32.gmra.mxu0 %v330
        %v761 = vpop.f32.mrf.mxu0
        %v762 = vadd.f32 %v537, %v761
        %v763 = vpop.f32.mrf.mxu0
        %764 = vmatprep.mubr.f32.mxu0 0.0
        %765 = vmatmul.mubr.f32.gmra.mxu0 %v331
        %v766 = vpop.f32.mrf.mxu0
        %v767 = vadd.f32 %v542, %v766
        %v768 = vpop.f32.mrf.mxu0
        %769 = vmatprep.mubr.f32.mxu0 0.0
        %770 = vmatmul.mubr.f32.gmra.mxu0 %v332
        %v771 = vpop.f32.mrf.mxu0
        %v772 = vadd.f32 %v547, %v771
        %v773 = vpop.f32.mrf.mxu0
        %774 = vmatprep.mubr.f32.mxu0 0.0
        %775 = vmatmul.mubr.f32.gmra.mxu0 %v333
        %v776 = vpop.f32.mrf.mxu0
        %v777 = vadd.f32 %v552, %v776
        %v778 = vpop.f32.mrf.mxu0
        %779 = vmatprep.mubr.f32.mxu0 0.0
        %780 = vmatmul.mubr.f32.gmra.mxu0 %v334
        %v781 = vpop.f32.mrf.mxu0
        %v782 = vadd.f32 %v557, %v781
        %v783 = vpop.f32.mrf.mxu0
        %784 = vmatprep.mubr.f32.mxu0 0.0
        %785 = vmatmul.mubr.f32.gmra.mxu0 %v335
        %v786 = vpop.f32.mrf.mxu0
        %v787 = vadd.f32 %v562, %v786
        %v788 = vpop.f32.mrf.mxu0
        %789 = vmatprep.mubr.f32.mxu0 0.0
        %790 = vmatmul.mubr.f32.gmra.mxu0 %v336
        %v791 = vpop.f32.mrf.mxu0
        %v792 = vadd.f32 %v567, %v791
        %v793 = vpop.f32.mrf.mxu0
        %794 = vmatprep.mubr.f32.mxu0 0.0
        %795 = vmatmul.mubr.f32.gmra.mxu0 %v337
        %v796 = vpop.f32.mrf.mxu0
        %v797 = vadd.f32 %v572, %v796
        %v798 = vpop.f32.mrf.mxu0
        %799 = vmatprep.mubr.f32.mxu0 0.0
        %800 = vmatmul.mubr.f32.gmra.mxu0 %v338
        %v801 = vpop.f32.mrf.mxu0
        %v802 = vadd.f32 %v577, %v801
        %v803 = vpop.f32.mrf.mxu0
        %804 = vmatprep.mubr.f32.mxu0 0.0
        %805 = vmatmul.mubr.f32.gmra.mxu0 %v339
        %v806 = vpop.f32.mrf.mxu0
        %v807 = vadd.f32 %v582, %v806
        %v808 = vpop.f32.mrf.mxu0
        %809 = vmatprep.mubr.f32.mxu0 0.0
        %810 = vmatmul.mubr.f32.gmra.mxu0 %v340
        %v811 = vpop.f32.mrf.mxu0
        %v812 = vadd.f32 %v587, %v811
        %v813 = vpop.f32.mrf.mxu0
        %814 = vmatprep.mubr.f32.mxu0 0.0
        %815 = vmatmul.mubr.f32.gmra.mxu0 %v341
        %v816 = vpop.f32.mrf.mxu0
        %v817 = vadd.f32 %v592, %v816
        %v818 = vpop.f32.mrf.mxu0
        %819 = vmatprep.mubr.f32.mxu0 0.0
        %820 = vmatmul.mubr.f32.gmra.mxu0 %v342
        %v821 = vpop.f32.mrf.mxu0
        %v822 = vadd.f32 %v597, %v821
        %v823 = vpop.f32.mrf.mxu0
        %824 = vmatprep.mubr.f32.mxu0 0.0
        %825 = vmatmul.mubr.f32.gmra.mxu0 %v343
        %v826 = vpop.f32.mrf.mxu0
        %v827 = vadd.f32 %v602, %v826
        %v828 = vpop.f32.mrf.mxu0
        %829 = vmatprep.mubr.f32.mxu0 0.0
        %830 = vmatmul.mubr.f32.gmra.mxu0 %v344
        %v831 = vpop.f32.mrf.mxu0
        %v832 = vadd.f32 %v607, %v831
        %v833 = vpop.f32.mrf.mxu0
        %834 = vmatprep.mubr.f32.mxu0 0.0
        %835 = vmatmul.mubr.f32.gmra.mxu0 %v345
        %v836 = vpop.f32.mrf.mxu0
        %v837 = vadd.f32 %v612, %v836
        %v838 = vpop.f32.mrf.mxu0
        %839 = vmatprep.mubr.f32.mxu0 0.0
        %840 = vmatmul.mubr.f32.gmra.mxu0 %v346
        %v841 = vpop.f32.mrf.mxu0
        %v842 = vadd.f32 %v617, %v841
        %v843 = vpop.f32.mrf.mxu0
        %844 = vmatprep.mubr.f32.mxu0 0.0
        %845 = vmatmul.mubr.f32.gmra.mxu0 %v347
        %v846 = vpop.f32.mrf.mxu0
        %v847 = vadd.f32 %v622, %v846
        %v848 = vpop.f32.mrf.mxu0
        %849 = vmatprep.mubr.f32.mxu0 0.0
        %850 = vmatmul.mubr.f32.gmra.mxu0 %v348
        %v851 = vpop.f32.mrf.mxu0
        %v852 = vadd.f32 %v627, %v851
        %v853 = vpop.f32.mrf.mxu0
        %854 = vmatprep.mubr.f32.mxu0 0.0
        %855 = vmatmul.mubr.f32.gmra.mxu0 %v349
        %v856 = vpop.f32.mrf.mxu0
        %v857 = vadd.f32 %v632, %v856
        %v858 = vpop.f32.mrf.mxu0
        %859 = vmatprep.mubr.f32.mxu0 0.0
        %860 = vmatmul.mubr.f32.gmra.mxu0 %v350
        %v861 = vpop.f32.mrf.mxu0
        %v862 = vadd.f32 %v637, %v861
        %v863 = vpop.f32.mrf.mxu0
        %864 = vdwg.mxu0
        %v865 = vld [vmem:[#allocation2 + $0x2] sm:$0xff]
        %v866 = vld [vmem:[#allocation2 + $0xa] sm:$0xff]
        %v867 = vld [vmem:[#allocation2 + $0x1a] sm:$0xff]
        %v868 = vld [vmem:[#allocation2 + $0x22] sm:$0xff]
        %v869 = vld [vmem:[#allocation2 + $0x32] sm:$0xff]
        %v870 = vld [vmem:[#allocation2 + $0x3a] sm:$0xff]
        %v871 = vld [vmem:[#allocation2 + $0x4a] sm:$0xff]
        %v872 = vld [vmem:[#allocation2 + $0x52] sm:$0xff]
        %v873 = vld [vmem:[#allocation2 + $0x62] sm:$0xff]
        %v874 = vld [vmem:[#allocation2 + $0x6a] sm:$0xff]
        %v875 = vld [vmem:[#allocation2 + $0x7a] sm:$0xff]
        %v876 = vld [vmem:[#allocation2 + $0x82] sm:$0xff]
        %v877 = vld [vmem:[#allocation2 + $0x92] sm:$0xff]
        %v878 = vld [vmem:[#allocation2 + $0x9a] sm:$0xff]
        %v879 = vld [vmem:[#allocation2 + $0xaa] sm:$0xff]
        %v880 = vld [vmem:[#allocation2 + $0xb2] sm:$0xff]
        %v881 = vld [vmem:[#allocation2 + $0xc2] sm:$0xff]
        %v882 = vld [vmem:[#allocation2 + $0xca] sm:$0xff]
        %v883 = vld [vmem:[#allocation2 + $0xda] sm:$0xff]
        %v884 = vld [vmem:[#allocation2 + $0xe2] sm:$0xff]
        %v885 = vld [vmem:[#allocation2 + $0xf2] sm:$0xff]
        %v886 = vld [vmem:[#allocation2 + $0xfa] sm:$0xff]
        %v887 = vld [vmem:[#allocation2 + $0x10a] sm:$0xff]
        %v888 = vld [vmem:[#allocation2 + $0x112] sm:$0xff]
        %v889 = vld [vmem:[#allocation2 + $0x122] sm:$0xff]
        %v890 = vld [vmem:[#allocation2 + $0x12a] sm:$0xff]
        %v891 = vld [vmem:[#allocation2 + $0x13a] sm:$0xff]
        %v892 = vld [vmem:[#allocation2 + $0x142] sm:$0xff]
        %v893 = vld [vmem:[#allocation2 + $0x152] sm:$0xff]
        %v894 = vld [vmem:[#allocation2 + $0x15a] sm:$0xff]
        %v895 = vld [vmem:[#allocation2 + $0x16a] sm:$0xff]
        %v896 = vld [vmem:[#allocation2 + $0x172] sm:$0xff]
        %v897 = vld [vmem:[#allocation6 + $0x100] sm:$0xff]
        %v898 = vld [vmem:[#allocation6 + $0x108] sm:$0xff]
        %v899 = vld [vmem:[#allocation6 + $0x110] sm:$0xff]
        %v900 = vld [vmem:[#allocation6 + $0x118] sm:$0xff]
        %v901 = vld [vmem:[#allocation6 + $0x120] sm:$0xff]
        %v902 = vld [vmem:[#allocation6 + $0x128] sm:$0xff]
        %v903 = vld [vmem:[#allocation6 + $0x130] sm:$0xff]
        %v904 = vld [vmem:[#allocation6 + $0x138] sm:$0xff]
        %v905 = vld [vmem:[#allocation6 + $0x140] sm:$0xff]
        %v906 = vld [vmem:[#allocation6 + $0x148] sm:$0xff]
        %v907 = vld [vmem:[#allocation6 + $0x150] sm:$0xff]
        %v908 = vld [vmem:[#allocation6 + $0x158] sm:$0xff]
        %v909 = vld [vmem:[#allocation6 + $0x160] sm:$0xff]
        %v910 = vld [vmem:[#allocation6 + $0x168] sm:$0xff]
        %v911 = vld [vmem:[#allocation6 + $0x170] sm:$0xff]
        %v912 = vld [vmem:[#allocation6 + $0x178] sm:$0xff]
        %913 = vmatprep.subr.mxu0 0.0
        %914 = vmatpush1.msra.mxu0 %v912
        %915 = vmatprep.subr.mxu0 0.0
        %916 = vmatpush1.msra.mxu0 %v911
        %917 = vmatprep.subr.mxu0 0.0
        %918 = vmatpush1.msra.mxu0 %v910
        %919 = vmatprep.subr.mxu0 0.0
        %920 = vmatpush1.msra.mxu0 %v909
        %921 = vmatprep.subr.mxu0 0.0
        %922 = vmatpush1.msra.mxu0 %v908
        %923 = vmatprep.subr.mxu0 0.0
        %924 = vmatpush1.msra.mxu0 %v907
        %925 = vmatprep.subr.mxu0 0.0
        %926 = vmatpush1.msra.mxu0 %v906
        %927 = vmatprep.subr.mxu0 0.0
        %928 = vmatpush1.msra.mxu0 %v905
        %929 = vmatprep.subr.mxu0 0.0
        %930 = vmatpush1.msra.mxu0 %v904
        %931 = vmatprep.subr.mxu0 0.0
        %932 = vmatpush1.msra.mxu0 %v903
        %933 = vmatprep.subr.mxu0 0.0
        %934 = vmatpush1.msra.mxu0 %v902
        %935 = vmatprep.subr.mxu0 0.0
        %936 = vmatpush1.msra.mxu0 %v901
        %937 = vmatprep.subr.mxu0 0.0
        %938 = vmatpush1.msra.mxu0 %v900
        %939 = vmatprep.subr.mxu0 0.0
        %940 = vmatpush1.msra.mxu0 %v899
        %941 = vmatprep.subr.mxu0 0.0
        %942 = vmatpush1.msra.mxu0 %v898
        %943 = vmatprep.subr.mxu0 0.0
        %944 = vmatpush1.msra.mxu0 %v897
        %945 = vmatprep.subr.mxu0 0.0
        %946 = vmatpush2.msra.mxu0 0.0
        %947 = vmatprep.subr.mxu0 0.0
        %948 = vmatpush2.msra.mxu0 0.0
        %949 = vmatprep.subr.mxu0 0.0
        %950 = vmatpush2.msra.mxu0 0.0
        %951 = vmatprep.subr.mxu0 0.0
        %952 = vmatpush2.msra.mxu0 0.0
        %953 = vmatprep.subr.mxu0 0.0
        %954 = vmatpush2.msra.mxu0 0.0
        %955 = vmatprep.subr.mxu0 0.0
        %956 = vmatpush2.msra.mxu0 0.0
        %957 = vmatprep.subr.mxu0 0.0
        %958 = vmatpush2.msra.mxu0 0.0
        %959 = vmatprep.subr.mxu0 0.0
        %960 = vmatpush2.msra.mxu0 0.0
        %961 = vmatprep.subr.mxu0 0.0
        %962 = vmatpush2.msra.mxu0 0.0
        %963 = vmatprep.subr.mxu0 0.0
        %964 = vmatpush2.msra.mxu0 0.0
        %965 = vmatprep.subr.mxu0 0.0
        %966 = vmatpush2.msra.mxu0 0.0
        %967 = vmatprep.subr.mxu0 0.0
        %968 = vmatpush2.msra.mxu0 0.0
        %969 = vmatprep.subr.mxu0 0.0
        %970 = vmatpush2.msra.mxu0 0.0
        %971 = vmatprep.subr.mxu0 0.0
        %972 = vmatpush2.msra.mxu0 0.0
        %973 = vmatprep.subr.mxu0 0.0
        %974 = vmatpush2.msra.mxu0 0.0
        %975 = vmatprep.subr.mxu0 0.0
        %976 = vmatpush2.msra.mxu0 0.0
        %977 = vmatprep.mubr.f32.mxu0 0.0
        %978 = vmatmul.mubr.f32.gmra.mxu0 %v865
        %v979 = vpop.f32.mrf.mxu0
        %v980 = vadd.f32 0.0, %v979
        %v981 = vpop.f32.mrf.mxu0
        %982 = vmatprep.mubr.f32.mxu0 0.0
        %983 = vmatmul.mubr.f32.gmra.mxu0 %v866
        %v984 = vpop.f32.mrf.mxu0
        %v985 = vadd.f32 0.0, %v984
        %v986 = vpop.f32.mrf.mxu0
        %987 = vmatprep.mubr.f32.mxu0 0.0
        %988 = vmatmul.mubr.f32.gmra.mxu0 %v867
        %v989 = vpop.f32.mrf.mxu0
        %v990 = vadd.f32 0.0, %v989
        %v991 = vpop.f32.mrf.mxu0
        %992 = vmatprep.mubr.f32.mxu0 0.0
        %993 = vmatmul.mubr.f32.gmra.mxu0 %v868
        %v994 = vpop.f32.mrf.mxu0
        %v995 = vadd.f32 0.0, %v994
        %v996 = vpop.f32.mrf.mxu0
        %997 = vmatprep.mubr.f32.mxu0 0.0
        %998 = vmatmul.mubr.f32.gmra.mxu0 %v869
        %v999 = vpop.f32.mrf.mxu0
        %v1000 = vadd.f32 0.0, %v999
        %v1001 = vpop.f32.mrf.mxu0
        %1002 = vmatprep.mubr.f32.mxu0 0.0
        %1003 = vmatmul.mubr.f32.gmra.mxu0 %v870
        %v1004 = vpop.f32.mrf.mxu0
        %v1005 = vadd.f32 0.0, %v1004
        %v1006 = vpop.f32.mrf.mxu0
        %1007 = vmatprep.mubr.f32.mxu0 0.0
        %1008 = vmatmul.mubr.f32.gmra.mxu0 %v871
        %v1009 = vpop.f32.mrf.mxu0
        %v1010 = vadd.f32 0.0, %v1009
        %v1011 = vpop.f32.mrf.mxu0
        %1012 = vmatprep.mubr.f32.mxu0 0.0
        %1013 = vmatmul.mubr.f32.gmra.mxu0 %v872
        %v1014 = vpop.f32.mrf.mxu0
        %v1015 = vadd.f32 0.0, %v1014
        %v1016 = vpop.f32.mrf.mxu0
        %1017 = vmatprep.mubr.f32.mxu0 0.0
        %1018 = vmatmul.mubr.f32.gmra.mxu0 %v873
        %v1019 = vpop.f32.mrf.mxu0
        %v1020 = vadd.f32 0.0, %v1019
        %v1021 = vpop.f32.mrf.mxu0
        %1022 = vmatprep.mubr.f32.mxu0 0.0
        %1023 = vmatmul.mubr.f32.gmra.mxu0 %v874
        %v1024 = vpop.f32.mrf.mxu0
        %v1025 = vadd.f32 0.0, %v1024
        %v1026 = vpop.f32.mrf.mxu0
        %1027 = vmatprep.mubr.f32.mxu0 0.0
        %1028 = vmatmul.mubr.f32.gmra.mxu0 %v875
        %v1029 = vpop.f32.mrf.mxu0
        %v1030 = vadd.f32 0.0, %v1029
        %v1031 = vpop.f32.mrf.mxu0
        %1032 = vmatprep.mubr.f32.mxu0 0.0
        %1033 = vmatmul.mubr.f32.gmra.mxu0 %v876
        %v1034 = vpop.f32.mrf.mxu0
        %v1035 = vadd.f32 0.0, %v1034
        %v1036 = vpop.f32.mrf.mxu0
        %1037 = vmatprep.mubr.f32.mxu0 0.0
        %1038 = vmatmul.mubr.f32.gmra.mxu0 %v877
        %v1039 = vpop.f32.mrf.mxu0
        %v1040 = vadd.f32 0.0, %v1039
        %v1041 = vpop.f32.mrf.mxu0
        %1042 = vmatprep.mubr.f32.mxu0 0.0
        %1043 = vmatmul.mubr.f32.gmra.mxu0 %v878
        %v1044 = vpop.f32.mrf.mxu0
        %v1045 = vadd.f32 0.0, %v1044
        %v1046 = vpop.f32.mrf.mxu0
        %1047 = vmatprep.mubr.f32.mxu0 0.0
        %1048 = vmatmul.mubr.f32.gmra.mxu0 %v879
        %v1049 = vpop.f32.mrf.mxu0
        %v1050 = vadd.f32 0.0, %v1049
        %v1051 = vpop.f32.mrf.mxu0
        %1052 = vmatprep.mubr.f32.mxu0 0.0
        %1053 = vmatmul.mubr.f32.gmra.mxu0 %v880
        %v1054 = vpop.f32.mrf.mxu0
        %v1055 = vadd.f32 0.0, %v1054
        %v1056 = vpop.f32.mrf.mxu0
        %1057 = vmatprep.mubr.f32.mxu0 0.0
        %1058 = vmatmul.mubr.f32.gmra.mxu0 %v881
        %v1059 = vpop.f32.mrf.mxu0
        %v1060 = vadd.f32 0.0, %v1059
        %v1061 = vpop.f32.mrf.mxu0
        %1062 = vmatprep.mubr.f32.mxu0 0.0
        %1063 = vmatmul.mubr.f32.gmra.mxu0 %v882
        %v1064 = vpop.f32.mrf.mxu0
        %v1065 = vadd.f32 0.0, %v1064
        %v1066 = vpop.f32.mrf.mxu0
        %1067 = vmatprep.mubr.f32.mxu0 0.0
        %1068 = vmatmul.mubr.f32.gmra.mxu0 %v883
        %v1069 = vpop.f32.mrf.mxu0
        %v1070 = vadd.f32 0.0, %v1069
        %v1071 = vpop.f32.mrf.mxu0
        %1072 = vmatprep.mubr.f32.mxu0 0.0
        %1073 = vmatmul.mubr.f32.gmra.mxu0 %v884
        %v1074 = vpop.f32.mrf.mxu0
        %v1075 = vadd.f32 0.0, %v1074
        %v1076 = vpop.f32.mrf.mxu0
        %1077 = vmatprep.mubr.f32.mxu0 0.0
        %1078 = vmatmul.mubr.f32.gmra.mxu0 %v885
        %v1079 = vpop.f32.mrf.mxu0
        %v1080 = vadd.f32 0.0, %v1079
        %v1081 = vpop.f32.mrf.mxu0
        %1082 = vmatprep.mubr.f32.mxu0 0.0
        %1083 = vmatmul.mubr.f32.gmra.mxu0 %v886
        %v1084 = vpop.f32.mrf.mxu0
        %v1085 = vadd.f32 0.0, %v1084
        %v1086 = vpop.f32.mrf.mxu0
        %1087 = vmatprep.mubr.f32.mxu0 0.0
        %1088 = vmatmul.mubr.f32.gmra.mxu0 %v887
        %v1089 = vpop.f32.mrf.mxu0
        %v1090 = vadd.f32 0.0, %v1089
        %v1091 = vpop.f32.mrf.mxu0
        %1092 = vmatprep.mubr.f32.mxu0 0.0
        %1093 = vmatmul.mubr.f32.gmra.mxu0 %v888
        %v1094 = vpop.f32.mrf.mxu0
        %v1095 = vadd.f32 0.0, %v1094
        %v1096 = vpop.f32.mrf.mxu0
        %1097 = vmatprep.mubr.f32.mxu0 0.0
        %1098 = vmatmul.mubr.f32.gmra.mxu0 %v889
        %v1099 = vpop.f32.mrf.mxu0
        %v1100 = vadd.f32 0.0, %v1099
        %v1101 = vpop.f32.mrf.mxu0
        %1102 = vmatprep.mubr.f32.mxu0 0.0
        %1103 = vmatmul.mubr.f32.gmra.mxu0 %v890
        %v1104 = vpop.f32.mrf.mxu0
        %v1105 = vadd.f32 0.0, %v1104
        %v1106 = vpop.f32.mrf.mxu0
        %1107 = vmatprep.mubr.f32.mxu0 0.0
        %1108 = vmatmul.mubr.f32.gmra.mxu0 %v891
        %v1109 = vpop.f32.mrf.mxu0
        %v1110 = vadd.f32 0.0, %v1109
        %v1111 = vpop.f32.mrf.mxu0
        %1112 = vmatprep.mubr.f32.mxu0 0.0
        %1113 = vmatmul.mubr.f32.gmra.mxu0 %v892
        %v1114 = vpop.f32.mrf.mxu0
        %v1115 = vadd.f32 0.0, %v1114
        %v1116 = vpop.f32.mrf.mxu0
        %1117 = vmatprep.mubr.f32.mxu0 0.0
        %1118 = vmatmul.mubr.f32.gmra.mxu0 %v893
        %v1119 = vpop.f32.mrf.mxu0
        %v1120 = vadd.f32 0.0, %v1119
        %v1121 = vpop.f32.mrf.mxu0
        %1122 = vmatprep.mubr.f32.mxu0 0.0
        %1123 = vmatmul.mubr.f32.gmra.mxu0 %v894
        %v1124 = vpop.f32.mrf.mxu0
        %v1125 = vadd.f32 0.0, %v1124
        %v1126 = vpop.f32.mrf.mxu0
        %1127 = vmatprep.mubr.f32.mxu0 0.0
        %1128 = vmatmul.mubr.f32.gmra.mxu0 %v895
        %v1129 = vpop.f32.mrf.mxu0
        %v1130 = vadd.f32 0.0, %v1129
        %v1131 = vpop.f32.mrf.mxu0
        %1132 = vmatprep.mubr.f32.mxu0 0.0
        %1133 = vmatmul.mubr.f32.gmra.mxu0 %v896
        %v1134 = vpop.f32.mrf.mxu0
        %v1135 = vadd.f32 0.0, %v1134
        %v1136 = vpop.f32.mrf.mxu0
        %1137 = vdwg.mxu0
        %v1138 = vadd.f32 %v707, %v980
        %v1139 = vadd.f32 %v712, %v985
        %v1140 = vadd.f32 %v717, %v990
        %v1141 = vadd.f32 %v722, %v995
        %v1142 = vadd.f32 %v727, %v1000
        %v1143 = vadd.f32 %v732, %v1005
        %v1144 = vadd.f32 %v737, %v1010
        %v1145 = vadd.f32 %v742, %v1015
        %v1146 = vadd.f32 %v747, %v1020
        %v1147 = vadd.f32 %v752, %v1025
        %v1148 = vadd.f32 %v757, %v1030
        %v1149 = vadd.f32 %v762, %v1035
        %v1150 = vadd.f32 %v767, %v1040
        %v1151 = vadd.f32 %v772, %v1045
        %v1152 = vadd.f32 %v777, %v1050
        %v1153 = vadd.f32 %v782, %v1055
        %v1154 = vadd.f32 %v787, %v1060
        %v1155 = vadd.f32 %v792, %v1065
        %v1156 = vadd.f32 %v797, %v1070
        %v1157 = vadd.f32 %v802, %v1075
        %v1158 = vadd.f32 %v807, %v1080
        %v1159 = vadd.f32 %v812, %v1085
        %v1160 = vadd.f32 %v817, %v1090
        %v1161 = vadd.f32 %v822, %v1095
        %v1162 = vadd.f32 %v827, %v1100
        %v1163 = vadd.f32 %v832, %v1105
        %v1164 = vadd.f32 %v837, %v1110
        %v1165 = vadd.f32 %v842, %v1115
        %v1166 = vadd.f32 %v847, %v1120
        %v1167 = vadd.f32 %v852, %v1125
        %v1168 = vadd.f32 %v857, %v1130
        %v1169 = vadd.f32 %v862, %v1135
        %v1170 = vld [vmem:[%s247] sm:$0xff]
        %v1171 = vld [vmem:[%s247 + $0x8] sm:$0xff]
        %v1172 = vld [vmem:[%s247 + $0x18] sm:$0xff]
        %v1173 = vld [vmem:[%s247 + $0x20] sm:$0xff]
        %v1174 = vld [vmem:[%s247 + $0x30] sm:$0xff]
        %v1175 = vld [vmem:[%s247 + $0x38] sm:$0xff]
        %v1176 = vld [vmem:[%s247 + $0x48] sm:$0xff]
        %v1177 = vld [vmem:[%s247 + $0x50] sm:$0xff]
        %v1178 = vld [vmem:[%s247 + $0x60] sm:$0xff]
        %v1179 = vld [vmem:[%s247 + $0x68] sm:$0xff]
        %v1180 = vld [vmem:[%s247 + $0x78] sm:$0xff]
        %v1181 = vld [vmem:[%s247 + $0x80] sm:$0xff]
        %v1182 = vld [vmem:[%s247 + $0x90] sm:$0xff]
        %v1183 = vld [vmem:[%s247 + $0x98] sm:$0xff]
        %v1184 = vld [vmem:[%s247 + $0xa8] sm:$0xff]
        %v1185 = vld [vmem:[%s247 + $0xb0] sm:$0xff]
        %v1186 = vld [vmem:[%s247 + $0xc0] sm:$0xff]
        %v1187 = vld [vmem:[%s247 + $0xc8] sm:$0xff]
        %v1188 = vld [vmem:[%s247 + $0xd8] sm:$0xff]
        %v1189 = vld [vmem:[%s247 + $0xe0] sm:$0xff]
        %v1190 = vld [vmem:[%s247 + $0xf0] sm:$0xff]
        %v1191 = vld [vmem:[%s247 + $0xf8] sm:$0xff]
        %v1192 = vld [vmem:[%s247 + $0x108] sm:$0xff]
        %v1193 = vld [vmem:[%s247 + $0x110] sm:$0xff]
        %v1194 = vld [vmem:[%s247 + $0x120] sm:$0xff]
        %v1195 = vld [vmem:[%s247 + $0x128] sm:$0xff]
        %v1196 = vld [vmem:[%s247 + $0x138] sm:$0xff]
        %v1197 = vld [vmem:[%s247 + $0x140] sm:$0xff]
        %v1198 = vld [vmem:[%s247 + $0x150] sm:$0xff]
        %v1199 = vld [vmem:[%s247 + $0x158] sm:$0xff]
        %v1200 = vld [vmem:[%s247 + $0x168] sm:$0xff]
        %v1201 = vld [vmem:[%s247 + $0x170] sm:$0xff]
        %v1202 = vld [vmem:[#allocation6 + $0x180] sm:$0xff]
        %v1203 = vld [vmem:[#allocation6 + $0x188] sm:$0xff]
        %v1204 = vld [vmem:[#allocation6 + $0x190] sm:$0xff]
        %v1205 = vld [vmem:[#allocation6 + $0x198] sm:$0xff]
        %v1206 = vld [vmem:[#allocation6 + $0x1a0] sm:$0xff]
        %v1207 = vld [vmem:[#allocation6 + $0x1a8] sm:$0xff]
        %v1208 = vld [vmem:[#allocation6 + $0x1b0] sm:$0xff]
        %v1209 = vld [vmem:[#allocation6 + $0x1b8] sm:$0xff]
        %v1210 = vld [vmem:[#allocation6 + $0x1c0] sm:$0xff]
        %v1211 = vld [vmem:[#allocation6 + $0x1c8] sm:$0xff]
        %v1212 = vld [vmem:[#allocation6 + $0x1d0] sm:$0xff]
        %v1213 = vld [vmem:[#allocation6 + $0x1d8] sm:$0xff]
        %v1214 = vld [vmem:[#allocation6 + $0x1e0] sm:$0xff]
        %v1215 = vld [vmem:[#allocation6 + $0x1e8] sm:$0xff]
        %v1216 = vld [vmem:[#allocation6 + $0x1f0] sm:$0xff]
        %v1217 = vld [vmem:[#allocation6 + $0x1f8] sm:$0xff]
        %1218 = vmatprep.subr.mxu0 0.0
        %1219 = vmatpush1.msra.mxu0 %v1217
        %1220 = vmatprep.subr.mxu0 0.0
        %1221 = vmatpush1.msra.mxu0 %v1216
        %1222 = vmatprep.subr.mxu0 0.0
        %1223 = vmatpush1.msra.mxu0 %v1215
        %1224 = vmatprep.subr.mxu0 0.0
        %1225 = vmatpush1.msra.mxu0 %v1214
        %1226 = vmatprep.subr.mxu0 0.0
        %1227 = vmatpush1.msra.mxu0 %v1213
        %1228 = vmatprep.subr.mxu0 0.0
        %1229 = vmatpush1.msra.mxu0 %v1212
        %1230 = vmatprep.subr.mxu0 0.0
        %1231 = vmatpush1.msra.mxu0 %v1211
        %1232 = vmatprep.subr.mxu0 0.0
        %1233 = vmatpush1.msra.mxu0 %v1210
        %1234 = vmatprep.subr.mxu0 0.0
        %1235 = vmatpush1.msra.mxu0 %v1209
        %1236 = vmatprep.subr.mxu0 0.0
        %1237 = vmatpush1.msra.mxu0 %v1208
        %1238 = vmatprep.subr.mxu0 0.0
        %1239 = vmatpush1.msra.mxu0 %v1207
        %1240 = vmatprep.subr.mxu0 0.0
        %1241 = vmatpush1.msra.mxu0 %v1206
        %1242 = vmatprep.subr.mxu0 0.0
        %1243 = vmatpush1.msra.mxu0 %v1205
        %1244 = vmatprep.subr.mxu0 0.0
        %1245 = vmatpush1.msra.mxu0 %v1204
        %1246 = vmatprep.subr.mxu0 0.0
        %1247 = vmatpush1.msra.mxu0 %v1203
        %1248 = vmatprep.subr.mxu0 0.0
        %1249 = vmatpush1.msra.mxu0 %v1202
        %1250 = vmatprep.subr.mxu0 0.0
        %1251 = vmatpush2.msra.mxu0 0.0
        %1252 = vmatprep.subr.mxu0 0.0
        %1253 = vmatpush2.msra.mxu0 0.0
        %1254 = vmatprep.subr.mxu0 0.0
        %1255 = vmatpush2.msra.mxu0 0.0
        %1256 = vmatprep.subr.mxu0 0.0
        %1257 = vmatpush2.msra.mxu0 0.0
        %1258 = vmatprep.subr.mxu0 0.0
        %1259 = vmatpush2.msra.mxu0 0.0
        %1260 = vmatprep.subr.mxu0 0.0
        %1261 = vmatpush2.msra.mxu0 0.0
        %1262 = vmatprep.subr.mxu0 0.0
        %1263 = vmatpush2.msra.mxu0 0.0
        %1264 = vmatprep.subr.mxu0 0.0
        %1265 = vmatpush2.msra.mxu0 0.0
        %1266 = vmatprep.subr.mxu0 0.0
        %1267 = vmatpush2.msra.mxu0 0.0
        %1268 = vmatprep.subr.mxu0 0.0
        %1269 = vmatpush2.msra.mxu0 0.0
        %1270 = vmatprep.subr.mxu0 0.0
        %1271 = vmatpush2.msra.mxu0 0.0
        %1272 = vmatprep.subr.mxu0 0.0
        %1273 = vmatpush2.msra.mxu0 0.0
        %1274 = vmatprep.subr.mxu0 0.0
        %1275 = vmatpush2.msra.mxu0 0.0
        %1276 = vmatprep.subr.mxu0 0.0
        %1277 = vmatpush2.msra.mxu0 0.0
        %1278 = vmatprep.subr.mxu0 0.0
        %1279 = vmatpush2.msra.mxu0 0.0
        %1280 = vmatprep.subr.mxu0 0.0
        %1281 = vmatpush2.msra.mxu0 0.0
        %1282 = vmatprep.mubr.f32.mxu0 0.0
        %1283 = vmatmul.mubr.f32.gmra.mxu0 %v1170
        %v1284 = vpop.f32.mrf.mxu0
        %v1285 = vadd.f32 0.0, %v1284
        %v1286 = vpop.f32.mrf.mxu0
        %1287 = vmatprep.mubr.f32.mxu0 0.0
        %1288 = vmatmul.mubr.f32.gmra.mxu0 %v1171
        %v1289 = vpop.f32.mrf.mxu0
        %v1290 = vadd.f32 0.0, %v1289
        %v1291 = vpop.f32.mrf.mxu0
        %1292 = vmatprep.mubr.f32.mxu0 0.0
        %1293 = vmatmul.mubr.f32.gmra.mxu0 %v1172
        %v1294 = vpop.f32.mrf.mxu0
        %v1295 = vadd.f32 0.0, %v1294
        %v1296 = vpop.f32.mrf.mxu0
        %1297 = vmatprep.mubr.f32.mxu0 0.0
        %1298 = vmatmul.mubr.f32.gmra.mxu0 %v1173
        %v1299 = vpop.f32.mrf.mxu0
        %v1300 = vadd.f32 0.0, %v1299
        %v1301 = vpop.f32.mrf.mxu0
        %1302 = vmatprep.mubr.f32.mxu0 0.0
        %1303 = vmatmul.mubr.f32.gmra.mxu0 %v1174
        %v1304 = vpop.f32.mrf.mxu0
        %v1305 = vadd.f32 0.0, %v1304
        %v1306 = vpop.f32.mrf.mxu0
        %1307 = vmatprep.mubr.f32.mxu0 0.0
        %1308 = vmatmul.mubr.f32.gmra.mxu0 %v1175
        %v1309 = vpop.f32.mrf.mxu0
        %v1310 = vadd.f32 0.0, %v1309
        %v1311 = vpop.f32.mrf.mxu0
        %1312 = vmatprep.mubr.f32.mxu0 0.0
        %1313 = vmatmul.mubr.f32.gmra.mxu0 %v1176
        %v1314 = vpop.f32.mrf.mxu0
        %v1315 = vadd.f32 0.0, %v1314
        %v1316 = vpop.f32.mrf.mxu0
        %1317 = vmatprep.mubr.f32.mxu0 0.0
        %1318 = vmatmul.mubr.f32.gmra.mxu0 %v1177
        %v1319 = vpop.f32.mrf.mxu0
        %v1320 = vadd.f32 0.0, %v1319
        %v1321 = vpop.f32.mrf.mxu0
        %1322 = vmatprep.mubr.f32.mxu0 0.0
        %1323 = vmatmul.mubr.f32.gmra.mxu0 %v1178
        %v1324 = vpop.f32.mrf.mxu0
        %v1325 = vadd.f32 0.0, %v1324
        %v1326 = vpop.f32.mrf.mxu0
        %1327 = vmatprep.mubr.f32.mxu0 0.0
        %1328 = vmatmul.mubr.f32.gmra.mxu0 %v1179
        %v1329 = vpop.f32.mrf.mxu0
        %v1330 = vadd.f32 0.0, %v1329
        %v1331 = vpop.f32.mrf.mxu0
        %1332 = vmatprep.mubr.f32.mxu0 0.0
        %1333 = vmatmul.mubr.f32.gmra.mxu0 %v1180
        %v1334 = vpop.f32.mrf.mxu0
        %v1335 = vadd.f32 0.0, %v1334
        %v1336 = vpop.f32.mrf.mxu0
        %1337 = vmatprep.mubr.f32.mxu0 0.0
        %1338 = vmatmul.mubr.f32.gmra.mxu0 %v1181
        %v1339 = vpop.f32.mrf.mxu0
        %v1340 = vadd.f32 0.0, %v1339
        %v1341 = vpop.f32.mrf.mxu0
        %1342 = vmatprep.mubr.f32.mxu0 0.0
        %1343 = vmatmul.mubr.f32.gmra.mxu0 %v1182
        %v1344 = vpop.f32.mrf.mxu0
        %v1345 = vadd.f32 0.0, %v1344
        %v1346 = vpop.f32.mrf.mxu0
        %1347 = vmatprep.mubr.f32.mxu0 0.0
        %1348 = vmatmul.mubr.f32.gmra.mxu0 %v1183
        %v1349 = vpop.f32.mrf.mxu0
        %v1350 = vadd.f32 0.0, %v1349
        %v1351 = vpop.f32.mrf.mxu0
        %1352 = vmatprep.mubr.f32.mxu0 0.0
        %1353 = vmatmul.mubr.f32.gmra.mxu0 %v1184
        %v1354 = vpop.f32.mrf.mxu0
        %v1355 = vadd.f32 0.0, %v1354
        %v1356 = vpop.f32.mrf.mxu0
        %1357 = vmatprep.mubr.f32.mxu0 0.0
        %1358 = vmatmul.mubr.f32.gmra.mxu0 %v1185
        %v1359 = vpop.f32.mrf.mxu0
        %v1360 = vadd.f32 0.0, %v1359
        %v1361 = vpop.f32.mrf.mxu0
        %1362 = vmatprep.mubr.f32.mxu0 0.0
        %1363 = vmatmul.mubr.f32.gmra.mxu0 %v1186
        %v1364 = vpop.f32.mrf.mxu0
        %v1365 = vadd.f32 0.0, %v1364
        %v1366 = vpop.f32.mrf.mxu0
        %1367 = vmatprep.mubr.f32.mxu0 0.0
        %1368 = vmatmul.mubr.f32.gmra.mxu0 %v1187
        %v1369 = vpop.f32.mrf.mxu0
        %v1370 = vadd.f32 0.0, %v1369
        %v1371 = vpop.f32.mrf.mxu0
        %1372 = vmatprep.mubr.f32.mxu0 0.0
        %1373 = vmatmul.mubr.f32.gmra.mxu0 %v1188
        %v1374 = vpop.f32.mrf.mxu0
        %v1375 = vadd.f32 0.0, %v1374
        %v1376 = vpop.f32.mrf.mxu0
        %1377 = vmatprep.mubr.f32.mxu0 0.0
        %1378 = vmatmul.mubr.f32.gmra.mxu0 %v1189
        %v1379 = vpop.f32.mrf.mxu0
        %v1380 = vadd.f32 0.0, %v1379
        %v1381 = vpop.f32.mrf.mxu0
        %1382 = vmatprep.mubr.f32.mxu0 0.0
        %1383 = vmatmul.mubr.f32.gmra.mxu0 %v1190
        %v1384 = vpop.f32.mrf.mxu0
        %v1385 = vadd.f32 0.0, %v1384
        %v1386 = vpop.f32.mrf.mxu0
        %1387 = vmatprep.mubr.f32.mxu0 0.0
        %1388 = vmatmul.mubr.f32.gmra.mxu0 %v1191
        %v1389 = vpop.f32.mrf.mxu0
        %v1390 = vadd.f32 0.0, %v1389
        %v1391 = vpop.f32.mrf.mxu0
        %1392 = vmatprep.mubr.f32.mxu0 0.0
        %1393 = vmatmul.mubr.f32.gmra.mxu0 %v1192
        %v1394 = vpop.f32.mrf.mxu0
        %v1395 = vadd.f32 0.0, %v1394
        %v1396 = vpop.f32.mrf.mxu0
        %1397 = vmatprep.mubr.f32.mxu0 0.0
        %1398 = vmatmul.mubr.f32.gmra.mxu0 %v1193
        %v1399 = vpop.f32.mrf.mxu0
        %v1400 = vadd.f32 0.0, %v1399
        %v1401 = vpop.f32.mrf.mxu0
        %1402 = vmatprep.mubr.f32.mxu0 0.0
        %1403 = vmatmul.mubr.f32.gmra.mxu0 %v1194
        %v1404 = vpop.f32.mrf.mxu0
        %v1405 = vadd.f32 0.0, %v1404
        %v1406 = vpop.f32.mrf.mxu0
        %1407 = vmatprep.mubr.f32.mxu0 0.0
        %1408 = vmatmul.mubr.f32.gmra.mxu0 %v1195
        %v1409 = vpop.f32.mrf.mxu0
        %v1410 = vadd.f32 0.0, %v1409
        %v1411 = vpop.f32.mrf.mxu0
        %1412 = vmatprep.mubr.f32.mxu0 0.0
        %1413 = vmatmul.mubr.f32.gmra.mxu0 %v1196
        %v1414 = vpop.f32.mrf.mxu0
        %v1415 = vadd.f32 0.0, %v1414
        %v1416 = vpop.f32.mrf.mxu0
        %1417 = vmatprep.mubr.f32.mxu0 0.0
        %1418 = vmatmul.mubr.f32.gmra.mxu0 %v1197
        %v1419 = vpop.f32.mrf.mxu0
        %v1420 = vadd.f32 0.0, %v1419
        %v1421 = vpop.f32.mrf.mxu0
        %1422 = vmatprep.mubr.f32.mxu0 0.0
        %1423 = vmatmul.mubr.f32.gmra.mxu0 %v1198
        %v1424 = vpop.f32.mrf.mxu0
        %v1425 = vadd.f32 0.0, %v1424
        %v1426 = vpop.f32.mrf.mxu0
        %1427 = vmatprep.mubr.f32.mxu0 0.0
        %1428 = vmatmul.mubr.f32.gmra.mxu0 %v1199
        %v1429 = vpop.f32.mrf.mxu0
        %v1430 = vadd.f32 0.0, %v1429
        %v1431 = vpop.f32.mrf.mxu0
        %1432 = vmatprep.mubr.f32.mxu0 0.0
        %1433 = vmatmul.mubr.f32.gmra.mxu0 %v1200
        %v1434 = vpop.f32.mrf.mxu0
        %v1435 = vadd.f32 0.0, %v1434
        %v1436 = vpop.f32.mrf.mxu0
        %1437 = vmatprep.mubr.f32.mxu0 0.0
        %1438 = vmatmul.mubr.f32.gmra.mxu0 %v1201
        %v1439 = vpop.f32.mrf.mxu0
        %v1440 = vadd.f32 0.0, %v1439
        %v1441 = vpop.f32.mrf.mxu0
        %1442 = vdwg.mxu0
        %v1443 = vadd.f32 %v1138, %v1285
        %v1444 = vadd.f32 %v1139, %v1290
        %v1445 = vadd.f32 %v1140, %v1295
        %v1446 = vadd.f32 %v1141, %v1300
        %v1447 = vadd.f32 %v1142, %v1305
        %v1448 = vadd.f32 %v1143, %v1310
        %v1449 = vadd.f32 %v1144, %v1315
        %v1450 = vadd.f32 %v1145, %v1320
        %v1451 = vadd.f32 %v1146, %v1325
        %v1452 = vadd.f32 %v1147, %v1330
        %v1453 = vadd.f32 %v1148, %v1335
        %v1454 = vadd.f32 %v1149, %v1340
        %v1455 = vadd.f32 %v1150, %v1345
        %v1456 = vadd.f32 %v1151, %v1350
        %v1457 = vadd.f32 %v1152, %v1355
        %v1458 = vadd.f32 %v1153, %v1360
        %v1459 = vadd.f32 %v1154, %v1365
        %v1460 = vadd.f32 %v1155, %v1370
        %v1461 = vadd.f32 %v1156, %v1375
        %v1462 = vadd.f32 %v1157, %v1380
        %v1463 = vadd.f32 %v1158, %v1385
        %v1464 = vadd.f32 %v1159, %v1390
        %v1465 = vadd.f32 %v1160, %v1395
        %v1466 = vadd.f32 %v1161, %v1400
        %v1467 = vadd.f32 %v1162, %v1405
        %v1468 = vadd.f32 %v1163, %v1410
        %v1469 = vadd.f32 %v1164, %v1415
        %v1470 = vadd.f32 %v1165, %v1420
        %v1471 = vadd.f32 %v1166, %v1425
        %v1472 = vadd.f32 %v1167, %v1430
        %v1473 = vadd.f32 %v1168, %v1435
        %v1474 = vadd.f32 %v1169, %v1440
        %v1475 = vld [vmem:[%s247 + $0x1] sm:$0xff]
        %v1476 = vld [vmem:[%s247 + $0x9] sm:$0xff]
        %v1477 = vld [vmem:[%s247 + $0x19] sm:$0xff]
        %v1478 = vld [vmem:[%s247 + $0x21] sm:$0xff]
        %v1479 = vld [vmem:[%s247 + $0x31] sm:$0xff]
        %v1480 = vld [vmem:[%s247 + $0x39] sm:$0xff]
        %v1481 = vld [vmem:[%s247 + $0x49] sm:$0xff]
        %v1482 = vld [vmem:[%s247 + $0x51] sm:$0xff]
        %v1483 = vld [vmem:[%s247 + $0x61] sm:$0xff]
        %v1484 = vld [vmem:[%s247 + $0x69] sm:$0xff]
        %v1485 = vld [vmem:[%s247 + $0x79] sm:$0xff]
        %v1486 = vld [vmem:[%s247 + $0x81] sm:$0xff]
        %v1487 = vld [vmem:[%s247 + $0x91] sm:$0xff]
        %v1488 = vld [vmem:[%s247 + $0x99] sm:$0xff]
        %v1489 = vld [vmem:[%s247 + $0xa9] sm:$0xff]
        %v1490 = vld [vmem:[%s247 + $0xb1] sm:$0xff]
        %v1491 = vld [vmem:[%s247 + $0xc1] sm:$0xff]
        %v1492 = vld [vmem:[%s247 + $0xc9] sm:$0xff]
        %v1493 = vld [vmem:[%s247 + $0xd9] sm:$0xff]
        %v1494 = vld [vmem:[%s247 + $0xe1] sm:$0xff]
        %v1495 = vld [vmem:[%s247 + $0xf1] sm:$0xff]
        %v1496 = vld [vmem:[%s247 + $0xf9] sm:$0xff]
        %v1497 = vld [vmem:[%s247 + $0x109] sm:$0xff]
        %v1498 = vld [vmem:[%s247 + $0x111] sm:$0xff]
        %v1499 = vld [vmem:[%s247 + $0x121] sm:$0xff]
        %v1500 = vld [vmem:[%s247 + $0x129] sm:$0xff]
        %v1501 = vld [vmem:[%s247 + $0x139] sm:$0xff]
        %v1502 = vld [vmem:[%s247 + $0x141] sm:$0xff]
        %v1503 = vld [vmem:[%s247 + $0x151] sm:$0xff]
        %v1504 = vld [vmem:[%s247 + $0x159] sm:$0xff]
        %v1505 = vld [vmem:[%s247 + $0x169] sm:$0xff]
        %v1506 = vld [vmem:[%s247 + $0x171] sm:$0xff]
        %v1507 = vld [vmem:[#allocation6 + $0x200] sm:$0xff]
        %v1508 = vld [vmem:[#allocation6 + $0x208] sm:$0xff]
        %v1509 = vld [vmem:[#allocation6 + $0x210] sm:$0xff]
        %v1510 = vld [vmem:[#allocation6 + $0x218] sm:$0xff]
        %v1511 = vld [vmem:[#allocation6 + $0x220] sm:$0xff]
        %v1512 = vld [vmem:[#allocation6 + $0x228] sm:$0xff]
        %v1513 = vld [vmem:[#allocation6 + $0x230] sm:$0xff]
        %v1514 = vld [vmem:[#allocation6 + $0x238] sm:$0xff]
        %v1515 = vld [vmem:[#allocation6 + $0x240] sm:$0xff]
        %v1516 = vld [vmem:[#allocation6 + $0x248] sm:$0xff]
        %v1517 = vld [vmem:[#allocation6 + $0x250] sm:$0xff]
        %v1518 = vld [vmem:[#allocation6 + $0x258] sm:$0xff]
        %v1519 = vld [vmem:[#allocation6 + $0x260] sm:$0xff]
        %v1520 = vld [vmem:[#allocation6 + $0x268] sm:$0xff]
        %v1521 = vld [vmem:[#allocation6 + $0x270] sm:$0xff]
        %v1522 = vld [vmem:[#allocation6 + $0x278] sm:$0xff]
        %1523 = vmatprep.subr.mxu0 0.0
        %1524 = vmatpush1.msra.mxu0 %v1522
        %1525 = vmatprep.subr.mxu0 0.0
        %1526 = vmatpush1.msra.mxu0 %v1521
        %1527 = vmatprep.subr.mxu0 0.0
        %1528 = vmatpush1.msra.mxu0 %v1520
        %1529 = vmatprep.subr.mxu0 0.0
        %1530 = vmatpush1.msra.mxu0 %v1519
        %1531 = vmatprep.subr.mxu0 0.0
        %1532 = vmatpush1.msra.mxu0 %v1518
        %1533 = vmatprep.subr.mxu0 0.0
        %1534 = vmatpush1.msra.mxu0 %v1517
        %1535 = vmatprep.subr.mxu0 0.0
        %1536 = vmatpush1.msra.mxu0 %v1516
        %1537 = vmatprep.subr.mxu0 0.0
        %1538 = vmatpush1.msra.mxu0 %v1515
        %1539 = vmatprep.subr.mxu0 0.0
        %1540 = vmatpush1.msra.mxu0 %v1514
        %1541 = vmatprep.subr.mxu0 0.0
        %1542 = vmatpush1.msra.mxu0 %v1513
        %1543 = vmatprep.subr.mxu0 0.0
        %1544 = vmatpush1.msra.mxu0 %v1512
        %1545 = vmatprep.subr.mxu0 0.0
        %1546 = vmatpush1.msra.mxu0 %v1511
        %1547 = vmatprep.subr.mxu0 0.0
        %1548 = vmatpush1.msra.mxu0 %v1510
        %1549 = vmatprep.subr.mxu0 0.0
        %1550 = vmatpush1.msra.mxu0 %v1509
        %1551 = vmatprep.subr.mxu0 0.0
        %1552 = vmatpush1.msra.mxu0 %v1508
        %1553 = vmatprep.subr.mxu0 0.0
        %1554 = vmatpush1.msra.mxu0 %v1507
        %1555 = vmatprep.subr.mxu0 0.0
        %1556 = vmatpush2.msra.mxu0 0.0
        %1557 = vmatprep.subr.mxu0 0.0
        %1558 = vmatpush2.msra.mxu0 0.0
        %1559 = vmatprep.subr.mxu0 0.0
        %1560 = vmatpush2.msra.mxu0 0.0
        %1561 = vmatprep.subr.mxu0 0.0
        %1562 = vmatpush2.msra.mxu0 0.0
        %1563 = vmatprep.subr.mxu0 0.0
        %1564 = vmatpush2.msra.mxu0 0.0
        %1565 = vmatprep.subr.mxu0 0.0
        %1566 = vmatpush2.msra.mxu0 0.0
        %1567 = vmatprep.subr.mxu0 0.0
        %1568 = vmatpush2.msra.mxu0 0.0
        %1569 = vmatprep.subr.mxu0 0.0
        %1570 = vmatpush2.msra.mxu0 0.0
        %1571 = vmatprep.subr.mxu0 0.0
        %1572 = vmatpush2.msra.mxu0 0.0
        %1573 = vmatprep.subr.mxu0 0.0
        %1574 = vmatpush2.msra.mxu0 0.0
        %1575 = vmatprep.subr.mxu0 0.0
        %1576 = vmatpush2.msra.mxu0 0.0
        %1577 = vmatprep.subr.mxu0 0.0
        %1578 = vmatpush2.msra.mxu0 0.0
        %1579 = vmatprep.subr.mxu0 0.0
        %1580 = vmatpush2.msra.mxu0 0.0
        %1581 = vmatprep.subr.mxu0 0.0
        %1582 = vmatpush2.msra.mxu0 0.0
        %1583 = vmatprep.subr.mxu0 0.0
        %1584 = vmatpush2.msra.mxu0 0.0
        %1585 = vmatprep.subr.mxu0 0.0
        %1586 = vmatpush2.msra.mxu0 0.0
        %1587 = vmatprep.mubr.f32.mxu0 0.0
        %1588 = vmatmul.mubr.f32.gmra.mxu0 %v1475
        %v1589 = vpop.f32.mrf.mxu0
        %v1590 = vadd.f32 0.0, %v1589
        %v1591 = vpop.f32.mrf.mxu0
        %1592 = vmatprep.mubr.f32.mxu0 0.0
        %1593 = vmatmul.mubr.f32.gmra.mxu0 %v1476
        %v1594 = vpop.f32.mrf.mxu0
        %v1595 = vadd.f32 0.0, %v1594
        %v1596 = vpop.f32.mrf.mxu0
        %1597 = vmatprep.mubr.f32.mxu0 0.0
        %1598 = vmatmul.mubr.f32.gmra.mxu0 %v1477
        %v1599 = vpop.f32.mrf.mxu0
        %v1600 = vadd.f32 0.0, %v1599
        %v1601 = vpop.f32.mrf.mxu0
        %1602 = vmatprep.mubr.f32.mxu0 0.0
        %1603 = vmatmul.mubr.f32.gmra.mxu0 %v1478
        %v1604 = vpop.f32.mrf.mxu0
        %v1605 = vadd.f32 0.0, %v1604
        %v1606 = vpop.f32.mrf.mxu0
        %1607 = vmatprep.mubr.f32.mxu0 0.0
        %1608 = vmatmul.mubr.f32.gmra.mxu0 %v1479
        %v1609 = vpop.f32.mrf.mxu0
        %v1610 = vadd.f32 0.0, %v1609
        %v1611 = vpop.f32.mrf.mxu0
        %1612 = vmatprep.mubr.f32.mxu0 0.0
        %1613 = vmatmul.mubr.f32.gmra.mxu0 %v1480
        %v1614 = vpop.f32.mrf.mxu0
        %v1615 = vadd.f32 0.0, %v1614
        %v1616 = vpop.f32.mrf.mxu0
        %1617 = vmatprep.mubr.f32.mxu0 0.0
        %1618 = vmatmul.mubr.f32.gmra.mxu0 %v1481
        %v1619 = vpop.f32.mrf.mxu0
        %v1620 = vadd.f32 0.0, %v1619
        %v1621 = vpop.f32.mrf.mxu0
        %1622 = vmatprep.mubr.f32.mxu0 0.0
        %1623 = vmatmul.mubr.f32.gmra.mxu0 %v1482
        %v1624 = vpop.f32.mrf.mxu0
        %v1625 = vadd.f32 0.0, %v1624
        %v1626 = vpop.f32.mrf.mxu0
        %1627 = vmatprep.mubr.f32.mxu0 0.0
        %1628 = vmatmul.mubr.f32.gmra.mxu0 %v1483
        %v1629 = vpop.f32.mrf.mxu0
        %v1630 = vadd.f32 0.0, %v1629
        %v1631 = vpop.f32.mrf.mxu0
        %1632 = vmatprep.mubr.f32.mxu0 0.0
        %1633 = vmatmul.mubr.f32.gmra.mxu0 %v1484
        %v1634 = vpop.f32.mrf.mxu0
        %v1635 = vadd.f32 0.0, %v1634
        %v1636 = vpop.f32.mrf.mxu0
        %1637 = vmatprep.mubr.f32.mxu0 0.0
        %1638 = vmatmul.mubr.f32.gmra.mxu0 %v1485
        %v1639 = vpop.f32.mrf.mxu0
        %v1640 = vadd.f32 0.0, %v1639
        %v1641 = vpop.f32.mrf.mxu0
        %1642 = vmatprep.mubr.f32.mxu0 0.0
        %1643 = vmatmul.mubr.f32.gmra.mxu0 %v1486
        %v1644 = vpop.f32.mrf.mxu0
        %v1645 = vadd.f32 0.0, %v1644
        %v1646 = vpop.f32.mrf.mxu0
        %1647 = vmatprep.mubr.f32.mxu0 0.0
        %1648 = vmatmul.mubr.f32.gmra.mxu0 %v1487
        %v1649 = vpop.f32.mrf.mxu0
        %v1650 = vadd.f32 0.0, %v1649
        %v1651 = vpop.f32.mrf.mxu0
        %1652 = vmatprep.mubr.f32.mxu0 0.0
        %1653 = vmatmul.mubr.f32.gmra.mxu0 %v1488
        %v1654 = vpop.f32.mrf.mxu0
        %v1655 = vadd.f32 0.0, %v1654
        %v1656 = vpop.f32.mrf.mxu0
        %1657 = vmatprep.mubr.f32.mxu0 0.0
        %1658 = vmatmul.mubr.f32.gmra.mxu0 %v1489
        %v1659 = vpop.f32.mrf.mxu0
        %v1660 = vadd.f32 0.0, %v1659
        %v1661 = vpop.f32.mrf.mxu0
        %1662 = vmatprep.mubr.f32.mxu0 0.0
        %1663 = vmatmul.mubr.f32.gmra.mxu0 %v1490
        %v1664 = vpop.f32.mrf.mxu0
        %v1665 = vadd.f32 0.0, %v1664
        %v1666 = vpop.f32.mrf.mxu0
        %1667 = vmatprep.mubr.f32.mxu0 0.0
        %1668 = vmatmul.mubr.f32.gmra.mxu0 %v1491
        %v1669 = vpop.f32.mrf.mxu0
        %v1670 = vadd.f32 0.0, %v1669
        %v1671 = vpop.f32.mrf.mxu0
        %1672 = vmatprep.mubr.f32.mxu0 0.0
        %1673 = vmatmul.mubr.f32.gmra.mxu0 %v1492
        %v1674 = vpop.f32.mrf.mxu0
        %v1675 = vadd.f32 0.0, %v1674
        %v1676 = vpop.f32.mrf.mxu0
        %1677 = vmatprep.mubr.f32.mxu0 0.0
        %1678 = vmatmul.mubr.f32.gmra.mxu0 %v1493
        %v1679 = vpop.f32.mrf.mxu0
        %v1680 = vadd.f32 0.0, %v1679
        %v1681 = vpop.f32.mrf.mxu0
        %1682 = vmatprep.mubr.f32.mxu0 0.0
        %1683 = vmatmul.mubr.f32.gmra.mxu0 %v1494
        %v1684 = vpop.f32.mrf.mxu0
        %v1685 = vadd.f32 0.0, %v1684
        %v1686 = vpop.f32.mrf.mxu0
        %1687 = vmatprep.mubr.f32.mxu0 0.0
        %1688 = vmatmul.mubr.f32.gmra.mxu0 %v1495
        %v1689 = vpop.f32.mrf.mxu0
        %v1690 = vadd.f32 0.0, %v1689
        %v1691 = vpop.f32.mrf.mxu0
        %1692 = vmatprep.mubr.f32.mxu0 0.0
        %1693 = vmatmul.mubr.f32.gmra.mxu0 %v1496
        %v1694 = vpop.f32.mrf.mxu0
        %v1695 = vadd.f32 0.0, %v1694
        %v1696 = vpop.f32.mrf.mxu0
        %1697 = vmatprep.mubr.f32.mxu0 0.0
        %1698 = vmatmul.mubr.f32.gmra.mxu0 %v1497
        %v1699 = vpop.f32.mrf.mxu0
        %v1700 = vadd.f32 0.0, %v1699
        %v1701 = vpop.f32.mrf.mxu0
        %1702 = vmatprep.mubr.f32.mxu0 0.0
        %1703 = vmatmul.mubr.f32.gmra.mxu0 %v1498
        %v1704 = vpop.f32.mrf.mxu0
        %v1705 = vadd.f32 0.0, %v1704
        %v1706 = vpop.f32.mrf.mxu0
        %1707 = vmatprep.mubr.f32.mxu0 0.0
        %1708 = vmatmul.mubr.f32.gmra.mxu0 %v1499
        %v1709 = vpop.f32.mrf.mxu0
        %v1710 = vadd.f32 0.0, %v1709
        %v1711 = vpop.f32.mrf.mxu0
        %1712 = vmatprep.mubr.f32.mxu0 0.0
        %1713 = vmatmul.mubr.f32.gmra.mxu0 %v1500
        %v1714 = vpop.f32.mrf.mxu0
        %v1715 = vadd.f32 0.0, %v1714
        %v1716 = vpop.f32.mrf.mxu0
        %1717 = vmatprep.mubr.f32.mxu0 0.0
        %1718 = vmatmul.mubr.f32.gmra.mxu0 %v1501
        %v1719 = vpop.f32.mrf.mxu0
        %v1720 = vadd.f32 0.0, %v1719
        %v1721 = vpop.f32.mrf.mxu0
        %1722 = vmatprep.mubr.f32.mxu0 0.0
        %1723 = vmatmul.mubr.f32.gmra.mxu0 %v1502
        %v1724 = vpop.f32.mrf.mxu0
        %v1725 = vadd.f32 0.0, %v1724
        %v1726 = vpop.f32.mrf.mxu0
        %1727 = vmatprep.mubr.f32.mxu0 0.0
        %1728 = vmatmul.mubr.f32.gmra.mxu0 %v1503
        %v1729 = vpop.f32.mrf.mxu0
        %v1730 = vadd.f32 0.0, %v1729
        %v1731 = vpop.f32.mrf.mxu0
        %1732 = vmatprep.mubr.f32.mxu0 0.0
        %1733 = vmatmul.mubr.f32.gmra.mxu0 %v1504
        %v1734 = vpop.f32.mrf.mxu0
        %v1735 = vadd.f32 0.0, %v1734
        %v1736 = vpop.f32.mrf.mxu0
        %1737 = vmatprep.mubr.f32.mxu0 0.0
        %1738 = vmatmul.mubr.f32.gmra.mxu0 %v1505
        %v1739 = vpop.f32.mrf.mxu0
        %v1740 = vadd.f32 0.0, %v1739
        %v1741 = vpop.f32.mrf.mxu0
        %1742 = vmatprep.mubr.f32.mxu0 0.0
        %1743 = vmatmul.mubr.f32.gmra.mxu0 %v1506
        %v1744 = vpop.f32.mrf.mxu0
        %v1745 = vadd.f32 0.0, %v1744
        %v1746 = vpop.f32.mrf.mxu0
        %1747 = vdwg.mxu0
        %v1748 = vadd.f32 %v1443, %v1590
        %v1749 = vadd.f32 %v1444, %v1595
        %v1750 = vadd.f32 %v1445, %v1600
        %v1751 = vadd.f32 %v1446, %v1605
        %v1752 = vadd.f32 %v1447, %v1610
        %v1753 = vadd.f32 %v1448, %v1615
        %v1754 = vadd.f32 %v1449, %v1620
        %v1755 = vadd.f32 %v1450, %v1625
        %v1756 = vadd.f32 %v1451, %v1630
        %v1757 = vadd.f32 %v1452, %v1635
        %v1758 = vadd.f32 %v1453, %v1640
        %v1759 = vadd.f32 %v1454, %v1645
        %v1760 = vadd.f32 %v1455, %v1650
        %v1761 = vadd.f32 %v1456, %v1655
        %v1762 = vadd.f32 %v1457, %v1660
        %v1763 = vadd.f32 %v1458, %v1665
        %v1764 = vadd.f32 %v1459, %v1670
        %v1765 = vadd.f32 %v1460, %v1675
        %v1766 = vadd.f32 %v1461, %v1680
        %v1767 = vadd.f32 %v1462, %v1685
        %v1768 = vadd.f32 %v1463, %v1690
        %v1769 = vadd.f32 %v1464, %v1695
        %v1770 = vadd.f32 %v1465, %v1700
        %v1771 = vadd.f32 %v1466, %v1705
        %v1772 = vadd.f32 %v1467, %v1710
        %v1773 = vadd.f32 %v1468, %v1715
        %v1774 = vadd.f32 %v1469, %v1720
        %v1775 = vadd.f32 %v1470, %v1725
        %v1776 = vadd.f32 %v1471, %v1730
        %v1777 = vadd.f32 %v1472, %v1735
        %v1778 = vadd.f32 %v1473, %v1740
        %v1779 = vadd.f32 %v1474, %v1745
        %v1780 = vld [vmem:[%s247 + $0x2] sm:$0xff]
        %v1781 = vld [vmem:[%s247 + $0xa] sm:$0xff]
        %v1782 = vld [vmem:[%s247 + $0x1a] sm:$0xff]
        %v1783 = vld [vmem:[%s247 + $0x22] sm:$0xff]
        %v1784 = vld [vmem:[%s247 + $0x32] sm:$0xff]
        %v1785 = vld [vmem:[%s247 + $0x3a] sm:$0xff]
        %v1786 = vld [vmem:[%s247 + $0x4a] sm:$0xff]
        %v1787 = vld [vmem:[%s247 + $0x52] sm:$0xff]
        %v1788 = vld [vmem:[%s247 + $0x62] sm:$0xff]
        %v1789 = vld [vmem:[%s247 + $0x6a] sm:$0xff]
        %v1790 = vld [vmem:[%s247 + $0x7a] sm:$0xff]
        %v1791 = vld [vmem:[%s247 + $0x82] sm:$0xff]
        %v1792 = vld [vmem:[%s247 + $0x92] sm:$0xff]
        %v1793 = vld [vmem:[%s247 + $0x9a] sm:$0xff]
        %v1794 = vld [vmem:[%s247 + $0xaa] sm:$0xff]
        %v1795 = vld [vmem:[%s247 + $0xb2] sm:$0xff]
        %v1796 = vld [vmem:[%s247 + $0xc2] sm:$0xff]
        %v1797 = vld [vmem:[%s247 + $0xca] sm:$0xff]
        %v1798 = vld [vmem:[%s247 + $0xda] sm:$0xff]
        %v1799 = vld [vmem:[%s247 + $0xe2] sm:$0xff]
        %v1800 = vld [vmem:[%s247 + $0xf2] sm:$0xff]
        %v1801 = vld [vmem:[%s247 + $0xfa] sm:$0xff]
        %v1802 = vld [vmem:[%s247 + $0x10a] sm:$0xff]
        %v1803 = vld [vmem:[%s247 + $0x112] sm:$0xff]
        %v1804 = vld [vmem:[%s247 + $0x122] sm:$0xff]
        %v1805 = vld [vmem:[%s247 + $0x12a] sm:$0xff]
        %v1806 = vld [vmem:[%s247 + $0x13a] sm:$0xff]
        %v1807 = vld [vmem:[%s247 + $0x142] sm:$0xff]
        %v1808 = vld [vmem:[%s247 + $0x152] sm:$0xff]
        %v1809 = vld [vmem:[%s247 + $0x15a] sm:$0xff]
        %v1810 = vld [vmem:[%s247 + $0x16a] sm:$0xff]
        %v1811 = vld [vmem:[%s247 + $0x172] sm:$0xff]
        %v1812 = vld [vmem:[#allocation6 + $0x280] sm:$0xff]
        %v1813 = vld [vmem:[#allocation6 + $0x288] sm:$0xff]
        %v1814 = vld [vmem:[#allocation6 + $0x290] sm:$0xff]
        %v1815 = vld [vmem:[#allocation6 + $0x298] sm:$0xff]
        %v1816 = vld [vmem:[#allocation6 + $0x2a0] sm:$0xff]
        %v1817 = vld [vmem:[#allocation6 + $0x2a8] sm:$0xff]
        %v1818 = vld [vmem:[#allocation6 + $0x2b0] sm:$0xff]
        %v1819 = vld [vmem:[#allocation6 + $0x2b8] sm:$0xff]
        %v1820 = vld [vmem:[#allocation6 + $0x2c0] sm:$0xff]
        %v1821 = vld [vmem:[#allocation6 + $0x2c8] sm:$0xff]
        %v1822 = vld [vmem:[#allocation6 + $0x2d0] sm:$0xff]
        %v1823 = vld [vmem:[#allocation6 + $0x2d8] sm:$0xff]
        %v1824 = vld [vmem:[#allocation6 + $0x2e0] sm:$0xff]
        %v1825 = vld [vmem:[#allocation6 + $0x2e8] sm:$0xff]
        %v1826 = vld [vmem:[#allocation6 + $0x2f0] sm:$0xff]
        %v1827 = vld [vmem:[#allocation6 + $0x2f8] sm:$0xff]
        %1828 = vmatprep.subr.mxu0 0.0
        %1829 = vmatpush1.msra.mxu0 %v1827
        %1830 = vmatprep.subr.mxu0 0.0
        %1831 = vmatpush1.msra.mxu0 %v1826
        %1832 = vmatprep.subr.mxu0 0.0
        %1833 = vmatpush1.msra.mxu0 %v1825
        %1834 = vmatprep.subr.mxu0 0.0
        %1835 = vmatpush1.msra.mxu0 %v1824
        %1836 = vmatprep.subr.mxu0 0.0
        %1837 = vmatpush1.msra.mxu0 %v1823
        %1838 = vmatprep.subr.mxu0 0.0
        %1839 = vmatpush1.msra.mxu0 %v1822
        %1840 = vmatprep.subr.mxu0 0.0
        %1841 = vmatpush1.msra.mxu0 %v1821
        %1842 = vmatprep.subr.mxu0 0.0
        %1843 = vmatpush1.msra.mxu0 %v1820
        %1844 = vmatprep.subr.mxu0 0.0
        %1845 = vmatpush1.msra.mxu0 %v1819
        %1846 = vmatprep.subr.mxu0 0.0
        %1847 = vmatpush1.msra.mxu0 %v1818
        %1848 = vmatprep.subr.mxu0 0.0
        %1849 = vmatpush1.msra.mxu0 %v1817
        %1850 = vmatprep.subr.mxu0 0.0
        %1851 = vmatpush1.msra.mxu0 %v1816
        %1852 = vmatprep.subr.mxu0 0.0
        %1853 = vmatpush1.msra.mxu0 %v1815
        %1854 = vmatprep.subr.mxu0 0.0
        %1855 = vmatpush1.msra.mxu0 %v1814
        %1856 = vmatprep.subr.mxu0 0.0
        %1857 = vmatpush1.msra.mxu0 %v1813
        %1858 = vmatprep.subr.mxu0 0.0
        %1859 = vmatpush1.msra.mxu0 %v1812
        %1860 = vmatprep.subr.mxu0 0.0
        %1861 = vmatpush2.msra.mxu0 0.0
        %1862 = vmatprep.subr.mxu0 0.0
        %1863 = vmatpush2.msra.mxu0 0.0
        %1864 = vmatprep.subr.mxu0 0.0
        %1865 = vmatpush2.msra.mxu0 0.0
        %1866 = vmatprep.subr.mxu0 0.0
        %1867 = vmatpush2.msra.mxu0 0.0
        %1868 = vmatprep.subr.mxu0 0.0
        %1869 = vmatpush2.msra.mxu0 0.0
        %1870 = vmatprep.subr.mxu0 0.0
        %1871 = vmatpush2.msra.mxu0 0.0
        %1872 = vmatprep.subr.mxu0 0.0
        %1873 = vmatpush2.msra.mxu0 0.0
        %1874 = vmatprep.subr.mxu0 0.0
        %1875 = vmatpush2.msra.mxu0 0.0
        %1876 = vmatprep.subr.mxu0 0.0
        %1877 = vmatpush2.msra.mxu0 0.0
        %1878 = vmatprep.subr.mxu0 0.0
        %1879 = vmatpush2.msra.mxu0 0.0
        %1880 = vmatprep.subr.mxu0 0.0
        %1881 = vmatpush2.msra.mxu0 0.0
        %1882 = vmatprep.subr.mxu0 0.0
        %1883 = vmatpush2.msra.mxu0 0.0
        %1884 = vmatprep.subr.mxu0 0.0
        %1885 = vmatpush2.msra.mxu0 0.0
        %1886 = vmatprep.subr.mxu0 0.0
        %1887 = vmatpush2.msra.mxu0 0.0
        %1888 = vmatprep.subr.mxu0 0.0
        %1889 = vmatpush2.msra.mxu0 0.0
        %1890 = vmatprep.subr.mxu0 0.0
        %1891 = vmatpush2.msra.mxu0 0.0
        %1892 = vmatprep.mubr.f32.mxu0 0.0
        %1893 = vmatmul.mubr.f32.gmra.mxu0 %v1780
        %v1894 = vpop.f32.mrf.mxu0
        %v1895 = vadd.f32 0.0, %v1894
        %v1896 = vpop.f32.mrf.mxu0
        %1897 = vmatprep.mubr.f32.mxu0 0.0
        %1898 = vmatmul.mubr.f32.gmra.mxu0 %v1781
        %v1899 = vpop.f32.mrf.mxu0
        %v1900 = vadd.f32 0.0, %v1899
        %v1901 = vpop.f32.mrf.mxu0
        %1902 = vmatprep.mubr.f32.mxu0 0.0
        %1903 = vmatmul.mubr.f32.gmra.mxu0 %v1782
        %v1904 = vpop.f32.mrf.mxu0
        %v1905 = vadd.f32 0.0, %v1904
        %v1906 = vpop.f32.mrf.mxu0
        %1907 = vmatprep.mubr.f32.mxu0 0.0
        %1908 = vmatmul.mubr.f32.gmra.mxu0 %v1783
        %v1909 = vpop.f32.mrf.mxu0
        %v1910 = vadd.f32 0.0, %v1909
        %v1911 = vpop.f32.mrf.mxu0
        %1912 = vmatprep.mubr.f32.mxu0 0.0
        %1913 = vmatmul.mubr.f32.gmra.mxu0 %v1784
        %v1914 = vpop.f32.mrf.mxu0
        %v1915 = vadd.f32 0.0, %v1914
        %v1916 = vpop.f32.mrf.mxu0
        %1917 = vmatprep.mubr.f32.mxu0 0.0
        %1918 = vmatmul.mubr.f32.gmra.mxu0 %v1785
        %v1919 = vpop.f32.mrf.mxu0
        %v1920 = vadd.f32 0.0, %v1919
        %v1921 = vpop.f32.mrf.mxu0
        %1922 = vmatprep.mubr.f32.mxu0 0.0
        %1923 = vmatmul.mubr.f32.gmra.mxu0 %v1786
        %v1924 = vpop.f32.mrf.mxu0
        %v1925 = vadd.f32 0.0, %v1924
        %v1926 = vpop.f32.mrf.mxu0
        %1927 = vmatprep.mubr.f32.mxu0 0.0
        %1928 = vmatmul.mubr.f32.gmra.mxu0 %v1787
        %v1929 = vpop.f32.mrf.mxu0
        %v1930 = vadd.f32 0.0, %v1929
        %v1931 = vpop.f32.mrf.mxu0
        %1932 = vmatprep.mubr.f32.mxu0 0.0
        %1933 = vmatmul.mubr.f32.gmra.mxu0 %v1788
        %v1934 = vpop.f32.mrf.mxu0
        %v1935 = vadd.f32 0.0, %v1934
        %v1936 = vpop.f32.mrf.mxu0
        %1937 = vmatprep.mubr.f32.mxu0 0.0
        %1938 = vmatmul.mubr.f32.gmra.mxu0 %v1789
        %v1939 = vpop.f32.mrf.mxu0
        %v1940 = vadd.f32 0.0, %v1939
        %v1941 = vpop.f32.mrf.mxu0
        %1942 = vmatprep.mubr.f32.mxu0 0.0
        %1943 = vmatmul.mubr.f32.gmra.mxu0 %v1790
        %v1944 = vpop.f32.mrf.mxu0
        %v1945 = vadd.f32 0.0, %v1944
        %v1946 = vpop.f32.mrf.mxu0
        %1947 = vmatprep.mubr.f32.mxu0 0.0
        %1948 = vmatmul.mubr.f32.gmra.mxu0 %v1791
        %v1949 = vpop.f32.mrf.mxu0
        %v1950 = vadd.f32 0.0, %v1949
        %v1951 = vpop.f32.mrf.mxu0
        %1952 = vmatprep.mubr.f32.mxu0 0.0
        %1953 = vmatmul.mubr.f32.gmra.mxu0 %v1792
        %v1954 = vpop.f32.mrf.mxu0
        %v1955 = vadd.f32 0.0, %v1954
        %v1956 = vpop.f32.mrf.mxu0
        %1957 = vmatprep.mubr.f32.mxu0 0.0
        %1958 = vmatmul.mubr.f32.gmra.mxu0 %v1793
        %v1959 = vpop.f32.mrf.mxu0
        %v1960 = vadd.f32 0.0, %v1959
        %v1961 = vpop.f32.mrf.mxu0
        %1962 = vmatprep.mubr.f32.mxu0 0.0
        %1963 = vmatmul.mubr.f32.gmra.mxu0 %v1794
        %v1964 = vpop.f32.mrf.mxu0
        %v1965 = vadd.f32 0.0, %v1964
        %v1966 = vpop.f32.mrf.mxu0
        %1967 = vmatprep.mubr.f32.mxu0 0.0
        %1968 = vmatmul.mubr.f32.gmra.mxu0 %v1795
        %v1969 = vpop.f32.mrf.mxu0
        %v1970 = vadd.f32 0.0, %v1969
        %v1971 = vpop.f32.mrf.mxu0
        %1972 = vmatprep.mubr.f32.mxu0 0.0
        %1973 = vmatmul.mubr.f32.gmra.mxu0 %v1796
        %v1974 = vpop.f32.mrf.mxu0
        %v1975 = vadd.f32 0.0, %v1974
        %v1976 = vpop.f32.mrf.mxu0
        %1977 = vmatprep.mubr.f32.mxu0 0.0
        %1978 = vmatmul.mubr.f32.gmra.mxu0 %v1797
        %v1979 = vpop.f32.mrf.mxu0
        %v1980 = vadd.f32 0.0, %v1979
        %v1981 = vpop.f32.mrf.mxu0
        %1982 = vmatprep.mubr.f32.mxu0 0.0
        %1983 = vmatmul.mubr.f32.gmra.mxu0 %v1798
        %v1984 = vpop.f32.mrf.mxu0
        %v1985 = vadd.f32 0.0, %v1984
        %v1986 = vpop.f32.mrf.mxu0
        %1987 = vmatprep.mubr.f32.mxu0 0.0
        %1988 = vmatmul.mubr.f32.gmra.mxu0 %v1799
        %v1989 = vpop.f32.mrf.mxu0
        %v1990 = vadd.f32 0.0, %v1989
        %v1991 = vpop.f32.mrf.mxu0
        %1992 = vmatprep.mubr.f32.mxu0 0.0
        %1993 = vmatmul.mubr.f32.gmra.mxu0 %v1800
        %v1994 = vpop.f32.mrf.mxu0
        %v1995 = vadd.f32 0.0, %v1994
        %v1996 = vpop.f32.mrf.mxu0
        %1997 = vmatprep.mubr.f32.mxu0 0.0
        %1998 = vmatmul.mubr.f32.gmra.mxu0 %v1801
        %v1999 = vpop.f32.mrf.mxu0
        %v2000 = vadd.f32 0.0, %v1999
        %v2001 = vpop.f32.mrf.mxu0
        %2002 = vmatprep.mubr.f32.mxu0 0.0
        %2003 = vmatmul.mubr.f32.gmra.mxu0 %v1802
        %v2004 = vpop.f32.mrf.mxu0
        %v2005 = vadd.f32 0.0, %v2004
        %v2006 = vpop.f32.mrf.mxu0
        %2007 = vmatprep.mubr.f32.mxu0 0.0
        %2008 = vmatmul.mubr.f32.gmra.mxu0 %v1803
        %v2009 = vpop.f32.mrf.mxu0
        %v2010 = vadd.f32 0.0, %v2009
        %v2011 = vpop.f32.mrf.mxu0
        %2012 = vmatprep.mubr.f32.mxu0 0.0
        %2013 = vmatmul.mubr.f32.gmra.mxu0 %v1804
        %v2014 = vpop.f32.mrf.mxu0
        %v2015 = vadd.f32 0.0, %v2014
        %v2016 = vpop.f32.mrf.mxu0
        %2017 = vmatprep.mubr.f32.mxu0 0.0
        %2018 = vmatmul.mubr.f32.gmra.mxu0 %v1805
        %v2019 = vpop.f32.mrf.mxu0
        %v2020 = vadd.f32 0.0, %v2019
        %v2021 = vpop.f32.mrf.mxu0
        %2022 = vmatprep.mubr.f32.mxu0 0.0
        %2023 = vmatmul.mubr.f32.gmra.mxu0 %v1806
        %v2024 = vpop.f32.mrf.mxu0
        %v2025 = vadd.f32 0.0, %v2024
        %v2026 = vpop.f32.mrf.mxu0
        %2027 = vmatprep.mubr.f32.mxu0 0.0
        %2028 = vmatmul.mubr.f32.gmra.mxu0 %v1807
        %v2029 = vpop.f32.mrf.mxu0
        %v2030 = vadd.f32 0.0, %v2029
        %v2031 = vpop.f32.mrf.mxu0
        %2032 = vmatprep.mubr.f32.mxu0 0.0
        %2033 = vmatmul.mubr.f32.gmra.mxu0 %v1808
        %v2034 = vpop.f32.mrf.mxu0
        %v2035 = vadd.f32 0.0, %v2034
        %v2036 = vpop.f32.mrf.mxu0
        %2037 = vmatprep.mubr.f32.mxu0 0.0
        %2038 = vmatmul.mubr.f32.gmra.mxu0 %v1809
        %v2039 = vpop.f32.mrf.mxu0
        %v2040 = vadd.f32 0.0, %v2039
        %v2041 = vpop.f32.mrf.mxu0
        %2042 = vmatprep.mubr.f32.mxu0 0.0
        %2043 = vmatmul.mubr.f32.gmra.mxu0 %v1810
        %v2044 = vpop.f32.mrf.mxu0
        %v2045 = vadd.f32 0.0, %v2044
        %v2046 = vpop.f32.mrf.mxu0
        %2047 = vmatprep.mubr.f32.mxu0 0.0
        %2048 = vmatmul.mubr.f32.gmra.mxu0 %v1811
        %v2049 = vpop.f32.mrf.mxu0
        %v2050 = vadd.f32 0.0, %v2049
        %v2051 = vpop.f32.mrf.mxu0
        %2052 = vdwg.mxu0
        %v2053 = vadd.f32 %v1748, %v1895
        %v2054 = vadd.f32 %v1749, %v1900
        %v2055 = vadd.f32 %v1750, %v1905
        %v2056 = vadd.f32 %v1751, %v1910
        %v2057 = vadd.f32 %v1752, %v1915
        %v2058 = vadd.f32 %v1753, %v1920
        %v2059 = vadd.f32 %v1754, %v1925
        %v2060 = vadd.f32 %v1755, %v1930
        %v2061 = vadd.f32 %v1756, %v1935
        %v2062 = vadd.f32 %v1757, %v1940
        %v2063 = vadd.f32 %v1758, %v1945
        %v2064 = vadd.f32 %v1759, %v1950
        %v2065 = vadd.f32 %v1760, %v1955
        %v2066 = vadd.f32 %v1761, %v1960
        %v2067 = vadd.f32 %v1762, %v1965
        %v2068 = vadd.f32 %v1763, %v1970
        %v2069 = vadd.f32 %v1764, %v1975
        %v2070 = vadd.f32 %v1765, %v1980
        %v2071 = vadd.f32 %v1766, %v1985
        %v2072 = vadd.f32 %v1767, %v1990
        %v2073 = vadd.f32 %v1768, %v1995
        %v2074 = vadd.f32 %v1769, %v2000
        %v2075 = vadd.f32 %v1770, %v2005
        %v2076 = vadd.f32 %v1771, %v2010
        %v2077 = vadd.f32 %v1772, %v2015
        %v2078 = vadd.f32 %v1773, %v2020
        %v2079 = vadd.f32 %v1774, %v2025
        %v2080 = vadd.f32 %v1775, %v2030
        %v2081 = vadd.f32 %v1776, %v2035
        %v2082 = vadd.f32 %v1777, %v2040
        %v2083 = vadd.f32 %v1778, %v2045
        %v2084 = vadd.f32 %v1779, %v2050
        %s2085 = scalar_lea.vmem [#allocation2], 48
        %v2086 = vld [vmem:[%s2085] sm:$0xff]
        %v2087 = vld [vmem:[%s2085 + $0x8] sm:$0xff]
        %v2088 = vld [vmem:[%s2085 + $0x18] sm:$0xff]
        %v2089 = vld [vmem:[%s2085 + $0x20] sm:$0xff]
        %v2090 = vld [vmem:[%s2085 + $0x30] sm:$0xff]
        %v2091 = vld [vmem:[%s2085 + $0x38] sm:$0xff]
        %v2092 = vld [vmem:[%s2085 + $0x48] sm:$0xff]
        %v2093 = vld [vmem:[%s2085 + $0x50] sm:$0xff]
        %v2094 = vld [vmem:[%s2085 + $0x60] sm:$0xff]
        %v2095 = vld [vmem:[%s2085 + $0x68] sm:$0xff]
        %v2096 = vld [vmem:[%s2085 + $0x78] sm:$0xff]
        %v2097 = vld [vmem:[%s2085 + $0x80] sm:$0xff]
        %v2098 = vld [vmem:[%s2085 + $0x90] sm:$0xff]
        %v2099 = vld [vmem:[%s2085 + $0x98] sm:$0xff]
        %v2100 = vld [vmem:[%s2085 + $0xa8] sm:$0xff]
        %v2101 = vld [vmem:[%s2085 + $0xb0] sm:$0xff]
        %v2102 = vld [vmem:[%s2085 + $0xc0] sm:$0xff]
        %v2103 = vld [vmem:[%s2085 + $0xc8] sm:$0xff]
        %v2104 = vld [vmem:[%s2085 + $0xd8] sm:$0xff]
        %v2105 = vld [vmem:[%s2085 + $0xe0] sm:$0xff]
        %v2106 = vld [vmem:[%s2085 + $0xf0] sm:$0xff]
        %v2107 = vld [vmem:[%s2085 + $0xf8] sm:$0xff]
        %v2108 = vld [vmem:[%s2085 + $0x108] sm:$0xff]
        %v2109 = vld [vmem:[%s2085 + $0x110] sm:$0xff]
        %v2110 = vld [vmem:[%s2085 + $0x120] sm:$0xff]
        %v2111 = vld [vmem:[%s2085 + $0x128] sm:$0xff]
        %v2112 = vld [vmem:[%s2085 + $0x138] sm:$0xff]
        %v2113 = vld [vmem:[%s2085 + $0x140] sm:$0xff]
        %v2114 = vld [vmem:[%s2085 + $0x150] sm:$0xff]
        %v2115 = vld [vmem:[%s2085 + $0x158] sm:$0xff]
        %v2116 = vld [vmem:[%s2085 + $0x168] sm:$0xff]
        %v2117 = vld [vmem:[%s2085 + $0x170] sm:$0xff]
        %v2118 = vld [vmem:[#allocation6 + $0x300] sm:$0xff]
        %v2119 = vld [vmem:[#allocation6 + $0x308] sm:$0xff]
        %v2120 = vld [vmem:[#allocation6 + $0x310] sm:$0xff]
        %v2121 = vld [vmem:[#allocation6 + $0x318] sm:$0xff]
        %v2122 = vld [vmem:[#allocation6 + $0x320] sm:$0xff]
        %v2123 = vld [vmem:[#allocation6 + $0x328] sm:$0xff]
        %v2124 = vld [vmem:[#allocation6 + $0x330] sm:$0xff]
        %v2125 = vld [vmem:[#allocation6 + $0x338] sm:$0xff]
        %v2126 = vld [vmem:[#allocation6 + $0x340] sm:$0xff]
        %v2127 = vld [vmem:[#allocation6 + $0x348] sm:$0xff]
        %v2128 = vld [vmem:[#allocation6 + $0x350] sm:$0xff]
        %v2129 = vld [vmem:[#allocation6 + $0x358] sm:$0xff]
        %v2130 = vld [vmem:[#allocation6 + $0x360] sm:$0xff]
        %v2131 = vld [vmem:[#allocation6 + $0x368] sm:$0xff]
        %v2132 = vld [vmem:[#allocation6 + $0x370] sm:$0xff]
        %v2133 = vld [vmem:[#allocation6 + $0x378] sm:$0xff]
        %2134 = vmatprep.subr.mxu0 0.0
        %2135 = vmatpush1.msra.mxu0 %v2133
        %2136 = vmatprep.subr.mxu0 0.0
        %2137 = vmatpush1.msra.mxu0 %v2132
        %2138 = vmatprep.subr.mxu0 0.0
        %2139 = vmatpush1.msra.mxu0 %v2131
        %2140 = vmatprep.subr.mxu0 0.0
        %2141 = vmatpush1.msra.mxu0 %v2130
        %2142 = vmatprep.subr.mxu0 0.0
        %2143 = vmatpush1.msra.mxu0 %v2129
        %2144 = vmatprep.subr.mxu0 0.0
        %2145 = vmatpush1.msra.mxu0 %v2128
        %2146 = vmatprep.subr.mxu0 0.0
        %2147 = vmatpush1.msra.mxu0 %v2127
        %2148 = vmatprep.subr.mxu0 0.0
        %2149 = vmatpush1.msra.mxu0 %v2126
        %2150 = vmatprep.subr.mxu0 0.0
        %2151 = vmatpush1.msra.mxu0 %v2125
        %2152 = vmatprep.subr.mxu0 0.0
        %2153 = vmatpush1.msra.mxu0 %v2124
        %2154 = vmatprep.subr.mxu0 0.0
        %2155 = vmatpush1.msra.mxu0 %v2123
        %2156 = vmatprep.subr.mxu0 0.0
        %2157 = vmatpush1.msra.mxu0 %v2122
        %2158 = vmatprep.subr.mxu0 0.0
        %2159 = vmatpush1.msra.mxu0 %v2121
        %2160 = vmatprep.subr.mxu0 0.0
        %2161 = vmatpush1.msra.mxu0 %v2120
        %2162 = vmatprep.subr.mxu0 0.0
        %2163 = vmatpush1.msra.mxu0 %v2119
        %2164 = vmatprep.subr.mxu0 0.0
        %2165 = vmatpush1.msra.mxu0 %v2118
        %2166 = vmatprep.subr.mxu0 0.0
        %2167 = vmatpush2.msra.mxu0 0.0
        %2168 = vmatprep.subr.mxu0 0.0
        %2169 = vmatpush2.msra.mxu0 0.0
        %2170 = vmatprep.subr.mxu0 0.0
        %2171 = vmatpush2.msra.mxu0 0.0
        %2172 = vmatprep.subr.mxu0 0.0
        %2173 = vmatpush2.msra.mxu0 0.0
        %2174 = vmatprep.subr.mxu0 0.0
        %2175 = vmatpush2.msra.mxu0 0.0
        %2176 = vmatprep.subr.mxu0 0.0
        %2177 = vmatpush2.msra.mxu0 0.0
        %2178 = vmatprep.subr.mxu0 0.0
        %2179 = vmatpush2.msra.mxu0 0.0
        %2180 = vmatprep.subr.mxu0 0.0
        %2181 = vmatpush2.msra.mxu0 0.0
        %2182 = vmatprep.subr.mxu0 0.0
        %2183 = vmatpush2.msra.mxu0 0.0
        %2184 = vmatprep.subr.mxu0 0.0
        %2185 = vmatpush2.msra.mxu0 0.0
        %2186 = vmatprep.subr.mxu0 0.0
        %2187 = vmatpush2.msra.mxu0 0.0
        %2188 = vmatprep.subr.mxu0 0.0
        %2189 = vmatpush2.msra.mxu0 0.0
        %2190 = vmatprep.subr.mxu0 0.0
        %2191 = vmatpush2.msra.mxu0 0.0
        %2192 = vmatprep.subr.mxu0 0.0
        %2193 = vmatpush2.msra.mxu0 0.0
        %2194 = vmatprep.subr.mxu0 0.0
        %2195 = vmatpush2.msra.mxu0 0.0
        %2196 = vmatprep.subr.mxu0 0.0
        %2197 = vmatpush2.msra.mxu0 0.0
        %2198 = vmatprep.mubr.f32.mxu0 0.0
        %2199 = vmatmul.mubr.f32.gmra.mxu0 %v2086
        %v2200 = vpop.f32.mrf.mxu0
        %v2201 = vadd.f32 0.0, %v2200
        %v2202 = vpop.f32.mrf.mxu0
        %2203 = vmatprep.mubr.f32.mxu0 0.0
        %2204 = vmatmul.mubr.f32.gmra.mxu0 %v2087
        %v2205 = vpop.f32.mrf.mxu0
        %v2206 = vadd.f32 0.0, %v2205
        %v2207 = vpop.f32.mrf.mxu0
        %2208 = vmatprep.mubr.f32.mxu0 0.0
        %2209 = vmatmul.mubr.f32.gmra.mxu0 %v2088
        %v2210 = vpop.f32.mrf.mxu0
        %v2211 = vadd.f32 0.0, %v2210
        %v2212 = vpop.f32.mrf.mxu0
        %2213 = vmatprep.mubr.f32.mxu0 0.0
        %2214 = vmatmul.mubr.f32.gmra.mxu0 %v2089
        %v2215 = vpop.f32.mrf.mxu0
        %v2216 = vadd.f32 0.0, %v2215
        %v2217 = vpop.f32.mrf.mxu0
        %2218 = vmatprep.mubr.f32.mxu0 0.0
        %2219 = vmatmul.mubr.f32.gmra.mxu0 %v2090
        %v2220 = vpop.f32.mrf.mxu0
        %v2221 = vadd.f32 0.0, %v2220
        %v2222 = vpop.f32.mrf.mxu0
        %2223 = vmatprep.mubr.f32.mxu0 0.0
        %2224 = vmatmul.mubr.f32.gmra.mxu0 %v2091
        %v2225 = vpop.f32.mrf.mxu0
        %v2226 = vadd.f32 0.0, %v2225
        %v2227 = vpop.f32.mrf.mxu0
        %2228 = vmatprep.mubr.f32.mxu0 0.0
        %2229 = vmatmul.mubr.f32.gmra.mxu0 %v2092
        %v2230 = vpop.f32.mrf.mxu0
        %v2231 = vadd.f32 0.0, %v2230
        %v2232 = vpop.f32.mrf.mxu0
        %2233 = vmatprep.mubr.f32.mxu0 0.0
        %2234 = vmatmul.mubr.f32.gmra.mxu0 %v2093
        %v2235 = vpop.f32.mrf.mxu0
        %v2236 = vadd.f32 0.0, %v2235
        %v2237 = vpop.f32.mrf.mxu0
        %2238 = vmatprep.mubr.f32.mxu0 0.0
        %2239 = vmatmul.mubr.f32.gmra.mxu0 %v2094
        %v2240 = vpop.f32.mrf.mxu0
        %v2241 = vadd.f32 0.0, %v2240
        %v2242 = vpop.f32.mrf.mxu0
        %2243 = vmatprep.mubr.f32.mxu0 0.0
        %2244 = vmatmul.mubr.f32.gmra.mxu0 %v2095
        %v2245 = vpop.f32.mrf.mxu0
        %v2246 = vadd.f32 0.0, %v2245
        %v2247 = vpop.f32.mrf.mxu0
        %2248 = vmatprep.mubr.f32.mxu0 0.0
        %2249 = vmatmul.mubr.f32.gmra.mxu0 %v2096
        %v2250 = vpop.f32.mrf.mxu0
        %v2251 = vadd.f32 0.0, %v2250
        %v2252 = vpop.f32.mrf.mxu0
        %2253 = vmatprep.mubr.f32.mxu0 0.0
        %2254 = vmatmul.mubr.f32.gmra.mxu0 %v2097
        %v2255 = vpop.f32.mrf.mxu0
        %v2256 = vadd.f32 0.0, %v2255
        %v2257 = vpop.f32.mrf.mxu0
        %2258 = vmatprep.mubr.f32.mxu0 0.0
        %2259 = vmatmul.mubr.f32.gmra.mxu0 %v2098
        %v2260 = vpop.f32.mrf.mxu0
        %v2261 = vadd.f32 0.0, %v2260
        %v2262 = vpop.f32.mrf.mxu0
        %2263 = vmatprep.mubr.f32.mxu0 0.0
        %2264 = vmatmul.mubr.f32.gmra.mxu0 %v2099
        %v2265 = vpop.f32.mrf.mxu0
        %v2266 = vadd.f32 0.0, %v2265
        %v2267 = vpop.f32.mrf.mxu0
        %2268 = vmatprep.mubr.f32.mxu0 0.0
        %2269 = vmatmul.mubr.f32.gmra.mxu0 %v2100
        %v2270 = vpop.f32.mrf.mxu0
        %v2271 = vadd.f32 0.0, %v2270
        %v2272 = vpop.f32.mrf.mxu0
        %2273 = vmatprep.mubr.f32.mxu0 0.0
        %2274 = vmatmul.mubr.f32.gmra.mxu0 %v2101
        %v2275 = vpop.f32.mrf.mxu0
        %v2276 = vadd.f32 0.0, %v2275
        %v2277 = vpop.f32.mrf.mxu0
        %2278 = vmatprep.mubr.f32.mxu0 0.0
        %2279 = vmatmul.mubr.f32.gmra.mxu0 %v2102
        %v2280 = vpop.f32.mrf.mxu0
        %v2281 = vadd.f32 0.0, %v2280
        %v2282 = vpop.f32.mrf.mxu0
        %2283 = vmatprep.mubr.f32.mxu0 0.0
        %2284 = vmatmul.mubr.f32.gmra.mxu0 %v2103
        %v2285 = vpop.f32.mrf.mxu0
        %v2286 = vadd.f32 0.0, %v2285
        %v2287 = vpop.f32.mrf.mxu0
        %2288 = vmatprep.mubr.f32.mxu0 0.0
        %2289 = vmatmul.mubr.f32.gmra.mxu0 %v2104
        %v2290 = vpop.f32.mrf.mxu0
        %v2291 = vadd.f32 0.0, %v2290
        %v2292 = vpop.f32.mrf.mxu0
        %2293 = vmatprep.mubr.f32.mxu0 0.0
        %2294 = vmatmul.mubr.f32.gmra.mxu0 %v2105
        %v2295 = vpop.f32.mrf.mxu0
        %v2296 = vadd.f32 0.0, %v2295
        %v2297 = vpop.f32.mrf.mxu0
        %2298 = vmatprep.mubr.f32.mxu0 0.0
        %2299 = vmatmul.mubr.f32.gmra.mxu0 %v2106
        %v2300 = vpop.f32.mrf.mxu0
        %v2301 = vadd.f32 0.0, %v2300
        %v2302 = vpop.f32.mrf.mxu0
        %2303 = vmatprep.mubr.f32.mxu0 0.0
        %2304 = vmatmul.mubr.f32.gmra.mxu0 %v2107
        %v2305 = vpop.f32.mrf.mxu0
        %v2306 = vadd.f32 0.0, %v2305
        %v2307 = vpop.f32.mrf.mxu0
        %2308 = vmatprep.mubr.f32.mxu0 0.0
        %2309 = vmatmul.mubr.f32.gmra.mxu0 %v2108
        %v2310 = vpop.f32.mrf.mxu0
        %v2311 = vadd.f32 0.0, %v2310
        %v2312 = vpop.f32.mrf.mxu0
        %2313 = vmatprep.mubr.f32.mxu0 0.0
        %2314 = vmatmul.mubr.f32.gmra.mxu0 %v2109
        %v2315 = vpop.f32.mrf.mxu0
        %v2316 = vadd.f32 0.0, %v2315
        %v2317 = vpop.f32.mrf.mxu0
        %2318 = vmatprep.mubr.f32.mxu0 0.0
        %2319 = vmatmul.mubr.f32.gmra.mxu0 %v2110
        %v2320 = vpop.f32.mrf.mxu0
        %v2321 = vadd.f32 0.0, %v2320
        %v2322 = vpop.f32.mrf.mxu0
        %2323 = vmatprep.mubr.f32.mxu0 0.0
        %2324 = vmatmul.mubr.f32.gmra.mxu0 %v2111
        %v2325 = vpop.f32.mrf.mxu0
        %v2326 = vadd.f32 0.0, %v2325
        %v2327 = vpop.f32.mrf.mxu0
        %2328 = vmatprep.mubr.f32.mxu0 0.0
        %2329 = vmatmul.mubr.f32.gmra.mxu0 %v2112
        %v2330 = vpop.f32.mrf.mxu0
        %v2331 = vadd.f32 0.0, %v2330
        %v2332 = vpop.f32.mrf.mxu0
        %2333 = vmatprep.mubr.f32.mxu0 0.0
        %2334 = vmatmul.mubr.f32.gmra.mxu0 %v2113
        %v2335 = vpop.f32.mrf.mxu0
        %v2336 = vadd.f32 0.0, %v2335
        %v2337 = vpop.f32.mrf.mxu0
        %2338 = vmatprep.mubr.f32.mxu0 0.0
        %2339 = vmatmul.mubr.f32.gmra.mxu0 %v2114
        %v2340 = vpop.f32.mrf.mxu0
        %v2341 = vadd.f32 0.0, %v2340
        %v2342 = vpop.f32.mrf.mxu0
        %2343 = vmatprep.mubr.f32.mxu0 0.0
        %2344 = vmatmul.mubr.f32.gmra.mxu0 %v2115
        %v2345 = vpop.f32.mrf.mxu0
        %v2346 = vadd.f32 0.0, %v2345
        %v2347 = vpop.f32.mrf.mxu0
        %2348 = vmatprep.mubr.f32.mxu0 0.0
        %2349 = vmatmul.mubr.f32.gmra.mxu0 %v2116
        %v2350 = vpop.f32.mrf.mxu0
        %v2351 = vadd.f32 0.0, %v2350
        %v2352 = vpop.f32.mrf.mxu0
        %2353 = vmatprep.mubr.f32.mxu0 0.0
        %2354 = vmatmul.mubr.f32.gmra.mxu0 %v2117
        %v2355 = vpop.f32.mrf.mxu0
        %v2356 = vadd.f32 0.0, %v2355
        %v2357 = vpop.f32.mrf.mxu0
        %2358 = vdwg.mxu0
        %v2359 = vadd.f32 %v2053, %v2201
        %v2360 = vadd.f32 %v2054, %v2206
        %v2361 = vadd.f32 %v2055, %v2211
        %v2362 = vadd.f32 %v2056, %v2216
        %v2363 = vadd.f32 %v2057, %v2221
        %v2364 = vadd.f32 %v2058, %v2226
        %v2365 = vadd.f32 %v2059, %v2231
        %v2366 = vadd.f32 %v2060, %v2236
        %v2367 = vadd.f32 %v2061, %v2241
        %v2368 = vadd.f32 %v2062, %v2246
        %v2369 = vadd.f32 %v2063, %v2251
        %v2370 = vadd.f32 %v2064, %v2256
        %v2371 = vadd.f32 %v2065, %v2261
        %v2372 = vadd.f32 %v2066, %v2266
        %v2373 = vadd.f32 %v2067, %v2271
        %v2374 = vadd.f32 %v2068, %v2276
        %v2375 = vadd.f32 %v2069, %v2281
        %v2376 = vadd.f32 %v2070, %v2286
        %v2377 = vadd.f32 %v2071, %v2291
        %v2378 = vadd.f32 %v2072, %v2296
        %v2379 = vadd.f32 %v2073, %v2301
        %v2380 = vadd.f32 %v2074, %v2306
        %v2381 = vadd.f32 %v2075, %v2311
        %v2382 = vadd.f32 %v2076, %v2316
        %v2383 = vadd.f32 %v2077, %v2321
        %v2384 = vadd.f32 %v2078, %v2326
        %v2385 = vadd.f32 %v2079, %v2331
        %v2386 = vadd.f32 %v2080, %v2336
        %v2387 = vadd.f32 %v2081, %v2341
        %v2388 = vadd.f32 %v2082, %v2346
        %v2389 = vadd.f32 %v2083, %v2351
        %v2390 = vadd.f32 %v2084, %v2356
        %v2391 = vld [vmem:[%s2085 + $0x1] sm:$0xff]
        %v2392 = vld [vmem:[%s2085 + $0x9] sm:$0xff]
        %v2393 = vld [vmem:[%s2085 + $0x19] sm:$0xff]
        %v2394 = vld [vmem:[%s2085 + $0x21] sm:$0xff]
        %v2395 = vld [vmem:[%s2085 + $0x31] sm:$0xff]
        %v2396 = vld [vmem:[%s2085 + $0x39] sm:$0xff]
        %v2397 = vld [vmem:[%s2085 + $0x49] sm:$0xff]
        %v2398 = vld [vmem:[%s2085 + $0x51] sm:$0xff]
        %v2399 = vld [vmem:[%s2085 + $0x61] sm:$0xff]
        %v2400 = vld [vmem:[%s2085 + $0x69] sm:$0xff]
        %v2401 = vld [vmem:[%s2085 + $0x79] sm:$0xff]
        %v2402 = vld [vmem:[%s2085 + $0x81] sm:$0xff]
        %v2403 = vld [vmem:[%s2085 + $0x91] sm:$0xff]
        %v2404 = vld [vmem:[%s2085 + $0x99] sm:$0xff]
        %v2405 = vld [vmem:[%s2085 + $0xa9] sm:$0xff]
        %v2406 = vld [vmem:[%s2085 + $0xb1] sm:$0xff]
        %v2407 = vld [vmem:[%s2085 + $0xc1] sm:$0xff]
        %v2408 = vld [vmem:[%s2085 + $0xc9] sm:$0xff]
        %v2409 = vld [vmem:[%s2085 + $0xd9] sm:$0xff]
        %v2410 = vld [vmem:[%s2085 + $0xe1] sm:$0xff]
        %v2411 = vld [vmem:[%s2085 + $0xf1] sm:$0xff]
        %v2412 = vld [vmem:[%s2085 + $0xf9] sm:$0xff]
        %v2413 = vld [vmem:[%s2085 + $0x109] sm:$0xff]
        %v2414 = vld [vmem:[%s2085 + $0x111] sm:$0xff]
        %v2415 = vld [vmem:[%s2085 + $0x121] sm:$0xff]
        %v2416 = vld [vmem:[%s2085 + $0x129] sm:$0xff]
        %v2417 = vld [vmem:[%s2085 + $0x139] sm:$0xff]
        %v2418 = vld [vmem:[%s2085 + $0x141] sm:$0xff]
        %v2419 = vld [vmem:[%s2085 + $0x151] sm:$0xff]
        %v2420 = vld [vmem:[%s2085 + $0x159] sm:$0xff]
        %v2421 = vld [vmem:[%s2085 + $0x169] sm:$0xff]
        %v2422 = vld [vmem:[%s2085 + $0x171] sm:$0xff]
        %v2423 = vld [vmem:[#allocation6 + $0x380] sm:$0xff]
        %v2424 = vld [vmem:[#allocation6 + $0x388] sm:$0xff]
        %v2425 = vld [vmem:[#allocation6 + $0x390] sm:$0xff]
        %v2426 = vld [vmem:[#allocation6 + $0x398] sm:$0xff]
        %v2427 = vld [vmem:[#allocation6 + $0x3a0] sm:$0xff]
        %v2428 = vld [vmem:[#allocation6 + $0x3a8] sm:$0xff]
        %v2429 = vld [vmem:[#allocation6 + $0x3b0] sm:$0xff]
        %v2430 = vld [vmem:[#allocation6 + $0x3b8] sm:$0xff]
        %v2431 = vld [vmem:[#allocation6 + $0x3c0] sm:$0xff]
        %v2432 = vld [vmem:[#allocation6 + $0x3c8] sm:$0xff]
        %v2433 = vld [vmem:[#allocation6 + $0x3d0] sm:$0xff]
        %v2434 = vld [vmem:[#allocation6 + $0x3d8] sm:$0xff]
        %v2435 = vld [vmem:[#allocation6 + $0x3e0] sm:$0xff]
        %v2436 = vld [vmem:[#allocation6 + $0x3e8] sm:$0xff]
        %v2437 = vld [vmem:[#allocation6 + $0x3f0] sm:$0xff]
        %v2438 = vld [vmem:[#allocation6 + $0x3f8] sm:$0xff]
        %2439 = vmatprep.subr.mxu0 0.0
        %2440 = vmatpush1.msra.mxu0 %v2438
        %2441 = vmatprep.subr.mxu0 0.0
        %2442 = vmatpush1.msra.mxu0 %v2437
        %2443 = vmatprep.subr.mxu0 0.0
        %2444 = vmatpush1.msra.mxu0 %v2436
        %2445 = vmatprep.subr.mxu0 0.0
        %2446 = vmatpush1.msra.mxu0 %v2435
        %2447 = vmatprep.subr.mxu0 0.0
        %2448 = vmatpush1.msra.mxu0 %v2434
        %2449 = vmatprep.subr.mxu0 0.0
        %2450 = vmatpush1.msra.mxu0 %v2433
        %2451 = vmatprep.subr.mxu0 0.0
        %2452 = vmatpush1.msra.mxu0 %v2432
        %2453 = vmatprep.subr.mxu0 0.0
        %2454 = vmatpush1.msra.mxu0 %v2431
        %2455 = vmatprep.subr.mxu0 0.0
        %2456 = vmatpush1.msra.mxu0 %v2430
        %2457 = vmatprep.subr.mxu0 0.0
        %2458 = vmatpush1.msra.mxu0 %v2429
        %2459 = vmatprep.subr.mxu0 0.0
        %2460 = vmatpush1.msra.mxu0 %v2428
        %2461 = vmatprep.subr.mxu0 0.0
        %2462 = vmatpush1.msra.mxu0 %v2427
        %2463 = vmatprep.subr.mxu0 0.0
        %2464 = vmatpush1.msra.mxu0 %v2426
        %2465 = vmatprep.subr.mxu0 0.0
        %2466 = vmatpush1.msra.mxu0 %v2425
        %2467 = vmatprep.subr.mxu0 0.0
        %2468 = vmatpush1.msra.mxu0 %v2424
        %2469 = vmatprep.subr.mxu0 0.0
        %2470 = vmatpush1.msra.mxu0 %v2423
        %2471 = vmatprep.subr.mxu0 0.0
        %2472 = vmatpush2.msra.mxu0 0.0
        %2473 = vmatprep.subr.mxu0 0.0
        %2474 = vmatpush2.msra.mxu0 0.0
        %2475 = vmatprep.subr.mxu0 0.0
        %2476 = vmatpush2.msra.mxu0 0.0
        %2477 = vmatprep.subr.mxu0 0.0
        %2478 = vmatpush2.msra.mxu0 0.0
        %2479 = vmatprep.subr.mxu0 0.0
        %2480 = vmatpush2.msra.mxu0 0.0
        %2481 = vmatprep.subr.mxu0 0.0
        %2482 = vmatpush2.msra.mxu0 0.0
        %2483 = vmatprep.subr.mxu0 0.0
        %2484 = vmatpush2.msra.mxu0 0.0
        %2485 = vmatprep.subr.mxu0 0.0
        %2486 = vmatpush2.msra.mxu0 0.0
        %2487 = vmatprep.subr.mxu0 0.0
        %2488 = vmatpush2.msra.mxu0 0.0
        %2489 = vmatprep.subr.mxu0 0.0
        %2490 = vmatpush2.msra.mxu0 0.0
        %2491 = vmatprep.subr.mxu0 0.0
        %2492 = vmatpush2.msra.mxu0 0.0
        %2493 = vmatprep.subr.mxu0 0.0
        %2494 = vmatpush2.msra.mxu0 0.0
        %2495 = vmatprep.subr.mxu0 0.0
        %2496 = vmatpush2.msra.mxu0 0.0
        %2497 = vmatprep.subr.mxu0 0.0
        %2498 = vmatpush2.msra.mxu0 0.0
        %2499 = vmatprep.subr.mxu0 0.0
        %2500 = vmatpush2.msra.mxu0 0.0
        %2501 = vmatprep.subr.mxu0 0.0
        %2502 = vmatpush2.msra.mxu0 0.0
        %2503 = vmatprep.mubr.f32.mxu0 0.0
        %2504 = vmatmul.mubr.f32.gmra.mxu0 %v2391
        %v2505 = vpop.f32.mrf.mxu0
        %v2506 = vadd.f32 0.0, %v2505
        %v2507 = vpop.f32.mrf.mxu0
        %2508 = vmatprep.mubr.f32.mxu0 0.0
        %2509 = vmatmul.mubr.f32.gmra.mxu0 %v2392
        %v2510 = vpop.f32.mrf.mxu0
        %v2511 = vadd.f32 0.0, %v2510
        %v2512 = vpop.f32.mrf.mxu0
        %2513 = vmatprep.mubr.f32.mxu0 0.0
        %2514 = vmatmul.mubr.f32.gmra.mxu0 %v2393
        %v2515 = vpop.f32.mrf.mxu0
        %v2516 = vadd.f32 0.0, %v2515
        %v2517 = vpop.f32.mrf.mxu0
        %2518 = vmatprep.mubr.f32.mxu0 0.0
        %2519 = vmatmul.mubr.f32.gmra.mxu0 %v2394
        %v2520 = vpop.f32.mrf.mxu0
        %v2521 = vadd.f32 0.0, %v2520
        %v2522 = vpop.f32.mrf.mxu0
        %2523 = vmatprep.mubr.f32.mxu0 0.0
        %2524 = vmatmul.mubr.f32.gmra.mxu0 %v2395
        %v2525 = vpop.f32.mrf.mxu0
        %v2526 = vadd.f32 0.0, %v2525
        %v2527 = vpop.f32.mrf.mxu0
        %2528 = vmatprep.mubr.f32.mxu0 0.0
        %2529 = vmatmul.mubr.f32.gmra.mxu0 %v2396
        %v2530 = vpop.f32.mrf.mxu0
        %v2531 = vadd.f32 0.0, %v2530
        %v2532 = vpop.f32.mrf.mxu0
        %2533 = vmatprep.mubr.f32.mxu0 0.0
        %2534 = vmatmul.mubr.f32.gmra.mxu0 %v2397
        %v2535 = vpop.f32.mrf.mxu0
        %v2536 = vadd.f32 0.0, %v2535
        %v2537 = vpop.f32.mrf.mxu0
        %2538 = vmatprep.mubr.f32.mxu0 0.0
        %2539 = vmatmul.mubr.f32.gmra.mxu0 %v2398
        %v2540 = vpop.f32.mrf.mxu0
        %v2541 = vadd.f32 0.0, %v2540
        %v2542 = vpop.f32.mrf.mxu0
        %2543 = vmatprep.mubr.f32.mxu0 0.0
        %2544 = vmatmul.mubr.f32.gmra.mxu0 %v2399
        %v2545 = vpop.f32.mrf.mxu0
        %v2546 = vadd.f32 0.0, %v2545
        %v2547 = vpop.f32.mrf.mxu0
        %2548 = vmatprep.mubr.f32.mxu0 0.0
        %2549 = vmatmul.mubr.f32.gmra.mxu0 %v2400
        %v2550 = vpop.f32.mrf.mxu0
        %v2551 = vadd.f32 0.0, %v2550
        %v2552 = vpop.f32.mrf.mxu0
        %2553 = vmatprep.mubr.f32.mxu0 0.0
        %2554 = vmatmul.mubr.f32.gmra.mxu0 %v2401
        %v2555 = vpop.f32.mrf.mxu0
        %v2556 = vadd.f32 0.0, %v2555
        %v2557 = vpop.f32.mrf.mxu0
        %2558 = vmatprep.mubr.f32.mxu0 0.0
        %2559 = vmatmul.mubr.f32.gmra.mxu0 %v2402
        %v2560 = vpop.f32.mrf.mxu0
        %v2561 = vadd.f32 0.0, %v2560
        %v2562 = vpop.f32.mrf.mxu0
        %2563 = vmatprep.mubr.f32.mxu0 0.0
        %2564 = vmatmul.mubr.f32.gmra.mxu0 %v2403
        %v2565 = vpop.f32.mrf.mxu0
        %v2566 = vadd.f32 0.0, %v2565
        %v2567 = vpop.f32.mrf.mxu0
        %2568 = vmatprep.mubr.f32.mxu0 0.0
        %2569 = vmatmul.mubr.f32.gmra.mxu0 %v2404
        %v2570 = vpop.f32.mrf.mxu0
        %v2571 = vadd.f32 0.0, %v2570
        %v2572 = vpop.f32.mrf.mxu0
        %2573 = vmatprep.mubr.f32.mxu0 0.0
        %2574 = vmatmul.mubr.f32.gmra.mxu0 %v2405
        %v2575 = vpop.f32.mrf.mxu0
        %v2576 = vadd.f32 0.0, %v2575
        %v2577 = vpop.f32.mrf.mxu0
        %2578 = vmatprep.mubr.f32.mxu0 0.0
        %2579 = vmatmul.mubr.f32.gmra.mxu0 %v2406
        %v2580 = vpop.f32.mrf.mxu0
        %v2581 = vadd.f32 0.0, %v2580
        %v2582 = vpop.f32.mrf.mxu0
        %2583 = vmatprep.mubr.f32.mxu0 0.0
        %2584 = vmatmul.mubr.f32.gmra.mxu0 %v2407
        %v2585 = vpop.f32.mrf.mxu0
        %v2586 = vadd.f32 0.0, %v2585
        %v2587 = vpop.f32.mrf.mxu0
        %2588 = vmatprep.mubr.f32.mxu0 0.0
        %2589 = vmatmul.mubr.f32.gmra.mxu0 %v2408
        %v2590 = vpop.f32.mrf.mxu0
        %v2591 = vadd.f32 0.0, %v2590
        %v2592 = vpop.f32.mrf.mxu0
        %2593 = vmatprep.mubr.f32.mxu0 0.0
        %2594 = vmatmul.mubr.f32.gmra.mxu0 %v2409
        %v2595 = vpop.f32.mrf.mxu0
        %v2596 = vadd.f32 0.0, %v2595
        %v2597 = vpop.f32.mrf.mxu0
        %2598 = vmatprep.mubr.f32.mxu0 0.0
        %2599 = vmatmul.mubr.f32.gmra.mxu0 %v2410
        %v2600 = vpop.f32.mrf.mxu0
        %v2601 = vadd.f32 0.0, %v2600
        %v2602 = vpop.f32.mrf.mxu0
        %2603 = vmatprep.mubr.f32.mxu0 0.0
        %2604 = vmatmul.mubr.f32.gmra.mxu0 %v2411
        %v2605 = vpop.f32.mrf.mxu0
        %v2606 = vadd.f32 0.0, %v2605
        %v2607 = vpop.f32.mrf.mxu0
        %2608 = vmatprep.mubr.f32.mxu0 0.0
        %2609 = vmatmul.mubr.f32.gmra.mxu0 %v2412
        %v2610 = vpop.f32.mrf.mxu0
        %v2611 = vadd.f32 0.0, %v2610
        %v2612 = vpop.f32.mrf.mxu0
        %2613 = vmatprep.mubr.f32.mxu0 0.0
        %2614 = vmatmul.mubr.f32.gmra.mxu0 %v2413
        %v2615 = vpop.f32.mrf.mxu0
        %v2616 = vadd.f32 0.0, %v2615
        %v2617 = vpop.f32.mrf.mxu0
        %2618 = vmatprep.mubr.f32.mxu0 0.0
        %2619 = vmatmul.mubr.f32.gmra.mxu0 %v2414
        %v2620 = vpop.f32.mrf.mxu0
        %v2621 = vadd.f32 0.0, %v2620
        %v2622 = vpop.f32.mrf.mxu0
        %2623 = vmatprep.mubr.f32.mxu0 0.0
        %2624 = vmatmul.mubr.f32.gmra.mxu0 %v2415
        %v2625 = vpop.f32.mrf.mxu0
        %v2626 = vadd.f32 0.0, %v2625
        %v2627 = vpop.f32.mrf.mxu0
        %2628 = vmatprep.mubr.f32.mxu0 0.0
        %2629 = vmatmul.mubr.f32.gmra.mxu0 %v2416
        %v2630 = vpop.f32.mrf.mxu0
        %v2631 = vadd.f32 0.0, %v2630
        %v2632 = vpop.f32.mrf.mxu0
        %2633 = vmatprep.mubr.f32.mxu0 0.0
        %2634 = vmatmul.mubr.f32.gmra.mxu0 %v2417
        %v2635 = vpop.f32.mrf.mxu0
        %v2636 = vadd.f32 0.0, %v2635
        %v2637 = vpop.f32.mrf.mxu0
        %2638 = vmatprep.mubr.f32.mxu0 0.0
        %2639 = vmatmul.mubr.f32.gmra.mxu0 %v2418
        %v2640 = vpop.f32.mrf.mxu0
        %v2641 = vadd.f32 0.0, %v2640
        %v2642 = vpop.f32.mrf.mxu0
        %2643 = vmatprep.mubr.f32.mxu0 0.0
        %2644 = vmatmul.mubr.f32.gmra.mxu0 %v2419
        %v2645 = vpop.f32.mrf.mxu0
        %v2646 = vadd.f32 0.0, %v2645
        %v2647 = vpop.f32.mrf.mxu0
        %2648 = vmatprep.mubr.f32.mxu0 0.0
        %2649 = vmatmul.mubr.f32.gmra.mxu0 %v2420
        %v2650 = vpop.f32.mrf.mxu0
        %v2651 = vadd.f32 0.0, %v2650
        %v2652 = vpop.f32.mrf.mxu0
        %2653 = vmatprep.mubr.f32.mxu0 0.0
        %2654 = vmatmul.mubr.f32.gmra.mxu0 %v2421
        %v2655 = vpop.f32.mrf.mxu0
        %v2656 = vadd.f32 0.0, %v2655
        %v2657 = vpop.f32.mrf.mxu0
        %2658 = vmatprep.mubr.f32.mxu0 0.0
        %2659 = vmatmul.mubr.f32.gmra.mxu0 %v2422
        %v2660 = vpop.f32.mrf.mxu0
        %v2661 = vadd.f32 0.0, %v2660
        %v2662 = vpop.f32.mrf.mxu0
        %2663 = vdwg.mxu0
        %v2664 = vadd.f32 %v2359, %v2506
        %v2665 = vadd.f32 %v2360, %v2511
        %v2666 = vadd.f32 %v2361, %v2516
        %v2667 = vadd.f32 %v2362, %v2521
        %v2668 = vadd.f32 %v2363, %v2526
        %v2669 = vadd.f32 %v2364, %v2531
        %v2670 = vadd.f32 %v2365, %v2536
        %v2671 = vadd.f32 %v2366, %v2541
        %v2672 = vadd.f32 %v2367, %v2546
        %v2673 = vadd.f32 %v2368, %v2551
        %v2674 = vadd.f32 %v2369, %v2556
        %v2675 = vadd.f32 %v2370, %v2561
        %v2676 = vadd.f32 %v2371, %v2566
        %v2677 = vadd.f32 %v2372, %v2571
        %v2678 = vadd.f32 %v2373, %v2576
        %v2679 = vadd.f32 %v2374, %v2581
        %v2680 = vadd.f32 %v2375, %v2586
        %v2681 = vadd.f32 %v2376, %v2591
        %v2682 = vadd.f32 %v2377, %v2596
        %v2683 = vadd.f32 %v2378, %v2601
        %v2684 = vadd.f32 %v2379, %v2606
        %v2685 = vadd.f32 %v2380, %v2611
        %v2686 = vadd.f32 %v2381, %v2616
        %v2687 = vadd.f32 %v2382, %v2621
        %v2688 = vadd.f32 %v2383, %v2626
        %v2689 = vadd.f32 %v2384, %v2631
        %v2690 = vadd.f32 %v2385, %v2636
        %v2691 = vadd.f32 %v2386, %v2641
        %v2692 = vadd.f32 %v2387, %v2646
        %v2693 = vadd.f32 %v2388, %v2651
        %v2694 = vadd.f32 %v2389, %v2656
        %v2695 = vadd.f32 %v2390, %v2661
        %v2696 = vld [vmem:[%s2085 + $0x2] sm:$0xff]
        %v2697 = vld [vmem:[%s2085 + $0xa] sm:$0xff]
        %v2698 = vld [vmem:[%s2085 + $0x1a] sm:$0xff]
        %v2699 = vld [vmem:[%s2085 + $0x22] sm:$0xff]
        %v2700 = vld [vmem:[%s2085 + $0x32] sm:$0xff]
        %v2701 = vld [vmem:[%s2085 + $0x3a] sm:$0xff]
        %v2702 = vld [vmem:[%s2085 + $0x4a] sm:$0xff]
        %v2703 = vld [vmem:[%s2085 + $0x52] sm:$0xff]
        %v2704 = vld [vmem:[%s2085 + $0x62] sm:$0xff]
        %v2705 = vld [vmem:[%s2085 + $0x6a] sm:$0xff]
        %v2706 = vld [vmem:[%s2085 + $0x7a] sm:$0xff]
        %v2707 = vld [vmem:[%s2085 + $0x82] sm:$0xff]
        %v2708 = vld [vmem:[%s2085 + $0x92] sm:$0xff]
        %v2709 = vld [vmem:[%s2085 + $0x9a] sm:$0xff]
        %v2710 = vld [vmem:[%s2085 + $0xaa] sm:$0xff]
        %v2711 = vld [vmem:[%s2085 + $0xb2] sm:$0xff]
        %v2712 = vld [vmem:[%s2085 + $0xc2] sm:$0xff]
        %v2713 = vld [vmem:[%s2085 + $0xca] sm:$0xff]
        %v2714 = vld [vmem:[%s2085 + $0xda] sm:$0xff]
        %v2715 = vld [vmem:[%s2085 + $0xe2] sm:$0xff]
        %v2716 = vld [vmem:[%s2085 + $0xf2] sm:$0xff]
        %v2717 = vld [vmem:[%s2085 + $0xfa] sm:$0xff]
        %v2718 = vld [vmem:[%s2085 + $0x10a] sm:$0xff]
        %v2719 = vld [vmem:[%s2085 + $0x112] sm:$0xff]
        %v2720 = vld [vmem:[%s2085 + $0x122] sm:$0xff]
        %v2721 = vld [vmem:[%s2085 + $0x12a] sm:$0xff]
        %v2722 = vld [vmem:[%s2085 + $0x13a] sm:$0xff]
        %v2723 = vld [vmem:[%s2085 + $0x142] sm:$0xff]
        %v2724 = vld [vmem:[%s2085 + $0x152] sm:$0xff]
        %v2725 = vld [vmem:[%s2085 + $0x15a] sm:$0xff]
        %v2726 = vld [vmem:[%s2085 + $0x16a] sm:$0xff]
        %v2727 = vld [vmem:[%s2085 + $0x172] sm:$0xff]
        %v2728 = vld [vmem:[#allocation6 + $0x400] sm:$0xff]
        %v2729 = vld [vmem:[#allocation6 + $0x408] sm:$0xff]
        %v2730 = vld [vmem:[#allocation6 + $0x410] sm:$0xff]
        %v2731 = vld [vmem:[#allocation6 + $0x418] sm:$0xff]
        %v2732 = vld [vmem:[#allocation6 + $0x420] sm:$0xff]
        %v2733 = vld [vmem:[#allocation6 + $0x428] sm:$0xff]
        %v2734 = vld [vmem:[#allocation6 + $0x430] sm:$0xff]
        %v2735 = vld [vmem:[#allocation6 + $0x438] sm:$0xff]
        %v2736 = vld [vmem:[#allocation6 + $0x440] sm:$0xff]
        %v2737 = vld [vmem:[#allocation6 + $0x448] sm:$0xff]
        %v2738 = vld [vmem:[#allocation6 + $0x450] sm:$0xff]
        %v2739 = vld [vmem:[#allocation6 + $0x458] sm:$0xff]
        %v2740 = vld [vmem:[#allocation6 + $0x460] sm:$0xff]
        %v2741 = vld [vmem:[#allocation6 + $0x468] sm:$0xff]
        %v2742 = vld [vmem:[#allocation6 + $0x470] sm:$0xff]
        %v2743 = vld [vmem:[#allocation6 + $0x478] sm:$0xff]
        %2744 = vmatprep.subr.mxu0 0.0
        %2745 = vmatpush1.msra.mxu0 %v2743
        %2746 = vmatprep.subr.mxu0 0.0
        %2747 = vmatpush1.msra.mxu0 %v2742
        %2748 = vmatprep.subr.mxu0 0.0
        %2749 = vmatpush1.msra.mxu0 %v2741
        %2750 = vmatprep.subr.mxu0 0.0
        %2751 = vmatpush1.msra.mxu0 %v2740
        %2752 = vmatprep.subr.mxu0 0.0
        %2753 = vmatpush1.msra.mxu0 %v2739
        %2754 = vmatprep.subr.mxu0 0.0
        %2755 = vmatpush1.msra.mxu0 %v2738
        %2756 = vmatprep.subr.mxu0 0.0
        %2757 = vmatpush1.msra.mxu0 %v2737
        %2758 = vmatprep.subr.mxu0 0.0
        %2759 = vmatpush1.msra.mxu0 %v2736
        %2760 = vmatprep.subr.mxu0 0.0
        %2761 = vmatpush1.msra.mxu0 %v2735
        %2762 = vmatprep.subr.mxu0 0.0
        %2763 = vmatpush1.msra.mxu0 %v2734
        %2764 = vmatprep.subr.mxu0 0.0
        %2765 = vmatpush1.msra.mxu0 %v2733
        %2766 = vmatprep.subr.mxu0 0.0
        %2767 = vmatpush1.msra.mxu0 %v2732
        %2768 = vmatprep.subr.mxu0 0.0
        %2769 = vmatpush1.msra.mxu0 %v2731
        %2770 = vmatprep.subr.mxu0 0.0
        %2771 = vmatpush1.msra.mxu0 %v2730
        %2772 = vmatprep.subr.mxu0 0.0
        %2773 = vmatpush1.msra.mxu0 %v2729
        %2774 = vmatprep.subr.mxu0 0.0
        %2775 = vmatpush1.msra.mxu0 %v2728
        %2776 = vmatprep.subr.mxu0 0.0
        %2777 = vmatpush2.msra.mxu0 0.0
        %2778 = vmatprep.subr.mxu0 0.0
        %2779 = vmatpush2.msra.mxu0 0.0
        %2780 = vmatprep.subr.mxu0 0.0
        %2781 = vmatpush2.msra.mxu0 0.0
        %2782 = vmatprep.subr.mxu0 0.0
        %2783 = vmatpush2.msra.mxu0 0.0
        %2784 = vmatprep.subr.mxu0 0.0
        %2785 = vmatpush2.msra.mxu0 0.0
        %2786 = vmatprep.subr.mxu0 0.0
        %2787 = vmatpush2.msra.mxu0 0.0
        %2788 = vmatprep.subr.mxu0 0.0
        %2789 = vmatpush2.msra.mxu0 0.0
        %2790 = vmatprep.subr.mxu0 0.0
        %2791 = vmatpush2.msra.mxu0 0.0
        %2792 = vmatprep.subr.mxu0 0.0
        %2793 = vmatpush2.msra.mxu0 0.0
        %2794 = vmatprep.subr.mxu0 0.0
        %2795 = vmatpush2.msra.mxu0 0.0
        %2796 = vmatprep.subr.mxu0 0.0
        %2797 = vmatpush2.msra.mxu0 0.0
        %2798 = vmatprep.subr.mxu0 0.0
        %2799 = vmatpush2.msra.mxu0 0.0
        %2800 = vmatprep.subr.mxu0 0.0
        %2801 = vmatpush2.msra.mxu0 0.0
        %2802 = vmatprep.subr.mxu0 0.0
        %2803 = vmatpush2.msra.mxu0 0.0
        %2804 = vmatprep.subr.mxu0 0.0
        %2805 = vmatpush2.msra.mxu0 0.0
        %2806 = vmatprep.subr.mxu0 0.0
        %2807 = vmatpush2.msra.mxu0 0.0
        %2808 = vmatprep.mubr.f32.mxu0 0.0
        %2809 = vmatmul.mubr.f32.gmra.mxu0 %v2696
        %v2810 = vpop.f32.mrf.mxu0
        %v2811 = vadd.f32 0.0, %v2810
        %v2812 = vpop.f32.mrf.mxu0
        %2813 = vmatprep.mubr.f32.mxu0 0.0
        %2814 = vmatmul.mubr.f32.gmra.mxu0 %v2697
        %v2815 = vpop.f32.mrf.mxu0
        %v2816 = vadd.f32 0.0, %v2815
        %v2817 = vpop.f32.mrf.mxu0
        %2818 = vmatprep.mubr.f32.mxu0 0.0
        %2819 = vmatmul.mubr.f32.gmra.mxu0 %v2698
        %v2820 = vpop.f32.mrf.mxu0
        %v2821 = vadd.f32 0.0, %v2820
        %v2822 = vpop.f32.mrf.mxu0
        %2823 = vmatprep.mubr.f32.mxu0 0.0
        %2824 = vmatmul.mubr.f32.gmra.mxu0 %v2699
        %v2825 = vpop.f32.mrf.mxu0
        %v2826 = vadd.f32 0.0, %v2825
        %v2827 = vpop.f32.mrf.mxu0
        %2828 = vmatprep.mubr.f32.mxu0 0.0
        %2829 = vmatmul.mubr.f32.gmra.mxu0 %v2700
        %v2830 = vpop.f32.mrf.mxu0
        %v2831 = vadd.f32 0.0, %v2830
        %v2832 = vpop.f32.mrf.mxu0
        %2833 = vmatprep.mubr.f32.mxu0 0.0
        %2834 = vmatmul.mubr.f32.gmra.mxu0 %v2701
        %v2835 = vpop.f32.mrf.mxu0
        %v2836 = vadd.f32 0.0, %v2835
        %v2837 = vpop.f32.mrf.mxu0
        %2838 = vmatprep.mubr.f32.mxu0 0.0
        %2839 = vmatmul.mubr.f32.gmra.mxu0 %v2702
        %v2840 = vpop.f32.mrf.mxu0
        %v2841 = vadd.f32 0.0, %v2840
        %v2842 = vpop.f32.mrf.mxu0
        %2843 = vmatprep.mubr.f32.mxu0 0.0
        %2844 = vmatmul.mubr.f32.gmra.mxu0 %v2703
        %v2845 = vpop.f32.mrf.mxu0
        %v2846 = vadd.f32 0.0, %v2845
        %v2847 = vpop.f32.mrf.mxu0
        %2848 = vmatprep.mubr.f32.mxu0 0.0
        %2849 = vmatmul.mubr.f32.gmra.mxu0 %v2704
        %v2850 = vpop.f32.mrf.mxu0
        %v2851 = vadd.f32 0.0, %v2850
        %v2852 = vpop.f32.mrf.mxu0
        %2853 = vmatprep.mubr.f32.mxu0 0.0
        %2854 = vmatmul.mubr.f32.gmra.mxu0 %v2705
        %v2855 = vpop.f32.mrf.mxu0
        %v2856 = vadd.f32 0.0, %v2855
        %v2857 = vpop.f32.mrf.mxu0
        %2858 = vmatprep.mubr.f32.mxu0 0.0
        %2859 = vmatmul.mubr.f32.gmra.mxu0 %v2706
        %v2860 = vpop.f32.mrf.mxu0
        %v2861 = vadd.f32 0.0, %v2860
        %v2862 = vpop.f32.mrf.mxu0
        %2863 = vmatprep.mubr.f32.mxu0 0.0
        %2864 = vmatmul.mubr.f32.gmra.mxu0 %v2707
        %v2865 = vpop.f32.mrf.mxu0
        %v2866 = vadd.f32 0.0, %v2865
        %v2867 = vpop.f32.mrf.mxu0
        %2868 = vmatprep.mubr.f32.mxu0 0.0
        %2869 = vmatmul.mubr.f32.gmra.mxu0 %v2708
        %v2870 = vpop.f32.mrf.mxu0
        %v2871 = vadd.f32 0.0, %v2870
        %v2872 = vpop.f32.mrf.mxu0
        %2873 = vmatprep.mubr.f32.mxu0 0.0
        %2874 = vmatmul.mubr.f32.gmra.mxu0 %v2709
        %v2875 = vpop.f32.mrf.mxu0
        %v2876 = vadd.f32 0.0, %v2875
        %v2877 = vpop.f32.mrf.mxu0
        %2878 = vmatprep.mubr.f32.mxu0 0.0
        %2879 = vmatmul.mubr.f32.gmra.mxu0 %v2710
        %v2880 = vpop.f32.mrf.mxu0
        %v2881 = vadd.f32 0.0, %v2880
        %v2882 = vpop.f32.mrf.mxu0
        %2883 = vmatprep.mubr.f32.mxu0 0.0
        %2884 = vmatmul.mubr.f32.gmra.mxu0 %v2711
        %v2885 = vpop.f32.mrf.mxu0
        %v2886 = vadd.f32 0.0, %v2885
        %v2887 = vpop.f32.mrf.mxu0
        %2888 = vmatprep.mubr.f32.mxu0 0.0
        %2889 = vmatmul.mubr.f32.gmra.mxu0 %v2712
        %v2890 = vpop.f32.mrf.mxu0
        %v2891 = vadd.f32 0.0, %v2890
        %v2892 = vpop.f32.mrf.mxu0
        %2893 = vmatprep.mubr.f32.mxu0 0.0
        %2894 = vmatmul.mubr.f32.gmra.mxu0 %v2713
        %v2895 = vpop.f32.mrf.mxu0
        %v2896 = vadd.f32 0.0, %v2895
        %v2897 = vpop.f32.mrf.mxu0
        %2898 = vmatprep.mubr.f32.mxu0 0.0
        %2899 = vmatmul.mubr.f32.gmra.mxu0 %v2714
        %v2900 = vpop.f32.mrf.mxu0
        %v2901 = vadd.f32 0.0, %v2900
        %v2902 = vpop.f32.mrf.mxu0
        %2903 = vmatprep.mubr.f32.mxu0 0.0
        %2904 = vmatmul.mubr.f32.gmra.mxu0 %v2715
        %v2905 = vpop.f32.mrf.mxu0
        %v2906 = vadd.f32 0.0, %v2905
        %v2907 = vpop.f32.mrf.mxu0
        %2908 = vmatprep.mubr.f32.mxu0 0.0
        %2909 = vmatmul.mubr.f32.gmra.mxu0 %v2716
        %v2910 = vpop.f32.mrf.mxu0
        %v2911 = vadd.f32 0.0, %v2910
        %v2912 = vpop.f32.mrf.mxu0
        %2913 = vmatprep.mubr.f32.mxu0 0.0
        %2914 = vmatmul.mubr.f32.gmra.mxu0 %v2717
        %v2915 = vpop.f32.mrf.mxu0
        %v2916 = vadd.f32 0.0, %v2915
        %v2917 = vpop.f32.mrf.mxu0
        %2918 = vmatprep.mubr.f32.mxu0 0.0
        %2919 = vmatmul.mubr.f32.gmra.mxu0 %v2718
        %v2920 = vpop.f32.mrf.mxu0
        %v2921 = vadd.f32 0.0, %v2920
        %v2922 = vpop.f32.mrf.mxu0
        %2923 = vmatprep.mubr.f32.mxu0 0.0
        %2924 = vmatmul.mubr.f32.gmra.mxu0 %v2719
        %v2925 = vpop.f32.mrf.mxu0
        %v2926 = vadd.f32 0.0, %v2925
        %v2927 = vpop.f32.mrf.mxu0
        %2928 = vmatprep.mubr.f32.mxu0 0.0
        %2929 = vmatmul.mubr.f32.gmra.mxu0 %v2720
        %v2930 = vpop.f32.mrf.mxu0
        %v2931 = vadd.f32 0.0, %v2930
        %v2932 = vpop.f32.mrf.mxu0
        %2933 = vmatprep.mubr.f32.mxu0 0.0
        %2934 = vmatmul.mubr.f32.gmra.mxu0 %v2721
        %v2935 = vpop.f32.mrf.mxu0
        %v2936 = vadd.f32 0.0, %v2935
        %v2937 = vpop.f32.mrf.mxu0
        %2938 = vmatprep.mubr.f32.mxu0 0.0
        %2939 = vmatmul.mubr.f32.gmra.mxu0 %v2722
        %v2940 = vpop.f32.mrf.mxu0
        %v2941 = vadd.f32 0.0, %v2940
        %v2942 = vpop.f32.mrf.mxu0
        %2943 = vmatprep.mubr.f32.mxu0 0.0
        %2944 = vmatmul.mubr.f32.gmra.mxu0 %v2723
        %v2945 = vpop.f32.mrf.mxu0
        %v2946 = vadd.f32 0.0, %v2945
        %v2947 = vpop.f32.mrf.mxu0
        %2948 = vmatprep.mubr.f32.mxu0 0.0
        %2949 = vmatmul.mubr.f32.gmra.mxu0 %v2724
        %v2950 = vpop.f32.mrf.mxu0
        %v2951 = vadd.f32 0.0, %v2950
        %v2952 = vpop.f32.mrf.mxu0
        %2953 = vmatprep.mubr.f32.mxu0 0.0
        %2954 = vmatmul.mubr.f32.gmra.mxu0 %v2725
        %v2955 = vpop.f32.mrf.mxu0
        %v2956 = vadd.f32 0.0, %v2955
        %v2957 = vpop.f32.mrf.mxu0
        %2958 = vmatprep.mubr.f32.mxu0 0.0
        %2959 = vmatmul.mubr.f32.gmra.mxu0 %v2726
        %v2960 = vpop.f32.mrf.mxu0
        %v2961 = vadd.f32 0.0, %v2960
        %v2962 = vpop.f32.mrf.mxu0
        %2963 = vmatprep.mubr.f32.mxu0 0.0
        %2964 = vmatmul.mubr.f32.gmra.mxu0 %v2727
        %v2965 = vpop.f32.mrf.mxu0
        %v2966 = vadd.f32 0.0, %v2965
        %v2967 = vpop.f32.mrf.mxu0
        %2968 = vdwg.mxu0
        %v2969 = vadd.f32 %v2664, %v2811
        %v2970 = vadd.f32 %v2665, %v2816
        %v2971 = vadd.f32 %v2666, %v2821
        %v2972 = vadd.f32 %v2667, %v2826
        %v2973 = vadd.f32 %v2668, %v2831
        %v2974 = vadd.f32 %v2669, %v2836
        %v2975 = vadd.f32 %v2670, %v2841
        %v2976 = vadd.f32 %v2671, %v2846
        %v2977 = vadd.f32 %v2672, %v2851
        %v2978 = vadd.f32 %v2673, %v2856
        %v2979 = vadd.f32 %v2674, %v2861
        %v2980 = vadd.f32 %v2675, %v2866
        %v2981 = vadd.f32 %v2676, %v2871
        %v2982 = vadd.f32 %v2677, %v2876
        %v2983 = vadd.f32 %v2678, %v2881
        %v2984 = vadd.f32 %v2679, %v2886
        %v2985 = vadd.f32 %v2680, %v2891
        %v2986 = vadd.f32 %v2681, %v2896
        %v2987 = vadd.f32 %v2682, %v2901
        %v2988 = vadd.f32 %v2683, %v2906
        %v2989 = vadd.f32 %v2684, %v2911
        %v2990 = vadd.f32 %v2685, %v2916
        %v2991 = vadd.f32 %v2686, %v2921
        %v2992 = vadd.f32 %v2687, %v2926
        %v2993 = vadd.f32 %v2688, %v2931
        %v2994 = vadd.f32 %v2689, %v2936
        %v2995 = vadd.f32 %v2690, %v2941
        %v2996 = vadd.f32 %v2691, %v2946
        %v2997 = vadd.f32 %v2692, %v2951
        %v2998 = vadd.f32 %v2693, %v2956
        %v2999 = vadd.f32 %v2694, %v2961
        %v3000 = vadd.f32 %v2695, %v2966
        %3001 = vst [vmem:[%s207] sm:$0xff] %v2969
        %3002 = vst [vmem:[%s207 + $0x8] sm:$0xff] %v2970
        %3003 = vst [vmem:[%s207 + $0x10] sm:$0xff] %v2971
        %3004 = vst [vmem:[%s207 + $0x18] sm:$0xff] %v2972
        %3005 = vst [vmem:[%s207 + $0x20] sm:$0xff] %v2973
        %3006 = vst [vmem:[%s207 + $0x28] sm:$0xff] %v2974
        %3007 = vst [vmem:[%s207 + $0x30] sm:$0xff] %v2975
        %3008 = vst [vmem:[%s207 + $0x38] sm:$0xff] %v2976
        %3009 = vst [vmem:[%s207 + $0x40] sm:$0xff] %v2977
        %3010 = vst [vmem:[%s207 + $0x48] sm:$0xff] %v2978
        %3011 = vst [vmem:[%s207 + $0x50] sm:$0xff] %v2979
        %3012 = vst [vmem:[%s207 + $0x58] sm:$0xff] %v2980
        %3013 = vst [vmem:[%s207 + $0x60] sm:$0xff] %v2981
        %3014 = vst [vmem:[%s207 + $0x68] sm:$0xff] %v2982
        %3015 = vst [vmem:[%s207 + $0x70] sm:$0xff] %v2983
        %3016 = vst [vmem:[%s207 + $0x78] sm:$0xff] %v2984
        %3017 = vst [vmem:[%s207 + $0x80] sm:$0xff] %v2985
        %3018 = vst [vmem:[%s207 + $0x88] sm:$0xff] %v2986
        %3019 = vst [vmem:[%s207 + $0x90] sm:$0xff] %v2987
        %3020 = vst [vmem:[%s207 + $0x98] sm:$0xff] %v2988
        %3021 = vst [vmem:[%s207 + $0xa0] sm:$0xff] %v2989
        %3022 = vst [vmem:[%s207 + $0xa8] sm:$0xff] %v2990
        %3023 = vst [vmem:[%s207 + $0xb0] sm:$0xff] %v2991
        %3024 = vst [vmem:[%s207 + $0xb8] sm:$0xff] %v2992
        %3025 = vst [vmem:[%s207 + $0xc0] sm:$0xff] %v2993
        %3026 = vst [vmem:[%s207 + $0xc8] sm:$0xff] %v2994
        %3027 = vst [vmem:[%s207 + $0xd0] sm:$0xff] %v2995
        %3028 = vst [vmem:[%s207 + $0xd8] sm:$0xff] %v2996
        %3029 = vst [vmem:[%s207 + $0xe0] sm:$0xff] %v2997
        %3030 = vst [vmem:[%s207 + $0xe8] sm:$0xff] %v2998
        %3031 = vst [vmem:[%s207 + $0xf0] sm:$0xff] %v2999
        %3032 = vst [vmem:[%s207 + $0xf8] sm:$0xff] %v3000
        %v3033 = vadd.f32 %v2969, %v2970
        %v3034 = vadd.f32 %v3033, %v2971
        %v3035 = vadd.f32 %v3034, %v2972
        %v3036 = vadd.f32 %v3035, %v2973
        %v3037 = vadd.f32 %v3036, %v2974
        %v3038 = vadd.f32 %v3037, %v2975
        %v3039 = vadd.f32 %v3038, %v2976
        %v3040 = vadd.f32 %v3039, %v2977
        %v3041 = vadd.f32 %v3040, %v2978
        %v3042 = vadd.f32 %v3041, %v2979
        %v3043 = vadd.f32 %v3042, %v2980
        %v3044 = vadd.f32 %v3043, %v2981
        %v3045 = vadd.f32 %v3044, %v2982
        %v3046 = vadd.f32 %v3045, %v2983
        %v3047 = vadd.f32 %v3046, %v2984
        %v3048 = vadd.f32 %v3047, %v2985
        %v3049 = vadd.f32 %v3048, %v2986
        %v3050 = vadd.f32 %v3049, %v2987
        %v3051 = vadd.f32 %v3050, %v2988
        %v3052 = vadd.f32 %v3051, %v2989
        %v3053 = vadd.f32 %v3052, %v2990
        %v3054 = vadd.f32 %v3053, %v2991
        %v3055 = vadd.f32 %v3054, %v2992
        %v3056 = vadd.f32 %v3055, %v2993
        %v3057 = vadd.f32 %v3056, %v2994
        %v3058 = vadd.f32 %v3057, %v2995
        %v3059 = vadd.f32 %v3058, %v2996
        %v3060 = vadd.f32 %v3059, %v2997
        %v3061 = vadd.f32 %v3060, %v2998
        %v3062 = vadd.f32 %v3061, %v2999
        %v3063 = vadd.f32 %v3062, %v3000
        %v3064 = vrot.slane %v3063, 4
        %v3065 = vadd.f32 %v3063, %v3064
        %v3066 = vrot.slane %v3065, 2
        %v3067 = vadd.f32 %v3065, %v3066
        %v3068 = vrot.slane %v3067, 1
        %v3069 = vadd.f32 %v3067, %v3068
        %3070 = vst [vmem:[%s214] sm:$0x1] %v3069
        %v3071 = vmul.f32 %v2969, %v2969
        %v3072 = vmul.f32 %v2970, %v2970
        %v3073 = vmul.f32 %v2971, %v2971
        %v3074 = vmul.f32 %v2972, %v2972
        %v3075 = vmul.f32 %v2973, %v2973
        %v3076 = vmul.f32 %v2974, %v2974
        %v3077 = vmul.f32 %v2975, %v2975
        %v3078 = vmul.f32 %v2976, %v2976
        %v3079 = vmul.f32 %v2977, %v2977
        %v3080 = vmul.f32 %v2978, %v2978
        %v3081 = vmul.f32 %v2979, %v2979
        %v3082 = vmul.f32 %v2980, %v2980
        %v3083 = vmul.f32 %v2981, %v2981
        %v3084 = vmul.f32 %v2982, %v2982
        %v3085 = vmul.f32 %v2983, %v2983
        %v3086 = vmul.f32 %v2984, %v2984
        %v3087 = vmul.f32 %v2985, %v2985
        %v3088 = vmul.f32 %v2986, %v2986
        %v3089 = vmul.f32 %v2987, %v2987
        %v3090 = vmul.f32 %v2988, %v2988
        %v3091 = vmul.f32 %v2989, %v2989
        %v3092 = vmul.f32 %v2990, %v2990
        %v3093 = vmul.f32 %v2991, %v2991
        %v3094 = vmul.f32 %v2992, %v2992
        %v3095 = vmul.f32 %v2993, %v2993
        %v3096 = vmul.f32 %v2994, %v2994
        %v3097 = vmul.f32 %v2995, %v2995
        %v3098 = vmul.f32 %v2996, %v2996
        %v3099 = vmul.f32 %v2997, %v2997
        %v3100 = vmul.f32 %v2998, %v2998
        %v3101 = vmul.f32 %v2999, %v2999
        %v3102 = vmul.f32 %v3000, %v3000
        %v3103 = vadd.f32 %v3071, %v3072
        %v3104 = vadd.f32 %v3103, %v3073
        %v3105 = vadd.f32 %v3104, %v3074
        %v3106 = vadd.f32 %v3105, %v3075
        %v3107 = vadd.f32 %v3106, %v3076
        %v3108 = vadd.f32 %v3107, %v3077
        %v3109 = vadd.f32 %v3108, %v3078
        %v3110 = vadd.f32 %v3109, %v3079
        %v3111 = vadd.f32 %v3110, %v3080
        %v3112 = vadd.f32 %v3111, %v3081
        %v3113 = vadd.f32 %v3112, %v3082
        %v3114 = vadd.f32 %v3113, %v3083
        %v3115 = vadd.f32 %v3114, %v3084
        %v3116 = vadd.f32 %v3115, %v3085
        %v3117 = vadd.f32 %v3116, %v3086
        %v3118 = vadd.f32 %v3117, %v3087
        %v3119 = vadd.f32 %v3118, %v3088
        %v3120 = vadd.f32 %v3119, %v3089
        %v3121 = vadd.f32 %v3120, %v3090
        %v3122 = vadd.f32 %v3121, %v3091
        %v3123 = vadd.f32 %v3122, %v3092
        %v3124 = vadd.f32 %v3123, %v3093
        %v3125 = vadd.f32 %v3124, %v3094
        %v3126 = vadd.f32 %v3125, %v3095
        %v3127 = vadd.f32 %v3126, %v3096
        %v3128 = vadd.f32 %v3127, %v3097
        %v3129 = vadd.f32 %v3128, %v3098
        %v3130 = vadd.f32 %v3129, %v3099
        %v3131 = vadd.f32 %v3130, %v3100
        %v3132 = vadd.f32 %v3131, %v3101
        %v3133 = vadd.f32 %v3132, %v3102
        %v3134 = vrot.slane %v3133, 4
        %v3135 = vadd.f32 %v3133, %v3134
        %v3136 = vrot.slane %v3135, 2
        %v3137 = vadd.f32 %v3135, %v3136
        %v3138 = vrot.slane %v3137, 1
        %v3139 = vadd.f32 %v3137, %v3138
        %3140 = vst [vmem:[%s214 + $0x1] sm:$0x1] %v3139
        %s3141 = sand.u32 %s80, 1
        %s3142 = scalar_lea.sflag [#allocation5], %s3141
        %s3143 = sand.u32 %s80, 1
        %s3144 = smul.addr %s3143, 256
        %s3145 = scalar_lea.vmem [#allocation8], %s3144
        %s3146 = sand.u32 %s106, 1
        %s3147 = scalar_lea.sflag [#allocation10], %s3146
        %s3148 = sand.u32 %s106, 1
        %s3149 = smul.addr %s3148, 2
        %s3150 = scalar_lea.vmem [#allocation9], %s3149
        // Predicated region
        $region37: #{tpu_custom_call.1} parent=27 // pred_check
          %p3151 = pneg %p90
        $region38: #{tpu_custom_call.1} parent=27 // pred_check_branch
          %3153 = sbr.rel (%p3151) target = $region40
        $region39: #{tpu_custom_call.1} parent=27 // pred_region
          %s3155 = ssub.s32 4096, 4096
          %3156 = vsyncadd %s3142, %s3155
          %s3157 = smul.addr %s25, 32
          %s3158 = smul.addr %s3157, 128
          %s3159 = scalar_lea.hbm %s2, %s3158
          %s3160 = sshll.u32 %s3145, 4
          %s3161 = int_to_ptr.vmem [resolvable:$true] %s3160
          %3166 = dma.vmem_to_hbm [thread:$0]  %s3161, 4096, %s3159, %s3142, 128, 128, 8
        $region40: #{tpu_custom_call.1} parent=27 // pred_fallthru
          _
        // Predicated region
        $region41: #{tpu_custom_call.1} parent=27 // pred_check
          %p3167 = pneg %p116
        $region42: #{tpu_custom_call.1} parent=27 // pred_check_branch
          %3169 = sbr.rel (%p3167) target = $region44
        $region43: #{tpu_custom_call.1} parent=27 // pred_region
          %s3171 = ssub.s32 32, 32
          %3172 = vsyncadd %s3147, %s3171
          %s3173 = smul.addr %s25, 32
          %s3174 = scalar_lea.hbm %s3, %s3173
          %s3176 = sshll.u32 %s3150, 4
          %s3177 = int_to_ptr.vmem [resolvable:$true] %s3176
          %3179 = dma.vmem_to_hbm [thread:$0]  %s3177, 32, %s3174, %s3147
        $region44: #{tpu_custom_call.1} parent=27 // pred_fallthru
          _
      $region28: #{tpu_custom_call.1} parent=5 // pred_fallthru
        _
      %p3180 = scmp.le.s32.totalorder 2, %s20
      // Predicated region
      $region45: #{tpu_custom_call.1} parent=5 // pred_check
        %p3181 = pneg %p3180
      $region46: #{tpu_custom_call.1} parent=5 // pred_check_branch
        %3183 = sbr.rel (%p3181) target = $region48
      $region47: #{tpu_custom_call.1} parent=5 // pred_region
        %s3184 = ssub.s32 %s20, 2
        // Predicated region
        $region49: #{tpu_custom_call.1} parent=47 // pred_check
          %p3185 = pneg %p96
        $region50: #{tpu_custom_call.1} parent=47 // pred_check_branch
          %3187 = sbr.rel (%p3185) target = $region52
        $region51: #{tpu_custom_call.1} parent=47 // pred_region
          %s3188 = sand.u32 %s81, 1
          %s3189 = scalar_lea.sflag [#allocation5], %s3188
          %s3190 = sand.u32 %s81, 1
          %s3191 = smul.addr %s3190, 256
          %s3192 = scalar_lea.vmem [#allocation8], %s3191
          %3193 = dma.done %s3189, 4096
        $region52: #{tpu_custom_call.1} parent=47 // pred_fallthru
          _
        // Predicated region
        $region53: #{tpu_custom_call.1} parent=47 // pred_check
          %p3194 = pneg %p122
        $region54: #{tpu_custom_call.1} parent=47 // pred_check_branch
          %3196 = sbr.rel (%p3194) target = $region56
        $region55: #{tpu_custom_call.1} parent=47 // pred_region
          %s3197 = sand.u32 %s107, 1
          %s3198 = scalar_lea.sflag [#allocation10], %s3197
          %s3199 = sand.u32 %s107, 1
          %s3200 = smul.addr %s3199, 2
          %s3201 = scalar_lea.vmem [#allocation9], %s3200
          %3202 = dma.done %s3198, 32
        $region56: #{tpu_custom_call.1} parent=47 // pred_fallthru
          _
      $region48: #{tpu_custom_call.1} parent=5 // pred_fallthru
        _
    $region6: #{tpu_custom_call.1} parent=1 // loop_footer
      %s24 = sadd.s32 1, %s20
    $region7: #{tpu_custom_call.1} parent=1 // loop_footer_branch
      %19 = sbr.rel target = $region3
    $region8: #{tpu_custom_call.1} parent=1 // loop_exit
      _
    %3203 = vsyncpa [#allocation4], 1
    %s3204 = scalar_lea.sflag [#allocation4], 1
    %3205 = vsyncpa %s3204, 1
    %3206 = vsyncpa [#allocation7], 1
    %3207 = vsyncpa [#allocation5], 1
    %s3208 = scalar_lea.sflag [#allocation5], 1
    %3209 = vsyncpa %s3208, 1
    %3210 = vsyncpa [#allocation10], 1
    %s3211 = scalar_lea.sflag [#allocation10], 1
    %3212 = vsyncpa %s3211, 1

</llo_original>
